<compile_context>
chip_gen: v7x
topology: tpu7x:2x2x1
jax: 0.10.0
libtpu: 0.0.40
codegen_flags: <defaults>
</compile_context>

<pallas_src>
import functools

import jax
import jax.numpy as jnp
from jax.experimental import pallas as pl
from jax.experimental.pallas import tpu as pltpu

C_STEM = 128                              # stand-in stem channels (lane-dense)
FEAT = 2048                               # EfficientNet-b5 feature width
N_ROOT, N_VOWEL, N_CONS = 168, 11, 7
N_HEADS = N_ROOT + N_VOWEL + N_CONS       # 186
N_PAD = 256                               # lane-dense padded head width


def _round_up(x, m):
    return (x + m - 1) // m * m


def _swish(x):
    # MemoryEfficientSwish forward: x * sigmoid(x).
    # Numerically-stable sigmoid; reciprocal runs on the (otherwise idle) EUP.
    z = jnp.exp(-jnp.abs(x))
    sig = jnp.where(x >= 0, 1.0, z) * pl.reciprocal(1.0 + z, approx=True)
    return x * sig


# ------------------------- fused Pallas kernel -------------------------

def fused_kernel(patches_ref, w_stem_ref, b_stem_ref, w_proj_ref, b_proj_ref,
                 w_heads_ref, b_heads_ref, out_ref, acc_ref, *,
                 s_valid, tile_s, mask_rows):
    s = pl.program_id(1)
    n_s = pl.num_programs(1)

    @pl.when(s == 0)
    def _():
        acc_ref[...] = jnp.zeros_like(acc_ref)

    # ---- stem conv (im2col matmul) + swish for this spatial tile ----
    p = patches_ref[0]                                   # (TS, K_PAD) bf16
    y = jnp.dot(p, w_stem_ref[...], preferred_element_type=jnp.float32)
    y = _swish(y + b_stem_ref[...])                      # (TS, C_STEM) f32

    if mask_rows:
        row = s * tile_s + jax.lax.broadcasted_iota(jnp.int32, y.shape, 0)
        y = jnp.where(row < s_valid, y, 0.0)

    # ---- global-average-pool: accumulate the spatial sum in VMEM scratch ----
    acc_ref[...] += jnp.sum(y, axis=0, keepdims=True)    # (1, C_STEM) f32

    # ---- last tile: projection to 2048 + fused 3-head linear + swish ----
    @pl.when(s == n_s - 1)
    def _():
        pooled = acc_ref[...] * (1.0 / s_valid)          # (1, C_STEM) f32
        feat = jnp.dot(pooled.astype(w_proj_ref.dtype), w_proj_ref[...],
                       preferred_element_type=jnp.float32) + b_proj_ref[...]
        heads = jnp.dot(feat.astype(w_heads_ref.dtype), w_heads_ref[...],
                        preferred_element_type=jnp.float32) + b_heads_ref[...]
        out_ref[0] = _swish(heads)                       # (1, N_PAD) lane-dense


# ------------------------- glue (plain JAX) -------------------------

def _im2col_3x3_s2(x_nhwc):
    """3x3 patches, stride 2, pad 1. Returns (B, Ho*Wo, 9*C)."""
    B, H, W, C = x_nhwc.shape
    xp = jnp.pad(x_nhwc, ((0, 0), (1, 1), (1, 1), (0, 0)))
    Ho, Wo = H // 2, W // 2
    cols = []
    for dh in range(3):
        for dw in range(3):
            cols.append(xp[:, dh:dh + 2 * Ho:2, dw:dw + 2 * Wo:2, :])
    patches = jnp.concatenate(cols, axis=-1)             # (B, Ho, Wo, 9*C)
    return patches.reshape(B, Ho * Wo, 9 * C)


def init_params(key):
    ks = jax.random.split(key, 10)
    s = 0.05
    f = jnp.float32
    return {
        "w_stem": s * jax.random.normal(ks[0], (9, C_STEM), f),
        "b_stem": s * jax.random.normal(ks[1], (1, C_STEM), f),
        "w_proj": s * jax.random.normal(ks[2], (C_STEM, FEAT), f),
        "b_proj": s * jax.random.normal(ks[3], (1, FEAT), f),
        # nn.Linear weights stored transposed (in, out) for direct matmul
        "w_root": s * jax.random.normal(ks[4], (FEAT, N_ROOT), f),
        "b_root": s * jax.random.normal(ks[5], (1, N_ROOT), f),
        "w_vowel": s * jax.random.normal(ks[6], (FEAT, N_VOWEL), f),
        "b_vowel": s * jax.random.normal(ks[7], (1, N_VOWEL), f),
        "w_cons": s * jax.random.normal(ks[8], (FEAT, N_CONS), f),
        "b_cons": s * jax.random.normal(ks[9], (1, N_CONS), f),
    }


def efficientnet_wrapper_forward(params, x_nchw, *, tile_s=512):
    """Returns (output_vowel, output_root, output_consonant), like the module."""
    x = jnp.transpose(x_nchw, (0, 2, 3, 1)).astype(jnp.float32)  # NCHW -> NHWC
    B = x.shape[0]

    patches = _im2col_3x3_s2(x)                          # (B, S, 9*Cin)
    S, K = patches.shape[1], patches.shape[2]

    # Lane/sublane-friendly padding: contraction K -> mult. of 128,
    # spatial S -> mult. of the row tile (kept <= tile_s, mult. of 8).
    K_PAD = _round_up(max(K, 128), 128)
    TS = min(tile_s, _round_up(S, 8))
    S_PAD = _round_up(S, TS)
    n_s_tiles = S_PAD // TS

    patches = jnp.pad(patches, ((0, 0), (0, S_PAD - S), (0, K_PAD - K)))
    patches = patches.astype(jnp.bfloat16)               # bf16 MXU operands

    w_stem = jnp.pad(params["w_stem"],
                     ((0, K_PAD - K), (0, 0))).astype(jnp.bfloat16)
    b_stem = params["b_stem"]
    w_proj = params["w_proj"].astype(jnp.bfloat16)
    b_proj = params["b_proj"]

    # Fuse the three heads into ONE lane-dense (FEAT, 256) matmul.
    w_heads = jnp.concatenate(
        [params["w_root"], params["w_vowel"], params["w_cons"]], axis=1)
    w_heads = jnp.pad(w_heads,
                      ((0, 0), (0, N_PAD - N_HEADS))).astype(jnp.bfloat16)
    b_heads = jnp.concatenate(
        [params["b_root"], params["b_vowel"], params["b_cons"]], axis=1)
    b_heads = jnp.pad(b_heads, ((0, 0), (0, N_PAD - N_HEADS)))

    kernel = functools.partial(
        fused_kernel, s_valid=S, tile_s=TS, mask_rows=(S_PAD != S))

    out = pl.pallas_call(
        kernel,
        out_shape=jax.ShapeDtypeStruct((B, 1, N_PAD), jnp.float32),
        grid_spec=pltpu.PrefetchScalarGridSpec(
            num_scalar_prefetch=0,
            grid=(B, n_s_tiles),
            in_specs=[
                pl.BlockSpec((1, TS, K_PAD), lambda b, s: (b, s, 0)),   # patches
                pl.BlockSpec((K_PAD, C_STEM), lambda b, s: (0, 0)),     # w_stem
                pl.BlockSpec((1, C_STEM), lambda b, s: (0, 0)),         # b_stem
                pl.BlockSpec((C_STEM, FEAT), lambda b, s: (0, 0)),      # w_proj
                pl.BlockSpec((1, FEAT), lambda b, s: (0, 0)),           # b_proj
                pl.BlockSpec((FEAT, N_PAD), lambda b, s: (0, 0)),       # w_heads
                pl.BlockSpec((1, N_PAD), lambda b, s: (0, 0)),          # b_heads
            ],
            out_specs=pl.BlockSpec((1, 1, N_PAD), lambda b, s: (b, 0, 0)),
            scratch_shapes=[pltpu.VMEM((1, C_STEM), jnp.float32)],
        ),
        compiler_params=pltpu.CompilerParams(
            dimension_semantics=("parallel", "arbitrary"),
            vmem_limit_bytes=32 * 1024 * 1024,
        ),
    )(patches, w_stem, b_stem, w_proj, b_proj, w_heads, b_heads)

    out = out[:, 0, :]                                   # (B, N_PAD)
    root = out[:, :N_ROOT]
    vowel = out[:, N_ROOT:N_ROOT + N_VOWEL]
    cons = out[:, N_ROOT + N_VOWEL:N_HEADS]
    # module returns (output_vowel, output_root, output_consonant)
    return vowel, root, cons


if __name__ == "__main__":
    key = jax.random.PRNGKey(0)
    k_param, k_x = jax.random.split(key)
    params = init_params(k_param)

    # small input consistent with in_channels=1: (batch=2, C=1, H=16, W=16)
    x = jax.random.normal(k_x, (2, 1, 16, 16), dtype=jnp.float32)

    fwd = jax.jit(efficientnet_wrapper_forward)
    out_vowel, out_root, out_cons = fwd(params, x)
    jax.block_until_ready((out_vowel, out_root, out_cons))

    assert out_vowel.shape == (2, N_VOWEL)
    assert out_root.shape == (2, N_ROOT)
    assert out_cons.shape == (2, N_CONS)
    assert bool(jnp.all(jnp.isfinite(out_vowel)))
    assert bool(jnp.all(jnp.isfinite(out_root)))
    assert bool(jnp.all(jnp.isfinite(out_cons)))
    print("KERNEL_OK")
</pallas_src>

<mosaic_0001>
module attributes {stable_mosaic.version = 11 : i64} {
  func.func @fused_kernel(%arg0: i32, %arg1: i32, %arg2: memref<1x64x128xbf16, #tpu.memory_space<vmem>>, %arg3: memref<128x128xbf16, #tpu.memory_space<vmem>>, %arg4: memref<1x128xf32, #tpu.memory_space<vmem>>, %arg5: memref<128x2048xbf16, #tpu.memory_space<vmem>>, %arg6: memref<1x2048xf32, #tpu.memory_space<vmem>>, %arg7: memref<2048x256xbf16, #tpu.memory_space<vmem>>, %arg8: memref<1x256xf32, #tpu.memory_space<vmem>>, %arg9: memref<1x1x256xf32, #tpu.memory_space<vmem>>, %arg10: memref<1x128xf32, #tpu.memory_space<vmem>>) attributes {dimension_semantics = [#tpu.dimension_semantics<parallel>, #tpu.dimension_semantics<arbitrary>], iteration_bounds = array<i64: 2, 1>, scalar_prefetch = 0 : i64, scratch_operands = 1 : i64, tpu.core_type = #tpu.core_type<tc>, window_params = [{transform_indices = @transform_0, window_bounds = array<i64: 1, 64, 128>}, {pipeline_mode = #tpu.pipeline_mode<synchronous>, transform_indices = @transform_1, window_bounds = array<i64: 128, 128>}, {pipeline_mode = #tpu.pipeline_mode<synchronous>, transform_indices = @transform_2, window_bounds = array<i64: 1, 128>}, {pipeline_mode = #tpu.pipeline_mode<synchronous>, transform_indices = @transform_3, window_bounds = array<i64: 128, 2048>}, {pipeline_mode = #tpu.pipeline_mode<synchronous>, transform_indices = @transform_4, window_bounds = array<i64: 1, 2048>}, {pipeline_mode = #tpu.pipeline_mode<synchronous>, transform_indices = @transform_5, window_bounds = array<i64: 2048, 256>}, {pipeline_mode = #tpu.pipeline_mode<synchronous>, transform_indices = @transform_6, window_bounds = array<i64: 1, 256>}, {transform_indices = @transform_7, window_bounds = array<i64: 1, 1, 256>}]} {
    %c0_i32 = arith.constant 0 : i32
    %0 = arith.cmpi eq, %arg1, %c0_i32 : i32
    %1 = arith.extui %0 : i1 to i32
    %c0_i32_0 = arith.constant 0 : i32
    %2 = arith.cmpi ne, %1, %c0_i32_0 : i32
    scf.if %2 {
      %cst_18 = arith.constant 0.000000e+00 : f32
      %31 = vector.broadcast %cst_18 : f32 to vector<1x128xf32>
      %c0_19 = arith.constant 0 : index
      %c0_20 = arith.constant 0 : index
      %32 = vector.load %arg10[%c0_19, %c0_20] : memref<1x128xf32, #tpu.memory_space<vmem>>, vector<1x128xf32>
      tpu.vector_store %arg10[%c0_19, %c0_20], %31 {strides = array<i32>} : memref<1x128xf32, #tpu.memory_space<vmem>>, vector<1x128xf32>,
    } else {
    }
    %c0 = arith.constant 0 : index
    %c0_1 = arith.constant 0 : index
    %c0_2 = arith.constant 0 : index
    %3 = vector.load %arg2[%c0, %c0_1, %c0_2] : memref<1x64x128xbf16, #tpu.memory_space<vmem>>, vector<1x64x128xbf16>
    %4 = vector.shape_cast %3 : vector<1x64x128xbf16> to vector<64x128xbf16>
    %c0_3 = arith.constant 0 : index
    %c0_4 = arith.constant 0 : index
    %5 = vector.load %arg3[%c0_3, %c0_4] : memref<128x128xbf16, #tpu.memory_space<vmem>>, vector<128x128xbf16>
    %cst = arith.constant dense<0.000000e+00> : vector<64x128xf32>
    %6 = tpu.matmul %4, %5, %cst {dimension_numbers = #tpu.dot_dimension_numbers<[1], [0], [0], [1], [0, 0, 1, 1], [], []>} : vector<64x128xbf16>, vector<128x128xbf16>, vector<64x128xf32> -> vector<64x128xf32>
    %c0_5 = arith.constant 0 : index
    %c0_6 = arith.constant 0 : index
    %7 = vector.load %arg4[%c0_5, %c0_6] : memref<1x128xf32, #tpu.memory_space<vmem>>, vector<1x128xf32>
    %8 = vector.broadcast %7 : vector<1x128xf32> to vector<64x128xf32>
    %9 = arith.addf %6, %8 : vector<64x128xf32>
    %10 = math.absf %9 : vector<64x128xf32>
    %cst_7 = arith.constant 0.000000e+00 : f32
    %11 = vector.broadcast %cst_7 : f32 to vector<64x128xf32>
    %12 = arith.subf %11, %10 : vector<64x128xf32>
    %13 = math.exp %12 : vector<64x128xf32>
    %cst_8 = arith.constant 0.000000e+00 : f32
    %14 = vector.broadcast %cst_8 : f32 to vector<64x128xf32>
    %15 = arith.cmpf oge, %9, %14 : vector<64x128xf32>
    %cst_9 = arith.constant 1.000000e+00 : f32
    %16 = vector.broadcast %cst_9 : f32 to vector<64x128xf32>
    %17 = arith.select %15, %16, %13 : vector<64x128xi1>, vector<64x128xf32>
    %cst_10 = arith.constant 1.000000e+00 : f32
    %18 = vector.broadcast %cst_10 : f32 to vector<64x128xf32>
    %19 = arith.addf %18, %13 : vector<64x128xf32>
    %20 = tpu.reciprocal %19 {approx = true} : vector<64x128xf32> -> vector<64x128xf32>
    %21 = arith.mulf %17, %20 : vector<64x128xf32>
    %22 = arith.mulf %9, %21 : vector<64x128xf32>
    %c0_11 = arith.constant 0 : index
    %c0_12 = arith.constant 0 : index
    %23 = vector.load %arg10[%c0_11, %c0_12] : memref<1x128xf32, #tpu.memory_space<vmem>>, vector<1x128xf32>
    %cst_13 = arith.constant dense<0.000000e+00> : vector<128xf32>
    %24 = vector.multi_reduction <add>, %22, %cst_13 [0] : vector<64x128xf32> to vector<128xf32>
    %25 = vector.shape_cast %24 : vector<128xf32> to vector<1x128xf32>
    %26 = arith.addf %23, %25 : vector<1x128xf32>
    %c0_14 = arith.constant 0 : index
    %c0_15 = arith.constant 0 : index
    %27 = vector.load %arg10[%c0_14, %c0_15] : memref<1x128xf32, #tpu.memory_space<vmem>>, vector<1x128xf32>
    tpu.vector_store %arg10[%c0_14, %c0_15], %26 {strides = array<i32>} : memref<1x128xf32, #tpu.memory_space<vmem>>, vector<1x128xf32>,
    %c0_i32_16 = arith.constant 0 : i32
    %28 = arith.cmpi eq, %arg1, %c0_i32_16 : i32
    %29 = arith.extui %28 : i1 to i32
    %c0_i32_17 = arith.constant 0 : i32
    %30 = arith.cmpi ne, %29, %c0_i32_17 : i32
    scf.if %30 {
      %c0_18 = arith.constant 0 : index
      %c0_19 = arith.constant 0 : index
      %31 = vector.load %arg10[%c0_18, %c0_19] : memref<1x128xf32, #tpu.memory_space<vmem>>, vector<1x128xf32>
      %cst_20 = arith.constant 1.562500e-02 : f32
      %32 = vector.broadcast %cst_20 : f32 to vector<1x128xf32>
      %33 = arith.mulf %31, %32 : vector<1x128xf32>
      %34 = arith.truncf %33 : vector<1x128xf32> to vector<1x128xbf16>
      %c0_21 = arith.constant 0 : index
      %c0_22 = arith.constant 0 : index
      %35 = vector.load %arg5[%c0_21, %c0_22] : memref<128x2048xbf16, #tpu.memory_space<vmem>>, vector<128x2048xbf16>
      %cst_23 = arith.constant dense<0.000000e+00> : vector<1x2048xf32>
      %36 = tpu.matmul %34, %35, %cst_23 {dimension_numbers = #tpu.dot_dimension_numbers<[1], [0], [0], [1], [0, 0, 1, 1], [], []>} : vector<1x128xbf16>, vector<128x2048xbf16>, vector<1x2048xf32> -> vector<1x2048xf32>
      %c0_24 = arith.constant 0 : index
      %c0_25 = arith.constant 0 : index
      %37 = vector.load %arg6[%c0_24, %c0_25] : memref<1x2048xf32, #tpu.memory_space<vmem>>, vector<1x2048xf32>
      %38 = arith.addf %36, %37 : vector<1x2048xf32>
      %39 = arith.truncf %38 : vector<1x2048xf32> to vector<1x2048xbf16>
      %c0_26 = arith.constant 0 : index
      %c0_27 = arith.constant 0 : index
      %40 = vector.load %arg7[%c0_26, %c0_27] : memref<2048x256xbf16, #tpu.memory_space<vmem>>, vector<2048x256xbf16>
      %cst_28 = arith.constant dense<0.000000e+00> : vector<1x256xf32>
      %41 = tpu.matmul %39, %40, %cst_28 {dimension_numbers = #tpu.dot_dimension_numbers<[1], [0], [0], [1], [0, 0, 1, 1], [], []>} : vector<1x2048xbf16>, vector<2048x256xbf16>, vector<1x256xf32> -> vector<1x256xf32>
      %c0_29 = arith.constant 0 : index
      %c0_30 = arith.constant 0 : index
      %42 = vector.load %arg8[%c0_29, %c0_30] : memref<1x256xf32, #tpu.memory_space<vmem>>, vector<1x256xf32>
      %43 = arith.addf %41, %42 : vector<1x256xf32>
      %44 = math.absf %43 : vector<1x256xf32>
      %cst_31 = arith.constant 0.000000e+00 : f32
      %45 = vector.broadcast %cst_31 : f32 to vector<1x256xf32>
      %46 = arith.subf %45, %44 : vector<1x256xf32>
      %47 = math.exp %46 : vector<1x256xf32>
      %cst_32 = arith.constant 0.000000e+00 : f32
      %48 = vector.broadcast %cst_32 : f32 to vector<1x256xf32>
      %49 = arith.cmpf oge, %43, %48 : vector<1x256xf32>
      %cst_33 = arith.constant 1.000000e+00 : f32
      %50 = vector.broadcast %cst_33 : f32 to vector<1x256xf32>
      %51 = arith.select %49, %50, %47 : vector<1x256xi1>, vector<1x256xf32>
      %cst_34 = arith.constant 1.000000e+00 : f32
      %52 = vector.broadcast %cst_34 : f32 to vector<1x256xf32>
      %53 = arith.addf %52, %47 : vector<1x256xf32>
      %54 = tpu.reciprocal %53 {approx = true} : vector<1x256xf32> -> vector<1x256xf32>
      %55 = arith.mulf %51, %54 : vector<1x256xf32>
      %56 = arith.mulf %43, %55 : vector<1x256xf32>
      %c0_35 = arith.constant 0 : index
      %c0_36 = arith.constant 0 : index
      %c0_37 = arith.constant 0 : index
      %57 = vector.load %arg9[%c0_35, %c0_36, %c0_37] : memref<1x1x256xf32, #tpu.memory_space<vmem>>, vector<1x1x256xf32>
      %58 = vector.shape_cast %57 : vector<1x1x256xf32> to vector<1x256xf32>
      %59 = vector.shape_cast %56 : vector<1x256xf32> to vector<1x1x256xf32>
      tpu.vector_store %arg9[%c0_35, %c0_36, %c0_37], %59 {strides = array<i32>} : memref<1x1x256xf32, #tpu.memory_space<vmem>>, vector<1x1x256xf32>,
    } else {
    }
    return
  }
  func.func @transform_0(%arg0: i32, %arg1: i32) -> (i32, i32, i32) {
    %c0_i32 = arith.constant 0 : i32
    %c0_i32_0 = arith.constant 0 : i32
    return %arg0, %arg1, %c0_i32 : i32, i32, i32
  }
  func.func @transform_1(%arg0: i32, %arg1: i32) -> (i32, i32) {
    %c0_i32 = arith.constant 0 : i32
    %c0_i32_0 = arith.constant 0 : i32
    %c0_i32_1 = arith.constant 0 : i32
    return %c0_i32, %c0_i32_0 : i32, i32
  }
  func.func @transform_2(%arg0: i32, %arg1: i32) -> (i32, i32) {
    %c0_i32 = arith.constant 0 : i32
    %c0_i32_0 = arith.constant 0 : i32
    %c0_i32_1 = arith.constant 0 : i32
    return %c0_i32, %c0_i32_0 : i32, i32
  }
  func.func @transform_3(%arg0: i32, %arg1: i32) -> (i32, i32) {
    %c0_i32 = arith.constant 0 : i32
    %c0_i32_0 = arith.constant 0 : i32
    %c0_i32_1 = arith.constant 0 : i32
    return %c0_i32, %c0_i32_0 : i32, i32
  }
  func.func @transform_4(%arg0: i32, %arg1: i32) -> (i32, i32) {
    %c0_i32 = arith.constant 0 : i32
    %c0_i32_0 = arith.constant 0 : i32
    %c0_i32_1 = arith.constant 0 : i32
    return %c0_i32, %c0_i32_0 : i32, i32
  }
  func.func @transform_5(%arg0: i32, %arg1: i32) -> (i32, i32) {
    %c0_i32 = arith.constant 0 : i32
    %c0_i32_0 = arith.constant 0 : i32
    %c0_i32_1 = arith.constant 0 : i32
    return %c0_i32, %c0_i32_0 : i32, i32
  }
  func.func @transform_6(%arg0: i32, %arg1: i32) -> (i32, i32) {
    %c0_i32 = arith.constant 0 : i32
    %c0_i32_0 = arith.constant 0 : i32
    %c0_i32_1 = arith.constant 0 : i32
    return %c0_i32, %c0_i32_0 : i32, i32
  }
  func.func @transform_7(%arg0: i32, %arg1: i32) -> (i32, i32, i32) {
    %c0_i32 = arith.constant 0 : i32
    %c0_i32_0 = arith.constant 0 : i32
    %c0_i32_1 = arith.constant 0 : i32
    return %arg0, %c0_i32, %c0_i32_0 : i32, i32, i32
  }
}

</mosaic_0001>

<llo_original>
// kernel: efficientnet_wrapper_forward.1
$region0: #{efficientnet_wrapper_forward.1}
  #allocation0 [shape = 'u32[]', space=smem, size = 0x4, offset = 0x4, fixed_abs, tag = 'smem constant byte address 0x4 - core index']
  #allocation1 [shape = 'u32[144,128]{1,0:T(1,128)}', space=vmem, size = 0x12000, scoped, tag = 'internal scratch']
  #allocation2 [shape = 'f32[1,128]{1,0:T(1,128)}', space=vmem, size = 0x200, scoped, tag = 'scratch operand']
  %s0 = inlined_call_operand.vmem [shape: bf16[2,64,128], index: 0, kind: input, shape index: {}]
  %s1 = inlined_call_operand.vmem [shape: bf16[128,128], index: 1, kind: input, shape index: {}]
  %s2 = inlined_call_operand.vmem [shape: f32[1,128], index: 2, kind: input, shape index: {}]
  %s3 = inlined_call_operand.vmem [shape: bf16[128,2048], index: 3, kind: input, shape index: {}]
  %s4 = inlined_call_operand.vmem [shape: f32[1,2048], index: 4, kind: input, shape index: {}]
  %s5 = inlined_call_operand.vmem [shape: bf16[2048,256], index: 5, kind: input, shape index: {}]
  %s6 = inlined_call_operand.vmem [shape: f32[1,256], index: 6, kind: input, shape index: {}]
  %s7 = inlined_call_operand.vmem [shape: f32[2,1,256], index: 7, kind: output, shape index: {}]
  %s8 = sld [smem:[#allocation0]]
  $region69: #{efficientnet_wrapper_forward.1} parent=0
    _
  %s10 = ssub.s32 1, %s8
  %s11 = scalar_select 0, %s10, %s8
  loop: start=0, step=1, limit=4
  $region2: #{efficientnet_wrapper_forward.1} parent=0 // loop_pre_header
    _
  $region3: #{efficientnet_wrapper_forward.1} parent=0 // loop_header
    %s13 = sphi 0, %s17
    %p14 = scmp.ge.s32.totalorder %s13, 4
    %s20 = sphi 0, %s32
    %s21 = sphi 0, %s28
    %s22 = sphi 0, %s20
    %s23 = sphi 0, %s21
    %s24 = sphi 0, %s22
    %s25 = sphi 0, %s23
    %s37 = sphi 0, %s39
    %s40 = sphi 0, %s37
    %s41 = sphi 0, %s40
    %s57 = sphi 0, %s41
    %s61 = sphi 0, %s61
    %s63 = sphi 0, %s61
    %s64 = sphi 0, %s63
    %s78 = sphi 0, %s64
    %s82 = sphi 0, %s82
    %s84 = sphi 0, %s82
    %s85 = sphi 0, %s84
    %s99 = sphi 0, %s85
    %s103 = sphi 0, %s103
    %s105 = sphi 0, %s103
    %s106 = sphi 0, %s105
    %s120 = sphi 0, %s106
    %s124 = sphi 0, %s124
    %s126 = sphi 0, %s124
    %s127 = sphi 0, %s126
    %s141 = sphi 0, %s127
    %s145 = sphi 0, %s145
    %s147 = sphi 0, %s145
    %s148 = sphi 0, %s147
    %s162 = sphi 0, %s148
    %s166 = sphi 0, %s166
    %s168 = sphi 0, %s166
    %s169 = sphi 0, %s168
    %s183 = sphi 0, %s169
    %s189 = sphi 0, %s191
    %s192 = sphi 0, %s189
    %s193 = sphi 0, %s192
    %s209 = sphi 0, %s193
  $region4: #{efficientnet_wrapper_forward.1} parent=0 // loop_header_branch
    %16 = sbr.rel (%p14) target = $region8
  $region5: #{efficientnet_wrapper_forward.1} parent=0 // loop_body
    %s18 = ssub.s32 %s13, 1
    %s19 = ssub.s32 %s13, 2
    %s26 = sadd.s32 1, %s21
    %p27 = scmp.ge.s32.totalorder %s26, 1
    %s28 = scalar_select %p27, 0, %s26
    %s29 = sadd.s32 1, %s20
    %s30 = scalar_select %p27, %s29, %s20
    %p31 = scmp.ge.s32.totalorder %s30, 2
    %s32 = scalar_select %p31, 0, %s30
    %s33 = ssub.s32 %s20, %s32
    %s34 = ssub.s32 %s21, %s28
    %s35 = sor.u32 %s33, %s34
    %p36 = scmp.eq.s32.totalorder %s35, 0
    %s38 = sadd.s32 %s37, 1
    %s39 = scalar_select %p36, %s37, %s38
    %p42 = pneg %p36
    %p43 = scmp.eq.s32.totalorder %s13, 1
    %p44 = por %p42, %p43
    %p45 = scmp.ne.s32.totalorder %s37, %s40
    %p46 = scmp.eq.s32.totalorder %s13, 0
    %p47 = por %p45, %p46
    %p48 = scmp.ne.s32.totalorder %s37, %s40
    %p49 = scmp.eq.s32.totalorder %s18, 1
    %p50 = por %p48, %p49
    %p51 = scmp.ne.s32.totalorder %s40, %s41
    %p52 = scmp.eq.s32.totalorder %s18, 0
    %p53 = por %p51, %p52
    %p54 = scmp.ne.s32.totalorder %s40, %s41
    %p55 = scmp.eq.s32.totalorder %s19, 1
    %p56 = por %p54, %p55
    %p58 = scmp.ne.s32.totalorder %s41, %s57
    %p59 = scmp.eq.s32.totalorder %s19, 0
    %p60 = por %p58, %p59
    %s62 = sadd.s32 %s61, 1
    %p65 = scmp.eq.s32.totalorder %s13, 1
    %p66 = scmp.ne.s32.totalorder %s61, %s63
    %p67 = scmp.eq.s32.totalorder %s13, 0
    %p68 = por %p66, %p67
    %p69 = scmp.ne.s32.totalorder %s61, %s63
    %p70 = scmp.eq.s32.totalorder %s18, 1
    %p71 = por %p69, %p70
    %p72 = scmp.ne.s32.totalorder %s63, %s64
    %p73 = scmp.eq.s32.totalorder %s18, 0
    %p74 = por %p72, %p73
    %p75 = scmp.ne.s32.totalorder %s63, %s64
    %p76 = scmp.eq.s32.totalorder %s19, 1
    %p77 = por %p75, %p76
    %p79 = scmp.ne.s32.totalorder %s64, %s78
    %p80 = scmp.eq.s32.totalorder %s19, 0
    %p81 = por %p79, %p80
    %s83 = sadd.s32 %s82, 1
    %p86 = scmp.eq.s32.totalorder %s13, 1
    %p87 = scmp.ne.s32.totalorder %s82, %s84
    %p88 = scmp.eq.s32.totalorder %s13, 0
    %p89 = por %p87, %p88
    %p90 = scmp.ne.s32.totalorder %s82, %s84
    %p91 = scmp.eq.s32.totalorder %s18, 1
    %p92 = por %p90, %p91
    %p93 = scmp.ne.s32.totalorder %s84, %s85
    %p94 = scmp.eq.s32.totalorder %s18, 0
    %p95 = por %p93, %p94
    %p96 = scmp.ne.s32.totalorder %s84, %s85
    %p97 = scmp.eq.s32.totalorder %s19, 1
    %p98 = por %p96, %p97
    %p100 = scmp.ne.s32.totalorder %s85, %s99
    %p101 = scmp.eq.s32.totalorder %s19, 0
    %p102 = por %p100, %p101
    %s104 = sadd.s32 %s103, 1
    %p107 = scmp.eq.s32.totalorder %s13, 1
    %p108 = scmp.ne.s32.totalorder %s103, %s105
    %p109 = scmp.eq.s32.totalorder %s13, 0
    %p110 = por %p108, %p109
    %p111 = scmp.ne.s32.totalorder %s103, %s105
    %p112 = scmp.eq.s32.totalorder %s18, 1
    %p113 = por %p111, %p112
    %p114 = scmp.ne.s32.totalorder %s105, %s106
    %p115 = scmp.eq.s32.totalorder %s18, 0
    %p116 = por %p114, %p115
    %p117 = scmp.ne.s32.totalorder %s105, %s106
    %p118 = scmp.eq.s32.totalorder %s19, 1
    %p119 = por %p117, %p118
    %p121 = scmp.ne.s32.totalorder %s106, %s120
    %p122 = scmp.eq.s32.totalorder %s19, 0
    %p123 = por %p121, %p122
    %s125 = sadd.s32 %s124, 1
    %p128 = scmp.eq.s32.totalorder %s13, 1
    %p129 = scmp.ne.s32.totalorder %s124, %s126
    %p130 = scmp.eq.s32.totalorder %s13, 0
    %p131 = por %p129, %p130
    %p132 = scmp.ne.s32.totalorder %s124, %s126
    %p133 = scmp.eq.s32.totalorder %s18, 1
    %p134 = por %p132, %p133
    %p135 = scmp.ne.s32.totalorder %s126, %s127
    %p136 = scmp.eq.s32.totalorder %s18, 0
    %p137 = por %p135, %p136
    %p138 = scmp.ne.s32.totalorder %s126, %s127
    %p139 = scmp.eq.s32.totalorder %s19, 1
    %p140 = por %p138, %p139
    %p142 = scmp.ne.s32.totalorder %s127, %s141
    %p143 = scmp.eq.s32.totalorder %s19, 0
    %p144 = por %p142, %p143
    %s146 = sadd.s32 %s145, 1
    %p149 = scmp.eq.s32.totalorder %s13, 1
    %p150 = scmp.ne.s32.totalorder %s145, %s147
    %p151 = scmp.eq.s32.totalorder %s13, 0
    %p152 = por %p150, %p151
    %p153 = scmp.ne.s32.totalorder %s145, %s147
    %p154 = scmp.eq.s32.totalorder %s18, 1
    %p155 = por %p153, %p154
    %p156 = scmp.ne.s32.totalorder %s147, %s148
    %p157 = scmp.eq.s32.totalorder %s18, 0
    %p158 = por %p156, %p157
    %p159 = scmp.ne.s32.totalorder %s147, %s148
    %p160 = scmp.eq.s32.totalorder %s19, 1
    %p161 = por %p159, %p160
    %p163 = scmp.ne.s32.totalorder %s148, %s162
    %p164 = scmp.eq.s32.totalorder %s19, 0
    %p165 = por %p163, %p164
    %s167 = sadd.s32 %s166, 1
    %p170 = scmp.eq.s32.totalorder %s13, 1
    %p171 = scmp.ne.s32.totalorder %s166, %s168
    %p172 = scmp.eq.s32.totalorder %s13, 0
    %p173 = por %p171, %p172
    %p174 = scmp.ne.s32.totalorder %s166, %s168
    %p175 = scmp.eq.s32.totalorder %s18, 1
    %p176 = por %p174, %p175
    %p177 = scmp.ne.s32.totalorder %s168, %s169
    %p178 = scmp.eq.s32.totalorder %s18, 0
    %p179 = por %p177, %p178
    %p180 = scmp.ne.s32.totalorder %s168, %s169
    %p181 = scmp.eq.s32.totalorder %s19, 1
    %p182 = por %p180, %p181
    %p184 = scmp.ne.s32.totalorder %s169, %s183
    %p185 = scmp.eq.s32.totalorder %s19, 0
    %p186 = por %p184, %p185
    %s187 = ssub.s32 %s20, %s32
    %p188 = scmp.eq.s32.totalorder %s187, 0
    %s190 = sadd.s32 %s189, 1
    %s191 = scalar_select %p188, %s189, %s190
    %p194 = pneg %p188
    %p195 = scmp.eq.s32.totalorder %s13, 1
    %p196 = por %p194, %p195
    %p197 = scmp.ne.s32.totalorder %s189, %s192
    %p198 = scmp.eq.s32.totalorder %s13, 0
    %p199 = por %p197, %p198
    %p200 = scmp.ne.s32.totalorder %s189, %s192
    %p201 = scmp.eq.s32.totalorder %s18, 1
    %p202 = por %p200, %p201
    %p203 = scmp.ne.s32.totalorder %s192, %s193
    %p204 = scmp.eq.s32.totalorder %s18, 0
    %p205 = por %p203, %p204
    %p206 = scmp.ne.s32.totalorder %s192, %s193
    %p207 = scmp.eq.s32.totalorder %s19, 1
    %p208 = por %p206, %p207
    %p210 = scmp.ne.s32.totalorder %s193, %s209
    %p211 = scmp.eq.s32.totalorder %s19, 0
    %p212 = por %p210, %p211
    %p213 = scmp.le.s32.totalorder 1, %s13
    %p214 = scmp.lt.s32.totalorder %s13, 3
    %p215 = pnand %p213, %p214
    %p216 = pneg %p215
    // Predicated region
    $region9: #{efficientnet_wrapper_forward.1} parent=5 // pred_check
      _
    $region10: #{efficientnet_wrapper_forward.1} parent=5 // pred_check_branch
      %218 = sbr.rel (%p215) target = $region12
    $region11: #{efficientnet_wrapper_forward.1} parent=5 // pred_region
      %s219 = ssub.s32 %s13, 1
      // Predicated region
      $region13: #{efficientnet_wrapper_forward.1} parent=11 // pred_check
        %p220 = pneg %p74
      $region14: #{efficientnet_wrapper_forward.1} parent=11 // pred_check_branch
        %222 = sbr.rel (%p220) target = $region16
      $region15: #{efficientnet_wrapper_forward.1} parent=11 // pred_region
        _
      $region16: #{efficientnet_wrapper_forward.1} parent=11 // pred_fallthru
        _
      // Predicated region
      $region17: #{efficientnet_wrapper_forward.1} parent=11 // pred_check
        %p223 = pneg %p95
      $region18: #{efficientnet_wrapper_forward.1} parent=11 // pred_check_branch
        %225 = sbr.rel (%p223) target = $region20
      $region19: #{efficientnet_wrapper_forward.1} parent=11 // pred_region
        _
      $region20: #{efficientnet_wrapper_forward.1} parent=11 // pred_fallthru
        _
      // Predicated region
      $region21: #{efficientnet_wrapper_forward.1} parent=11 // pred_check
        %p226 = pneg %p116
      $region22: #{efficientnet_wrapper_forward.1} parent=11 // pred_check_branch
        %228 = sbr.rel (%p226) target = $region24
      $region23: #{efficientnet_wrapper_forward.1} parent=11 // pred_region
        _
      $region24: #{efficientnet_wrapper_forward.1} parent=11 // pred_fallthru
        _
      // Predicated region
      $region25: #{efficientnet_wrapper_forward.1} parent=11 // pred_check
        %p229 = pneg %p137
      $region26: #{efficientnet_wrapper_forward.1} parent=11 // pred_check_branch
        %231 = sbr.rel (%p229) target = $region28
      $region27: #{efficientnet_wrapper_forward.1} parent=11 // pred_region
        _
      $region28: #{efficientnet_wrapper_forward.1} parent=11 // pred_fallthru
        _
      // Predicated region
      $region29: #{efficientnet_wrapper_forward.1} parent=11 // pred_check
        %p232 = pneg %p158
      $region30: #{efficientnet_wrapper_forward.1} parent=11 // pred_check_branch
        %234 = sbr.rel (%p232) target = $region32
      $region31: #{efficientnet_wrapper_forward.1} parent=11 // pred_region
        _
      $region32: #{efficientnet_wrapper_forward.1} parent=11 // pred_fallthru
        _
      // Predicated region
      $region33: #{efficientnet_wrapper_forward.1} parent=11 // pred_check
        %p235 = pneg %p179
      $region34: #{efficientnet_wrapper_forward.1} parent=11 // pred_check_branch
        %237 = sbr.rel (%p235) target = $region36
      $region35: #{efficientnet_wrapper_forward.1} parent=11 // pred_region
        _
      $region36: #{efficientnet_wrapper_forward.1} parent=11 // pred_fallthru
        _
    $region12: #{efficientnet_wrapper_forward.1} parent=5 // pred_fallthru
      _
    %p238 = scmp.lt.s32.totalorder %s13, 2
    // Predicated region
    $region37: #{efficientnet_wrapper_forward.1} parent=5 // pred_check
      %p239 = pneg %p238
    $region38: #{efficientnet_wrapper_forward.1} parent=5 // pred_check_branch
      %241 = sbr.rel (%p239) target = $region40
    $region39: #{efficientnet_wrapper_forward.1} parent=5 // pred_region
      // Predicated region
      $region41: #{efficientnet_wrapper_forward.1} parent=39 // pred_check
        %p242 = pneg %p47
      $region42: #{efficientnet_wrapper_forward.1} parent=39 // pred_check_branch
        %244 = sbr.rel (%p242) target = $region44
      $region43: #{efficientnet_wrapper_forward.1} parent=39 // pred_region
        %s245 = smul.u32 8, %s21
        %p246 = scmp.lt.s32.totalorder %s20, 1
        %s247 = scalar_select %p246, %s20, 1
        %p248 = scmp.lt.s32.totalorder %s245, 7
        %s249 = scalar_select %p248, %s245, 7
        %s250 = smul.addr %s247, 8
        %s251 = sadd.s32 %s249, %s250
        %s252 = smul.addr %s251, 4
        %s253 = scalar_lea.vmem %s0, %s252
        %s254 = smul.u32 8, %s21
      $region44: #{efficientnet_wrapper_forward.1} parent=39 // pred_fallthru
        _
    $region40: #{efficientnet_wrapper_forward.1} parent=5 // pred_fallthru
      _
    %p255 = scmp.le.s32.totalorder 1, %s13
    %p256 = scmp.lt.s32.totalorder %s13, 3
    %p257 = pnand %p255, %p256
    %p258 = pneg %p257
    // Predicated region
    $region45: #{efficientnet_wrapper_forward.1} parent=5 // pred_check
      _
    $region46: #{efficientnet_wrapper_forward.1} parent=5 // pred_check_branch
      %260 = sbr.rel (%p257) target = $region48
    $region47: #{efficientnet_wrapper_forward.1} parent=5 // pred_region
      %s261 = ssub.s32 %s13, 1
      %s262 = smul.u32 8, %s23
      %p263 = scmp.lt.s32.totalorder %s22, 1
      %s264 = scalar_select %p263, %s22, 1
      %p265 = scmp.lt.s32.totalorder %s262, 7
      %s266 = scalar_select %p265, %s262, 7
      %s267 = smul.addr %s264, 8
      %s268 = sadd.s32 %s266, %s267
      %s269 = smul.addr %s268, 4
      %s270 = scalar_lea.vmem %s0, %s269
      %p271 = pneg %p53
      %p272 = pneg %p50
      %p273 = pneg %p74
      %p274 = pneg %p71
      %p275 = pneg %p95
      %p276 = pneg %p92
      %p277 = pneg %p116
      %p278 = pneg %p113
      %p279 = pneg %p137
      %p280 = pneg %p134
      %p281 = pneg %p158
      %p282 = pneg %p155
      %p283 = pneg %p179
      %p284 = pneg %p176
      %p285 = pneg %p205
      %p286 = pneg %p202
      %p287 = scmp.lt.s32.totalorder %s22, 1
      %s288 = scalar_select %p287, %s22, 1
      %s289 = smul.addr %s288, 2
      %s290 = scalar_lea.vmem %s7, %s289
      %s291 = smul.u32 8, %s23
      %p292 = scmp.lt.s32.totalorder %s22, 1
      %s293 = scalar_select %p292, %s22, 1
      %p294 = scmp.lt.s32.totalorder %s291, 7
      %s295 = scalar_select %p294, %s291, 7
      %s296 = smul.addr %s293, 8
      %s297 = sadd.s32 %s295, %s296
      %s298 = smul.addr %s297, 4
      %s299 = scalar_lea.vmem %s0, %s298
      %s300 = smul.u32 8, %s23
      %p301 = scmp.lt.s32.totalorder %s22, 1
      %s302 = scalar_select %p301, %s22, 1
      %s303 = smul.addr %s302, 2
      %s304 = scalar_lea.vmem %s7, %s303
      %p306 = scmp.eq.s32.totalorder %s23, 0
      // Predicated region
      $region49: #{efficientnet_wrapper_forward.1} parent=47 // pred_check
        %p307 = pneg %p306
      $region50: #{efficientnet_wrapper_forward.1} parent=47 // pred_check_branch
        %309 = sbr.rel (%p307) target = $region52
      $region51: #{efficientnet_wrapper_forward.1} parent=47 // pred_region
        %310 = vst [vmem:[#allocation2] sm:$0x1] 0.0
      $region52: #{efficientnet_wrapper_forward.1} parent=47 // pred_fallthru
        _
      %v311 = vld [vmem:[%s299] sm:$0xf]
      %v312 = vld [vmem:[%s299 + $0x4] sm:$0xf]
      %v313 = vld [vmem:[%s299 + $0x8] sm:$0xf]
      %v314 = vld [vmem:[%s299 + $0xc] sm:$0xf]
      %v315 = vld [vmem:[%s299 + $0x10] sm:$0xf]
      %v316 = vld [vmem:[%s299 + $0x14] sm:$0xf]
      %v317 = vld [vmem:[%s299 + $0x18] sm:$0xf]
      %v318 = vld [vmem:[%s299 + $0x1c] sm:$0xf]
      %v319 = vld [vmem:[%s1] sm:$0xf]
      %v320 = vld [vmem:[%s1 + $0x4] sm:$0xf]
      %v321 = vld [vmem:[%s1 + $0x8] sm:$0xf]
      %v322 = vld [vmem:[%s1 + $0xc] sm:$0xf]
      %v323 = vld [vmem:[%s1 + $0x10] sm:$0xf]
      %v324 = vld [vmem:[%s1 + $0x14] sm:$0xf]
      %v325 = vld [vmem:[%s1 + $0x18] sm:$0xf]
      %v326 = vld [vmem:[%s1 + $0x1c] sm:$0xf]
      %v327 = vld [vmem:[%s1 + $0x20] sm:$0xf]
      %v328 = vld [vmem:[%s1 + $0x24] sm:$0xf]
      %v329 = vld [vmem:[%s1 + $0x28] sm:$0xf]
      %v330 = vld [vmem:[%s1 + $0x2c] sm:$0xf]
      %v331 = vld [vmem:[%s1 + $0x30] sm:$0xf]
      %v332 = vld [vmem:[%s1 + $0x34] sm:$0xf]
      %v333 = vld [vmem:[%s1 + $0x38] sm:$0xf]
      %v334 = vld [vmem:[%s1 + $0x3c] sm:$0xf]
      %v335 = vld [vmem:[%s2] sm:$0x1]
      %v337 = vlaneseq
      %v338 = vshrl.u32 %v337, 7
      %v339 = vsub.s32 0, %v338
      %v340 = vrot.slane %v335, %v339
      %v350 = vunpack.c.l.b16 %v311
      %v351 = vunpack.c.l.b16 %v312
      %v352 = vunpack.c.l.b16 %v313
      %v353 = vunpack.c.l.b16 %v314
      %v354 = vunpack.c.l.b16 %v315
      %v355 = vunpack.c.l.b16 %v316
      %v356 = vunpack.c.l.b16 %v317
      %v357 = vunpack.c.l.b16 %v318
      %v358 = vpack.c.b16 %v351, %v350
      %v359 = vpack.c.b16 %v353, %v352
      %v360 = vpack.c.b16 %v355, %v354
      %v361 = vpack.c.b16 %v357, %v356
      %v382 = vunpack.c.l.b16 %v319
      %v383 = vunpack.c.l.b16 %v320
      %v384 = vunpack.c.l.b16 %v321
      %v385 = vunpack.c.l.b16 %v322
      %v386 = vunpack.c.l.b16 %v323
      %v387 = vunpack.c.l.b16 %v324
      %v388 = vunpack.c.l.b16 %v325
      %v389 = vunpack.c.l.b16 %v326
      %v390 = vunpack.c.l.b16 %v327
      %v391 = vunpack.c.l.b16 %v328
      %v392 = vunpack.c.l.b16 %v329
      %v393 = vunpack.c.l.b16 %v330
      %v394 = vunpack.c.l.b16 %v331
      %v395 = vunpack.c.l.b16 %v332
      %v396 = vunpack.c.l.b16 %v333
      %v397 = vunpack.c.l.b16 %v334
      %v398 = vpack.c.b16 %v383, %v382
      %v399 = vpack.c.b16 %v385, %v384
      %v400 = vpack.c.b16 %v387, %v386
      %v401 = vpack.c.b16 %v389, %v388
      %v402 = vpack.c.b16 %v391, %v390
      %v403 = vpack.c.b16 %v393, %v392
      %v404 = vpack.c.b16 %v395, %v394
      %v405 = vpack.c.b16 %v397, %v396
      %414 = vmatprep.subr.bf16.mxu0 0
      %415 = vmatpush1.bf16.msra.mxu0 %v398
      %416 = vmatprep.subr.bf16.mxu0 0
      %417 = vmatpush1.bf16.msra.mxu0 %v399
      %418 = vmatprep.subr.bf16.mxu0 0
      %419 = vmatpush1.bf16.msra.mxu0 %v400
      %420 = vmatprep.subr.bf16.mxu0 0
      %421 = vmatpush1.bf16.msra.mxu0 %v401
      %422 = vmatprep.subr.bf16.mxu0 0
      %423 = vmatpush1.bf16.msra.mxu0 %v402
      %424 = vmatprep.subr.bf16.mxu0 0
      %425 = vmatpush1.bf16.msra.mxu0 %v403
      %426 = vmatprep.subr.bf16.mxu0 0
      %427 = vmatpush1.bf16.msra.mxu0 %v404
      %428 = vmatprep.subr.bf16.mxu0 0
      %429 = vmatpush1.bf16.msra.mxu0 %v405
      %430 = vmatprep.subr.bf16.mxu0 0
      %431 = vmatpush1.bf16.msra.mxu0 0
      %432 = vmatprep.subr.bf16.mxu0 0
      %433 = vmatpush1.bf16.msra.mxu0 0
      %434 = vmatprep.subr.bf16.mxu0 0
      %435 = vmatpush1.bf16.msra.mxu0 0
      %436 = vmatprep.subr.bf16.mxu0 0
      %437 = vmatpush1.bf16.msra.mxu0 0
      %438 = vmatprep.subr.bf16.mxu0 0
      %439 = vmatpush1.bf16.msra.mxu0 0
      %440 = vmatprep.subr.bf16.mxu0 0
      %441 = vmatpush1.bf16.msra.mxu0 0
      %442 = vmatprep.subr.bf16.mxu0 0
      %443 = vmatpush1.bf16.msra.mxu0 0
      %444 = vmatprep.subr.bf16.mxu0 0
      %445 = vmatpush1.bf16.msra.mxu0 0
      %446 = vmatprep.mubr.bf16.mxu0 0
      %447 = vmatmul.mubr.bf16.gmra.mrb[0].mxu0 %v358
      %v448 = vpop.f32.mrb[0].mxu0
      %v449 = vadd.f32 %v340, %v448
      %v450 = vpop.f32.mrb[0].mxu0
      %v451 = vpop.f32.mrb[0].mxu0
      %v452 = vadd.f32 %v340, %v451
      %v453 = vpop.f32.mrb[0].mxu0
      %454 = vmatprep.mubr.bf16.mxu0 0
      %455 = vmatmul.mubr.bf16.gmra.mrb[0].mxu0 %v359
      %v456 = vpop.f32.mrb[0].mxu0
      %v457 = vadd.f32 %v340, %v456
      %v458 = vpop.f32.mrb[0].mxu0
      %v459 = vpop.f32.mrb[0].mxu0
      %v460 = vadd.f32 %v340, %v459
      %v461 = vpop.f32.mrb[0].mxu0
      %462 = vmatprep.mubr.bf16.mxu0 0
      %463 = vmatmul.mubr.bf16.gmra.mrb[0].mxu0 %v360
      %v464 = vpop.f32.mrb[0].mxu0
      %v465 = vadd.f32 %v340, %v464
      %v466 = vpop.f32.mrb[0].mxu0
      %v467 = vpop.f32.mrb[0].mxu0
      %v468 = vadd.f32 %v340, %v467
      %v469 = vpop.f32.mrb[0].mxu0
      %470 = vmatprep.mubr.bf16.mxu0 0
      %471 = vmatmul.mubr.bf16.gmra.mrb[0].mxu0 %v361
      %v472 = vpop.f32.mrb[0].mxu0
      %v473 = vadd.f32 %v340, %v472
      %v474 = vpop.f32.mrb[0].mxu0
      %v475 = vpop.f32.mrb[0].mxu0
      %v476 = vadd.f32 %v340, %v475
      %v477 = vpop.f32.mrb[0].mxu0
      %478 = vdwg.mxu0
      %v479 = vand.u32 2147483647, %v449
      %v480 = vand.u32 2147483647, %v452
      %v481 = vand.u32 2147483647, %v457
      %v482 = vand.u32 2147483647, %v460
      %v483 = vand.u32 2147483647, %v465
      %v484 = vand.u32 2147483647, %v468
      %v485 = vand.u32 2147483647, %v473
      %v486 = vand.u32 2147483647, %v476
      %v487 = vsub.f32 0.0, %v479
      %v488 = vsub.f32 0.0, %v480
      %v489 = vsub.f32 0.0, %v481
      %v490 = vsub.f32 0.0, %v482
      %v491 = vsub.f32 0.0, %v483
      %v492 = vsub.f32 0.0, %v484
      %v493 = vsub.f32 0.0, %v485
      %v494 = vsub.f32 0.0, %v486
      %v495 = vmul.f32 %v487, 1.442695
      %v496 = vpow.pop %v495
      %v497 = vmul.f32 %v488, 1.442695
      %v498 = vpow.pop %v497
      %v499 = vmul.f32 %v489, 1.442695
      %v500 = vpow.pop %v499
      %v501 = vmul.f32 %v490, 1.442695
      %v502 = vpow.pop %v501
      %v503 = vmul.f32 %v491, 1.442695
      %v504 = vpow.pop %v503
      %v505 = vmul.f32 %v492, 1.442695
      %v506 = vpow.pop %v505
      %v507 = vmul.f32 %v493, 1.442695
      %v508 = vpow.pop %v507
      %v509 = vmul.f32 %v494, 1.442695
      %v510 = vpow.pop %v509
      %vm511 = vcmp.ge.f32.partialorder %v449, 0.0
      %vm512 = vcmp.ge.f32.partialorder %v452, 0.0
      %vm513 = vcmp.ge.f32.partialorder %v457, 0.0
      %vm514 = vcmp.ge.f32.partialorder %v460, 0.0
      %vm515 = vcmp.ge.f32.partialorder %v465, 0.0
      %vm516 = vcmp.ge.f32.partialorder %v468, 0.0
      %vm517 = vcmp.ge.f32.partialorder %v473, 0.0
      %vm518 = vcmp.ge.f32.partialorder %v476, 0.0
      %v519 = vsel %vm511, 1.0, %v496
      %v520 = vsel %vm512, 1.0, %v498
      %v521 = vsel %vm513, 1.0, %v500
      %v522 = vsel %vm514, 1.0, %v502
      %v523 = vsel %vm515, 1.0, %v504
      %v524 = vsel %vm516, 1.0, %v506
      %v525 = vsel %vm517, 1.0, %v508
      %v526 = vsel %vm518, 1.0, %v510
      %v527 = vadd.f32 %v496, 1.0
      %v528 = vadd.f32 %v498, 1.0
      %v529 = vadd.f32 %v500, 1.0
      %v530 = vadd.f32 %v502, 1.0
      %v531 = vadd.f32 %v504, 1.0
      %v532 = vadd.f32 %v506, 1.0
      %v533 = vadd.f32 %v508, 1.0
      %v534 = vadd.f32 %v510, 1.0
      %v535 = vrcp.pop %v527
      %v536 = vrcp.pop %v528
      %v537 = vrcp.pop %v529
      %v538 = vrcp.pop %v530
      %v539 = vrcp.pop %v531
      %v540 = vrcp.pop %v532
      %v541 = vrcp.pop %v533
      %v542 = vrcp.pop %v534
      %v543 = vmul.f32 %v519, %v535
      %v544 = vmul.f32 %v520, %v536
      %v545 = vmul.f32 %v521, %v537
      %v546 = vmul.f32 %v522, %v538
      %v547 = vmul.f32 %v523, %v539
      %v548 = vmul.f32 %v524, %v540
      %v549 = vmul.f32 %v525, %v541
      %v550 = vmul.f32 %v526, %v542
      %v551 = vmul.f32 %v449, %v543
      %v552 = vmul.f32 %v452, %v544
      %v553 = vmul.f32 %v457, %v545
      %v554 = vmul.f32 %v460, %v546
      %v555 = vmul.f32 %v465, %v547
      %v556 = vmul.f32 %v468, %v548
      %v557 = vmul.f32 %v473, %v549
      %v558 = vmul.f32 %v476, %v550
      %v559 = vld [vmem:[#allocation2] sm:$0x1]
      %v560 = vadd.f32 %v551, %v552
      %v561 = vadd.f32 %v560, %v553
      %v562 = vadd.f32 %v561, %v554
      %v563 = vadd.f32 %v562, %v555
      %v564 = vadd.f32 %v563, %v556
      %v565 = vadd.f32 %v564, %v557
      %v566 = vadd.f32 %v565, %v558
      %v567 = vrot.slane %v566, 4
      %v568 = vadd.f32 %v566, %v567
      %v569 = vrot.slane %v568, 2
      %v570 = vadd.f32 %v568, %v569
      %v571 = vrot.slane %v570, 1
      %v572 = vadd.f32 %v570, %v571
      %v573 = vadd.f32 %v559, %v572
      %574 = vst [vmem:[#allocation2] sm:$0x1] %v573
      // Predicated region
      $region53: #{efficientnet_wrapper_forward.1} parent=47 // pred_check
        %p575 = pneg %p306
      $region54: #{efficientnet_wrapper_forward.1} parent=47 // pred_check_branch
        %577 = sbr.rel (%p575) target = $region56
      $region55: #{efficientnet_wrapper_forward.1} parent=47 // pred_region
        %v578 = vld [vmem:[#allocation2] sm:$0x1]
        %v579 = vmul.f32 %v578, 0.015625
        %v580 = vpack.c.bf16 %v579, %v579
        %v581 = vld [vmem:[%s3] sm:$0xff]
        %v582 = vld [vmem:[%s3 + $0x8] sm:$0xff]
        %v583 = vld [vmem:[%s3 + $0x10] sm:$0xff]
        %v584 = vld [vmem:[%s3 + $0x18] sm:$0xff]
        %v585 = vld [vmem:[%s3 + $0x20] sm:$0xff]
        %v586 = vld [vmem:[%s3 + $0x28] sm:$0xff]
        %v587 = vld [vmem:[%s3 + $0x30] sm:$0xff]
        %v588 = vld [vmem:[%s3 + $0x38] sm:$0xff]
        %v589 = vld [vmem:[%s3 + $0x40] sm:$0xff]
        %v590 = vld [vmem:[%s3 + $0x48] sm:$0xff]
        %v591 = vld [vmem:[%s3 + $0x50] sm:$0xff]
        %v592 = vld [vmem:[%s3 + $0x58] sm:$0xff]
        %v593 = vld [vmem:[%s3 + $0x60] sm:$0xff]
        %v594 = vld [vmem:[%s3 + $0x68] sm:$0xff]
        %v595 = vld [vmem:[%s3 + $0x70] sm:$0xff]
        %v596 = vld [vmem:[%s3 + $0x78] sm:$0xff]
        %v597 = vld [vmem:[%s3 + $0x80] sm:$0xff]
        %v598 = vld [vmem:[%s3 + $0x88] sm:$0xff]
        %v599 = vld [vmem:[%s3 + $0x90] sm:$0xff]
        %v600 = vld [vmem:[%s3 + $0x98] sm:$0xff]
        %v601 = vld [vmem:[%s3 + $0xa0] sm:$0xff]
        %v602 = vld [vmem:[%s3 + $0xa8] sm:$0xff]
        %v603 = vld [vmem:[%s3 + $0xb0] sm:$0xff]
        %v604 = vld [vmem:[%s3 + $0xb8] sm:$0xff]
        %v605 = vld [vmem:[%s3 + $0xc0] sm:$0xff]
        %v606 = vld [vmem:[%s3 + $0xc8] sm:$0xff]
        %v607 = vld [vmem:[%s3 + $0xd0] sm:$0xff]
        %v608 = vld [vmem:[%s3 + $0xd8] sm:$0xff]
        %v609 = vld [vmem:[%s3 + $0xe0] sm:$0xff]
        %v610 = vld [vmem:[%s3 + $0xe8] sm:$0xff]
        %v611 = vld [vmem:[%s3 + $0xf0] sm:$0xff]
        %v612 = vld [vmem:[%s3 + $0xf8] sm:$0xff]
        %v613 = vld [vmem:[%s3 + $0x100] sm:$0xff]
        %v614 = vld [vmem:[%s3 + $0x108] sm:$0xff]
        %v615 = vld [vmem:[%s3 + $0x110] sm:$0xff]
        %v616 = vld [vmem:[%s3 + $0x118] sm:$0xff]
        %v617 = vld [vmem:[%s3 + $0x120] sm:$0xff]
        %v618 = vld [vmem:[%s3 + $0x128] sm:$0xff]
        %v619 = vld [vmem:[%s3 + $0x130] sm:$0xff]
        %v620 = vld [vmem:[%s3 + $0x138] sm:$0xff]
        %v621 = vld [vmem:[%s3 + $0x140] sm:$0xff]
        %v622 = vld [vmem:[%s3 + $0x148] sm:$0xff]
        %v623 = vld [vmem:[%s3 + $0x150] sm:$0xff]
        %v624 = vld [vmem:[%s3 + $0x158] sm:$0xff]
        %v625 = vld [vmem:[%s3 + $0x160] sm:$0xff]
        %v626 = vld [vmem:[%s3 + $0x168] sm:$0xff]
        %v627 = vld [vmem:[%s3 + $0x170] sm:$0xff]
        %v628 = vld [vmem:[%s3 + $0x178] sm:$0xff]
        %v629 = vld [vmem:[%s3 + $0x180] sm:$0xff]
        %v630 = vld [vmem:[%s3 + $0x188] sm:$0xff]
        %v631 = vld [vmem:[%s3 + $0x190] sm:$0xff]
        %v632 = vld [vmem:[%s3 + $0x198] sm:$0xff]
        %v633 = vld [vmem:[%s3 + $0x1a0] sm:$0xff]
        %v634 = vld [vmem:[%s3 + $0x1a8] sm:$0xff]
        %v635 = vld [vmem:[%s3 + $0x1b0] sm:$0xff]
        %v636 = vld [vmem:[%s3 + $0x1b8] sm:$0xff]
        %v637 = vld [vmem:[%s3 + $0x1c0] sm:$0xff]
        %v638 = vld [vmem:[%s3 + $0x1c8] sm:$0xff]
        %v639 = vld [vmem:[%s3 + $0x1d0] sm:$0xff]
        %v640 = vld [vmem:[%s3 + $0x1d8] sm:$0xff]
        %v641 = vld [vmem:[%s3 + $0x1e0] sm:$0xff]
        %v642 = vld [vmem:[%s3 + $0x1e8] sm:$0xff]
        %v643 = vld [vmem:[%s3 + $0x1f0] sm:$0xff]
        %v644 = vld [vmem:[%s3 + $0x1f8] sm:$0xff]
        %v645 = vld [vmem:[%s3 + $0x200] sm:$0xff]
        %v646 = vld [vmem:[%s3 + $0x208] sm:$0xff]
        %v647 = vld [vmem:[%s3 + $0x210] sm:$0xff]
        %v648 = vld [vmem:[%s3 + $0x218] sm:$0xff]
        %v649 = vld [vmem:[%s3 + $0x220] sm:$0xff]
        %v650 = vld [vmem:[%s3 + $0x228] sm:$0xff]
        %v651 = vld [vmem:[%s3 + $0x230] sm:$0xff]
        %v652 = vld [vmem:[%s3 + $0x238] sm:$0xff]
        %v653 = vld [vmem:[%s3 + $0x240] sm:$0xff]
        %v654 = vld [vmem:[%s3 + $0x248] sm:$0xff]
        %v655 = vld [vmem:[%s3 + $0x250] sm:$0xff]
        %v656 = vld [vmem:[%s3 + $0x258] sm:$0xff]
        %v657 = vld [vmem:[%s3 + $0x260] sm:$0xff]
        %v658 = vld [vmem:[%s3 + $0x268] sm:$0xff]
        %v659 = vld [vmem:[%s3 + $0x270] sm:$0xff]
        %v660 = vld [vmem:[%s3 + $0x278] sm:$0xff]
        %v661 = vld [vmem:[%s3 + $0x280] sm:$0xff]
        %v662 = vld [vmem:[%s3 + $0x288] sm:$0xff]
        %v663 = vld [vmem:[%s3 + $0x290] sm:$0xff]
        %v664 = vld [vmem:[%s3 + $0x298] sm:$0xff]
        %v665 = vld [vmem:[%s3 + $0x2a0] sm:$0xff]
        %v666 = vld [vmem:[%s3 + $0x2a8] sm:$0xff]
        %v667 = vld [vmem:[%s3 + $0x2b0] sm:$0xff]
        %v668 = vld [vmem:[%s3 + $0x2b8] sm:$0xff]
        %v669 = vld [vmem:[%s3 + $0x2c0] sm:$0xff]
        %v670 = vld [vmem:[%s3 + $0x2c8] sm:$0xff]
        %v671 = vld [vmem:[%s3 + $0x2d0] sm:$0xff]
        %v672 = vld [vmem:[%s3 + $0x2d8] sm:$0xff]
        %v673 = vld [vmem:[%s3 + $0x2e0] sm:$0xff]
        %v674 = vld [vmem:[%s3 + $0x2e8] sm:$0xff]
        %v675 = vld [vmem:[%s3 + $0x2f0] sm:$0xff]
        %v676 = vld [vmem:[%s3 + $0x2f8] sm:$0xff]
        %v677 = vld [vmem:[%s3 + $0x300] sm:$0xff]
        %v678 = vld [vmem:[%s3 + $0x308] sm:$0xff]
        %v679 = vld [vmem:[%s3 + $0x310] sm:$0xff]
        %v680 = vld [vmem:[%s3 + $0x318] sm:$0xff]
        %v681 = vld [vmem:[%s3 + $0x320] sm:$0xff]
        %v682 = vld [vmem:[%s3 + $0x328] sm:$0xff]
        %v683 = vld [vmem:[%s3 + $0x330] sm:$0xff]
        %v684 = vld [vmem:[%s3 + $0x338] sm:$0xff]
        %v685 = vld [vmem:[%s3 + $0x340] sm:$0xff]
        %v686 = vld [vmem:[%s3 + $0x348] sm:$0xff]
        %v687 = vld [vmem:[%s3 + $0x350] sm:$0xff]
        %v688 = vld [vmem:[%s3 + $0x358] sm:$0xff]
        %v689 = vld [vmem:[%s3 + $0x360] sm:$0xff]
        %v690 = vld [vmem:[%s3 + $0x368] sm:$0xff]
        %v691 = vld [vmem:[%s3 + $0x370] sm:$0xff]
        %v692 = vld [vmem:[%s3 + $0x378] sm:$0xff]
        %v693 = vld [vmem:[%s3 + $0x380] sm:$0xff]
        %v694 = vld [vmem:[%s3 + $0x388] sm:$0xff]
        %v695 = vld [vmem:[%s3 + $0x390] sm:$0xff]
        %v696 = vld [vmem:[%s3 + $0x398] sm:$0xff]
        %v697 = vld [vmem:[%s3 + $0x3a0] sm:$0xff]
        %v698 = vld [vmem:[%s3 + $0x3a8] sm:$0xff]
        %v699 = vld [vmem:[%s3 + $0x3b0] sm:$0xff]
        %v700 = vld [vmem:[%s3 + $0x3b8] sm:$0xff]
        %v701 = vld [vmem:[%s3 + $0x3c0] sm:$0xff]
        %v702 = vld [vmem:[%s3 + $0x3c8] sm:$0xff]
        %v703 = vld [vmem:[%s3 + $0x3d0] sm:$0xff]
        %v704 = vld [vmem:[%s3 + $0x3d8] sm:$0xff]
        %v705 = vld [vmem:[%s3 + $0x3e0] sm:$0xff]
        %v706 = vld [vmem:[%s3 + $0x3e8] sm:$0xff]
        %v707 = vld [vmem:[%s3 + $0x3f0] sm:$0xff]
        %v708 = vld [vmem:[%s3 + $0x3f8] sm:$0xff]
        %v709 = vld [vmem:[%s4] sm:$0xff]
        %v710 = vld [vmem:[%s4 + $0x8] sm:$0xff]
        %v839 = vunpack.c.l.b16 %v581
        %v840 = vunpack.c.h.b16 %v581
        %v841 = vunpack.c.l.b16 %v582
        %v842 = vunpack.c.h.b16 %v582
        %v843 = vunpack.c.l.b16 %v583
        %v844 = vunpack.c.h.b16 %v583
        %v845 = vunpack.c.l.b16 %v584
        %v846 = vunpack.c.h.b16 %v584
        %v847 = vunpack.c.l.b16 %v585
        %v848 = vunpack.c.h.b16 %v585
        %v849 = vunpack.c.l.b16 %v586
        %v850 = vunpack.c.h.b16 %v586
        %v851 = vunpack.c.l.b16 %v587
        %v852 = vunpack.c.h.b16 %v587
        %v853 = vunpack.c.l.b16 %v588
        %v854 = vunpack.c.h.b16 %v588
        %v855 = vunpack.c.l.b16 %v589
        %v856 = vunpack.c.h.b16 %v589
        %v857 = vunpack.c.l.b16 %v590
        %v858 = vunpack.c.h.b16 %v590
        %v859 = vunpack.c.l.b16 %v591
        %v860 = vunpack.c.h.b16 %v591
        %v861 = vunpack.c.l.b16 %v592
        %v862 = vunpack.c.h.b16 %v592
        %v863 = vunpack.c.l.b16 %v593
        %v864 = vunpack.c.h.b16 %v593
        %v865 = vunpack.c.l.b16 %v594
        %v866 = vunpack.c.h.b16 %v594
        %v867 = vunpack.c.l.b16 %v595
        %v868 = vunpack.c.h.b16 %v595
        %v869 = vunpack.c.l.b16 %v596
        %v870 = vunpack.c.h.b16 %v596
        %v871 = vunpack.c.l.b16 %v597
        %v872 = vunpack.c.h.b16 %v597
        %v873 = vunpack.c.l.b16 %v598
        %v874 = vunpack.c.h.b16 %v598
        %v875 = vunpack.c.l.b16 %v599
        %v876 = vunpack.c.h.b16 %v599
        %v877 = vunpack.c.l.b16 %v600
        %v878 = vunpack.c.h.b16 %v600
        %v879 = vunpack.c.l.b16 %v601
        %v880 = vunpack.c.h.b16 %v601
        %v881 = vunpack.c.l.b16 %v602
        %v882 = vunpack.c.h.b16 %v602
        %v883 = vunpack.c.l.b16 %v603
        %v884 = vunpack.c.h.b16 %v603
        %v885 = vunpack.c.l.b16 %v604
        %v886 = vunpack.c.h.b16 %v604
        %v887 = vunpack.c.l.b16 %v605
        %v888 = vunpack.c.h.b16 %v605
        %v889 = vunpack.c.l.b16 %v606
        %v890 = vunpack.c.h.b16 %v606
        %v891 = vunpack.c.l.b16 %v607
        %v892 = vunpack.c.h.b16 %v607
        %v893 = vunpack.c.l.b16 %v608
        %v894 = vunpack.c.h.b16 %v608
        %v895 = vunpack.c.l.b16 %v609
        %v896 = vunpack.c.h.b16 %v609
        %v897 = vunpack.c.l.b16 %v610
        %v898 = vunpack.c.h.b16 %v610
        %v899 = vunpack.c.l.b16 %v611
        %v900 = vunpack.c.h.b16 %v611
        %v901 = vunpack.c.l.b16 %v612
        %v902 = vunpack.c.h.b16 %v612
        %v903 = vunpack.c.l.b16 %v613
        %v904 = vunpack.c.h.b16 %v613
        %v905 = vunpack.c.l.b16 %v614
        %v906 = vunpack.c.h.b16 %v614
        %v907 = vunpack.c.l.b16 %v615
        %v908 = vunpack.c.h.b16 %v615
        %v909 = vunpack.c.l.b16 %v616
        %v910 = vunpack.c.h.b16 %v616
        %v911 = vunpack.c.l.b16 %v617
        %v912 = vunpack.c.h.b16 %v617
        %v913 = vunpack.c.l.b16 %v618
        %v914 = vunpack.c.h.b16 %v618
        %v915 = vunpack.c.l.b16 %v619
        %v916 = vunpack.c.h.b16 %v619
        %v917 = vunpack.c.l.b16 %v620
        %v918 = vunpack.c.h.b16 %v620
        %v919 = vunpack.c.l.b16 %v621
        %v920 = vunpack.c.h.b16 %v621
        %v921 = vunpack.c.l.b16 %v622
        %v922 = vunpack.c.h.b16 %v622
        %v923 = vunpack.c.l.b16 %v623
        %v924 = vunpack.c.h.b16 %v623
        %v925 = vunpack.c.l.b16 %v624
        %v926 = vunpack.c.h.b16 %v624
        %v927 = vunpack.c.l.b16 %v625
        %v928 = vunpack.c.h.b16 %v625
        %v929 = vunpack.c.l.b16 %v626
        %v930 = vunpack.c.h.b16 %v626
        %v931 = vunpack.c.l.b16 %v627
        %v932 = vunpack.c.h.b16 %v627
        %v933 = vunpack.c.l.b16 %v628
        %v934 = vunpack.c.h.b16 %v628
        %v935 = vunpack.c.l.b16 %v629
        %v936 = vunpack.c.h.b16 %v629
        %v937 = vunpack.c.l.b16 %v630
        %v938 = vunpack.c.h.b16 %v630
        %v939 = vunpack.c.l.b16 %v631
        %v940 = vunpack.c.h.b16 %v631
        %v941 = vunpack.c.l.b16 %v632
        %v942 = vunpack.c.h.b16 %v632
        %v943 = vunpack.c.l.b16 %v633
        %v944 = vunpack.c.h.b16 %v633
        %v945 = vunpack.c.l.b16 %v634
        %v946 = vunpack.c.h.b16 %v634
        %v947 = vunpack.c.l.b16 %v635
        %v948 = vunpack.c.h.b16 %v635
        %v949 = vunpack.c.l.b16 %v636
        %v950 = vunpack.c.h.b16 %v636
        %v951 = vunpack.c.l.b16 %v637
        %v952 = vunpack.c.h.b16 %v637
        %v953 = vunpack.c.l.b16 %v638
        %v954 = vunpack.c.h.b16 %v638
        %v955 = vunpack.c.l.b16 %v639
        %v956 = vunpack.c.h.b16 %v639
        %v957 = vunpack.c.l.b16 %v640
        %v958 = vunpack.c.h.b16 %v640
        %v959 = vunpack.c.l.b16 %v641
        %v960 = vunpack.c.h.b16 %v641
        %v961 = vunpack.c.l.b16 %v642
        %v962 = vunpack.c.h.b16 %v642
        %v963 = vunpack.c.l.b16 %v643
        %v964 = vunpack.c.h.b16 %v643
        %v965 = vunpack.c.l.b16 %v644
        %v966 = vunpack.c.h.b16 %v644
        %v967 = vunpack.c.l.b16 %v645
        %v968 = vunpack.c.h.b16 %v645
        %v969 = vunpack.c.l.b16 %v646
        %v970 = vunpack.c.h.b16 %v646
        %v971 = vunpack.c.l.b16 %v647
        %v972 = vunpack.c.h.b16 %v647
        %v973 = vunpack.c.l.b16 %v648
        %v974 = vunpack.c.h.b16 %v648
        %v975 = vunpack.c.l.b16 %v649
        %v976 = vunpack.c.h.b16 %v649
        %v977 = vunpack.c.l.b16 %v650
        %v978 = vunpack.c.h.b16 %v650
        %v979 = vunpack.c.l.b16 %v651
        %v980 = vunpack.c.h.b16 %v651
        %v981 = vunpack.c.l.b16 %v652
        %v982 = vunpack.c.h.b16 %v652
        %v983 = vunpack.c.l.b16 %v653
        %v984 = vunpack.c.h.b16 %v653
        %v985 = vunpack.c.l.b16 %v654
        %v986 = vunpack.c.h.b16 %v654
        %v987 = vunpack.c.l.b16 %v655
        %v988 = vunpack.c.h.b16 %v655
        %v989 = vunpack.c.l.b16 %v656
        %v990 = vunpack.c.h.b16 %v656
        %v991 = vunpack.c.l.b16 %v657
        %v992 = vunpack.c.h.b16 %v657
        %v993 = vunpack.c.l.b16 %v658
        %v994 = vunpack.c.h.b16 %v658
        %v995 = vunpack.c.l.b16 %v659
        %v996 = vunpack.c.h.b16 %v659
        %v997 = vunpack.c.l.b16 %v660
        %v998 = vunpack.c.h.b16 %v660
        %v999 = vunpack.c.l.b16 %v661
        %v1000 = vunpack.c.h.b16 %v661
        %v1001 = vunpack.c.l.b16 %v662
        %v1002 = vunpack.c.h.b16 %v662
        %v1003 = vunpack.c.l.b16 %v663
        %v1004 = vunpack.c.h.b16 %v663
        %v1005 = vunpack.c.l.b16 %v664
        %v1006 = vunpack.c.h.b16 %v664
        %v1007 = vunpack.c.l.b16 %v665
        %v1008 = vunpack.c.h.b16 %v665
        %v1009 = vunpack.c.l.b16 %v666
        %v1010 = vunpack.c.h.b16 %v666
        %v1011 = vunpack.c.l.b16 %v667
        %v1012 = vunpack.c.h.b16 %v667
        %v1013 = vunpack.c.l.b16 %v668
        %v1014 = vunpack.c.h.b16 %v668
        %v1015 = vunpack.c.l.b16 %v669
        %v1016 = vunpack.c.h.b16 %v669
        %v1017 = vunpack.c.l.b16 %v670
        %v1018 = vunpack.c.h.b16 %v670
        %v1019 = vunpack.c.l.b16 %v671
        %v1020 = vunpack.c.h.b16 %v671
        %v1021 = vunpack.c.l.b16 %v672
        %v1022 = vunpack.c.h.b16 %v672
        %v1023 = vunpack.c.l.b16 %v673
        %v1024 = vunpack.c.h.b16 %v673
        %v1025 = vunpack.c.l.b16 %v674
        %v1026 = vunpack.c.h.b16 %v674
        %v1027 = vunpack.c.l.b16 %v675
        %v1028 = vunpack.c.h.b16 %v675
        %v1029 = vunpack.c.l.b16 %v676
        %v1030 = vunpack.c.h.b16 %v676
        %v1031 = vunpack.c.l.b16 %v677
        %v1032 = vunpack.c.h.b16 %v677
        %v1033 = vunpack.c.l.b16 %v678
        %v1034 = vunpack.c.h.b16 %v678
        %v1035 = vunpack.c.l.b16 %v679
        %v1036 = vunpack.c.h.b16 %v679
        %v1037 = vunpack.c.l.b16 %v680
        %v1038 = vunpack.c.h.b16 %v680
        %v1039 = vunpack.c.l.b16 %v681
        %v1040 = vunpack.c.h.b16 %v681
        %v1041 = vunpack.c.l.b16 %v682
        %v1042 = vunpack.c.h.b16 %v682
        %v1043 = vunpack.c.l.b16 %v683
        %v1044 = vunpack.c.h.b16 %v683
        %v1045 = vunpack.c.l.b16 %v684
        %v1046 = vunpack.c.h.b16 %v684
        %v1047 = vunpack.c.l.b16 %v685
        %v1048 = vunpack.c.h.b16 %v685
        %v1049 = vunpack.c.l.b16 %v686
        %v1050 = vunpack.c.h.b16 %v686
        %v1051 = vunpack.c.l.b16 %v687
        %v1052 = vunpack.c.h.b16 %v687
        %v1053 = vunpack.c.l.b16 %v688
        %v1054 = vunpack.c.h.b16 %v688
        %v1055 = vunpack.c.l.b16 %v689
        %v1056 = vunpack.c.h.b16 %v689
        %v1057 = vunpack.c.l.b16 %v690
        %v1058 = vunpack.c.h.b16 %v690
        %v1059 = vunpack.c.l.b16 %v691
        %v1060 = vunpack.c.h.b16 %v691
        %v1061 = vunpack.c.l.b16 %v692
        %v1062 = vunpack.c.h.b16 %v692
        %v1063 = vunpack.c.l.b16 %v693
        %v1064 = vunpack.c.h.b16 %v693
        %v1065 = vunpack.c.l.b16 %v694
        %v1066 = vunpack.c.h.b16 %v694
        %v1067 = vunpack.c.l.b16 %v695
        %v1068 = vunpack.c.h.b16 %v695
        %v1069 = vunpack.c.l.b16 %v696
        %v1070 = vunpack.c.h.b16 %v696
        %v1071 = vunpack.c.l.b16 %v697
        %v1072 = vunpack.c.h.b16 %v697
        %v1073 = vunpack.c.l.b16 %v698
        %v1074 = vunpack.c.h.b16 %v698
        %v1075 = vunpack.c.l.b16 %v699
        %v1076 = vunpack.c.h.b16 %v699
        %v1077 = vunpack.c.l.b16 %v700
        %v1078 = vunpack.c.h.b16 %v700
        %v1079 = vunpack.c.l.b16 %v701
        %v1080 = vunpack.c.h.b16 %v701
        %v1081 = vunpack.c.l.b16 %v702
        %v1082 = vunpack.c.h.b16 %v702
        %v1083 = vunpack.c.l.b16 %v703
        %v1084 = vunpack.c.h.b16 %v703
        %v1085 = vunpack.c.l.b16 %v704
        %v1086 = vunpack.c.h.b16 %v704
        %v1087 = vunpack.c.l.b16 %v705
        %v1088 = vunpack.c.h.b16 %v705
        %v1089 = vunpack.c.l.b16 %v706
        %v1090 = vunpack.c.h.b16 %v706
        %v1091 = vunpack.c.l.b16 %v707
        %v1092 = vunpack.c.h.b16 %v707
        %v1093 = vunpack.c.l.b16 %v708
        %v1094 = vunpack.c.h.b16 %v708
        %v1095 = vpack.c.b16 %v855, %v839
        %v1096 = vpack.c.b16 %v856, %v840
        %v1097 = vpack.c.b16 %v857, %v841
        %v1098 = vpack.c.b16 %v858, %v842
        %v1099 = vpack.c.b16 %v859, %v843
        %v1100 = vpack.c.b16 %v860, %v844
        %v1101 = vpack.c.b16 %v861, %v845
        %v1102 = vpack.c.b16 %v862, %v846
        %v1103 = vpack.c.b16 %v863, %v847
        %v1104 = vpack.c.b16 %v864, %v848
        %v1105 = vpack.c.b16 %v865, %v849
        %v1106 = vpack.c.b16 %v866, %v850
        %v1107 = vpack.c.b16 %v867, %v851
        %v1108 = vpack.c.b16 %v868, %v852
        %v1109 = vpack.c.b16 %v869, %v853
        %v1110 = vpack.c.b16 %v870, %v854
        %v1111 = vpack.c.b16 %v887, %v871
        %v1112 = vpack.c.b16 %v888, %v872
        %v1113 = vpack.c.b16 %v889, %v873
        %v1114 = vpack.c.b16 %v890, %v874
        %v1115 = vpack.c.b16 %v891, %v875
        %v1116 = vpack.c.b16 %v892, %v876
        %v1117 = vpack.c.b16 %v893, %v877
        %v1118 = vpack.c.b16 %v894, %v878
        %v1119 = vpack.c.b16 %v895, %v879
        %v1120 = vpack.c.b16 %v896, %v880
        %v1121 = vpack.c.b16 %v897, %v881
        %v1122 = vpack.c.b16 %v898, %v882
        %v1123 = vpack.c.b16 %v899, %v883
        %v1124 = vpack.c.b16 %v900, %v884
        %v1125 = vpack.c.b16 %v901, %v885
        %v1126 = vpack.c.b16 %v902, %v886
        %v1127 = vpack.c.b16 %v919, %v903
        %v1128 = vpack.c.b16 %v920, %v904
        %v1129 = vpack.c.b16 %v921, %v905
        %v1130 = vpack.c.b16 %v922, %v906
        %v1131 = vpack.c.b16 %v923, %v907
        %v1132 = vpack.c.b16 %v924, %v908
        %v1133 = vpack.c.b16 %v925, %v909
        %v1134 = vpack.c.b16 %v926, %v910
        %v1135 = vpack.c.b16 %v927, %v911
        %v1136 = vpack.c.b16 %v928, %v912
        %v1137 = vpack.c.b16 %v929, %v913
        %v1138 = vpack.c.b16 %v930, %v914
        %v1139 = vpack.c.b16 %v931, %v915
        %v1140 = vpack.c.b16 %v932, %v916
        %v1141 = vpack.c.b16 %v933, %v917
        %v1142 = vpack.c.b16 %v934, %v918
        %v1143 = vpack.c.b16 %v951, %v935
        %v1144 = vpack.c.b16 %v952, %v936
        %v1145 = vpack.c.b16 %v953, %v937
        %v1146 = vpack.c.b16 %v954, %v938
        %v1147 = vpack.c.b16 %v955, %v939
        %v1148 = vpack.c.b16 %v956, %v940
        %v1149 = vpack.c.b16 %v957, %v941
        %v1150 = vpack.c.b16 %v958, %v942
        %v1151 = vpack.c.b16 %v959, %v943
        %v1152 = vpack.c.b16 %v960, %v944
        %v1153 = vpack.c.b16 %v961, %v945
        %v1154 = vpack.c.b16 %v962, %v946
        %v1155 = vpack.c.b16 %v963, %v947
        %v1156 = vpack.c.b16 %v964, %v948
        %v1157 = vpack.c.b16 %v965, %v949
        %v1158 = vpack.c.b16 %v966, %v950
        %v1159 = vpack.c.b16 %v983, %v967
        %v1160 = vpack.c.b16 %v984, %v968
        %v1161 = vpack.c.b16 %v985, %v969
        %v1162 = vpack.c.b16 %v986, %v970
        %v1163 = vpack.c.b16 %v987, %v971
        %v1164 = vpack.c.b16 %v988, %v972
        %v1165 = vpack.c.b16 %v989, %v973
        %v1166 = vpack.c.b16 %v990, %v974
        %v1167 = vpack.c.b16 %v991, %v975
        %v1168 = vpack.c.b16 %v992, %v976
        %v1169 = vpack.c.b16 %v993, %v977
        %v1170 = vpack.c.b16 %v994, %v978
        %v1171 = vpack.c.b16 %v995, %v979
        %v1172 = vpack.c.b16 %v996, %v980
        %v1173 = vpack.c.b16 %v997, %v981
        %v1174 = vpack.c.b16 %v998, %v982
        %v1175 = vpack.c.b16 %v1015, %v999
        %v1176 = vpack.c.b16 %v1016, %v1000
        %v1177 = vpack.c.b16 %v1017, %v1001
        %v1178 = vpack.c.b16 %v1018, %v1002
        %v1179 = vpack.c.b16 %v1019, %v1003
        %v1180 = vpack.c.b16 %v1020, %v1004
        %v1181 = vpack.c.b16 %v1021, %v1005
        %v1182 = vpack.c.b16 %v1022, %v1006
        %v1183 = vpack.c.b16 %v1023, %v1007
        %v1184 = vpack.c.b16 %v1024, %v1008
        %v1185 = vpack.c.b16 %v1025, %v1009
        %v1186 = vpack.c.b16 %v1026, %v1010
        %v1187 = vpack.c.b16 %v1027, %v1011
        %v1188 = vpack.c.b16 %v1028, %v1012
        %v1189 = vpack.c.b16 %v1029, %v1013
        %v1190 = vpack.c.b16 %v1030, %v1014
        %v1191 = vpack.c.b16 %v1047, %v1031
        %v1192 = vpack.c.b16 %v1048, %v1032
        %v1193 = vpack.c.b16 %v1049, %v1033
        %v1194 = vpack.c.b16 %v1050, %v1034
        %v1195 = vpack.c.b16 %v1051, %v1035
        %v1196 = vpack.c.b16 %v1052, %v1036
        %v1197 = vpack.c.b16 %v1053, %v1037
        %v1198 = vpack.c.b16 %v1054, %v1038
        %v1199 = vpack.c.b16 %v1055, %v1039
        %v1200 = vpack.c.b16 %v1056, %v1040
        %v1201 = vpack.c.b16 %v1057, %v1041
        %v1202 = vpack.c.b16 %v1058, %v1042
        %v1203 = vpack.c.b16 %v1059, %v1043
        %v1204 = vpack.c.b16 %v1060, %v1044
        %v1205 = vpack.c.b16 %v1061, %v1045
        %v1206 = vpack.c.b16 %v1062, %v1046
        %v1207 = vpack.c.b16 %v1079, %v1063
        %v1208 = vpack.c.b16 %v1080, %v1064
        %v1209 = vpack.c.b16 %v1081, %v1065
        %v1210 = vpack.c.b16 %v1082, %v1066
        %v1211 = vpack.c.b16 %v1083, %v1067
        %v1212 = vpack.c.b16 %v1084, %v1068
        %v1213 = vpack.c.b16 %v1085, %v1069
        %v1214 = vpack.c.b16 %v1086, %v1070
        %v1215 = vpack.c.b16 %v1087, %v1071
        %v1216 = vpack.c.b16 %v1088, %v1072
        %v1217 = vpack.c.b16 %v1089, %v1073
        %v1218 = vpack.c.b16 %v1090, %v1074
        %v1219 = vpack.c.b16 %v1091, %v1075
        %v1220 = vpack.c.b16 %v1092, %v1076
        %v1221 = vpack.c.b16 %v1093, %v1077
        %v1222 = vpack.c.b16 %v1094, %v1078
        %v1353 = vlaneseq
        %v1354 = vshrl.u32 %v1353, 7
        %v1355 = vsub.s32 0, %v1354
        %v1356 = vrot.slane %v709, %v1355
        %v1357 = vlaneseq
        %v1358 = vshrl.u32 %v1357, 7
        %v1359 = vsub.s32 1, %v1358
        %v1360 = vrot.slane %v709, %v1359
        %v1361 = vlaneseq
        %v1362 = vshrl.u32 %v1361, 7
        %v1363 = vsub.s32 2, %v1362
        %v1364 = vrot.slane %v709, %v1363
        %v1365 = vlaneseq
        %v1366 = vshrl.u32 %v1365, 7
        %v1367 = vsub.s32 3, %v1366
        %v1368 = vrot.slane %v709, %v1367
        %v1369 = vlaneseq
        %v1370 = vshrl.u32 %v1369, 7
        %v1371 = vsub.s32 4, %v1370
        %v1372 = vrot.slane %v709, %v1371
        %v1373 = vlaneseq
        %v1374 = vshrl.u32 %v1373, 7
        %v1375 = vsub.s32 5, %v1374
        %v1376 = vrot.slane %v709, %v1375
        %v1377 = vlaneseq
        %v1378 = vshrl.u32 %v1377, 7
        %v1379 = vsub.s32 6, %v1378
        %v1380 = vrot.slane %v709, %v1379
        %v1381 = vlaneseq
        %v1382 = vshrl.u32 %v1381, 7
        %v1383 = vsub.s32 7, %v1382
        %v1384 = vrot.slane %v709, %v1383
        %v1385 = vlaneseq
        %v1386 = vshrl.u32 %v1385, 7
        %v1387 = vsub.s32 0, %v1386
        %v1388 = vrot.slane %v710, %v1387
        %v1389 = vlaneseq
        %v1390 = vshrl.u32 %v1389, 7
        %v1391 = vsub.s32 1, %v1390
        %v1392 = vrot.slane %v710, %v1391
        %v1393 = vlaneseq
        %v1394 = vshrl.u32 %v1393, 7
        %v1395 = vsub.s32 2, %v1394
        %v1396 = vrot.slane %v710, %v1395
        %v1397 = vlaneseq
        %v1398 = vshrl.u32 %v1397, 7
        %v1399 = vsub.s32 3, %v1398
        %v1400 = vrot.slane %v710, %v1399
        %v1401 = vlaneseq
        %v1402 = vshrl.u32 %v1401, 7
        %v1403 = vsub.s32 4, %v1402
        %v1404 = vrot.slane %v710, %v1403
        %v1405 = vlaneseq
        %v1406 = vshrl.u32 %v1405, 7
        %v1407 = vsub.s32 5, %v1406
        %v1408 = vrot.slane %v710, %v1407
        %v1409 = vlaneseq
        %v1410 = vshrl.u32 %v1409, 7
        %v1411 = vsub.s32 6, %v1410
        %v1412 = vrot.slane %v710, %v1411
        %v1413 = vlaneseq
        %v1414 = vshrl.u32 %v1413, 7
        %v1415 = vsub.s32 7, %v1414
        %v1416 = vrot.slane %v710, %v1415
        %1433 = vmatprep.subr.bf16.mxu0 %v1096
        %1434 = vmatpush1.bf16.msra.mxu0 %v1095
        %1435 = vmatprep.subr.bf16.mxu0 %v1112
        %1436 = vmatpush1.bf16.msra.mxu0 %v1111
        %1437 = vmatprep.subr.bf16.mxu0 %v1128
        %1438 = vmatpush1.bf16.msra.mxu0 %v1127
        %1439 = vmatprep.subr.bf16.mxu0 %v1144
        %1440 = vmatpush1.bf16.msra.mxu0 %v1143
        %1441 = vmatprep.subr.bf16.mxu0 %v1160
        %1442 = vmatpush1.bf16.msra.mxu0 %v1159
        %1443 = vmatprep.subr.bf16.mxu0 %v1176
        %1444 = vmatpush1.bf16.msra.mxu0 %v1175
        %1445 = vmatprep.subr.bf16.mxu0 %v1192
        %1446 = vmatpush1.bf16.msra.mxu0 %v1191
        %1447 = vmatprep.subr.bf16.mxu0 %v1208
        %1448 = vmatpush1.bf16.msra.mxu0 %v1207
        %1449 = vmatprep.subr.bf16.mxu0 0
        %1450 = vmatpush1.bf16.msra.mxu0 0
        %1451 = vmatprep.subr.bf16.mxu0 0
        %1452 = vmatpush1.bf16.msra.mxu0 0
        %1453 = vmatprep.subr.bf16.mxu0 0
        %1454 = vmatpush1.bf16.msra.mxu0 0
        %1455 = vmatprep.subr.bf16.mxu0 0
        %1456 = vmatpush1.bf16.msra.mxu0 0
        %1457 = vmatprep.subr.bf16.mxu0 0
        %1458 = vmatpush1.bf16.msra.mxu0 0
        %1459 = vmatprep.subr.bf16.mxu0 0
        %1460 = vmatpush1.bf16.msra.mxu0 0
        %1461 = vmatprep.subr.bf16.mxu0 0
        %1462 = vmatpush1.bf16.msra.mxu0 0
        %1463 = vmatprep.subr.bf16.mxu0 0
        %1464 = vmatpush1.bf16.msra.mxu0 0
        %1465 = vmatprep.mubr.bf16.mxu0 0
        %1466 = vmatmul.mubr.bf16.gmra.mrb[0].mxu0 %v580
        %v1467 = vpop.f32.mrb[0].mxu0
        %v1468 = vadd.f32 %v1356, %v1467
        %v1469 = vpop.f32.mrb[0].mxu0
        %v1470 = vadd.f32 %v1360, %v1469
        %v1471 = vpop.f32.mrb[0].mxu0
        %v1472 = vpop.f32.mrb[0].mxu0
        %1473 = vdwg.mxu0
        %1474 = vmatprep.subr.bf16.mxu0 %v1098
        %1475 = vmatpush1.bf16.msra.mxu0 %v1097
        %1476 = vmatprep.subr.bf16.mxu0 %v1114
        %1477 = vmatpush1.bf16.msra.mxu0 %v1113
        %1478 = vmatprep.subr.bf16.mxu0 %v1130
        %1479 = vmatpush1.bf16.msra.mxu0 %v1129
        %1480 = vmatprep.subr.bf16.mxu0 %v1146
        %1481 = vmatpush1.bf16.msra.mxu0 %v1145
        %1482 = vmatprep.subr.bf16.mxu0 %v1162
        %1483 = vmatpush1.bf16.msra.mxu0 %v1161
        %1484 = vmatprep.subr.bf16.mxu0 %v1178
        %1485 = vmatpush1.bf16.msra.mxu0 %v1177
        %1486 = vmatprep.subr.bf16.mxu0 %v1194
        %1487 = vmatpush1.bf16.msra.mxu0 %v1193
        %1488 = vmatprep.subr.bf16.mxu0 %v1210
        %1489 = vmatpush1.bf16.msra.mxu0 %v1209
        %1490 = vmatprep.subr.bf16.mxu0 0
        %1491 = vmatpush1.bf16.msra.mxu0 0
        %1492 = vmatprep.subr.bf16.mxu0 0
        %1493 = vmatpush1.bf16.msra.mxu0 0
        %1494 = vmatprep.subr.bf16.mxu0 0
        %1495 = vmatpush1.bf16.msra.mxu0 0
        %1496 = vmatprep.subr.bf16.mxu0 0
        %1497 = vmatpush1.bf16.msra.mxu0 0
        %1498 = vmatprep.subr.bf16.mxu0 0
        %1499 = vmatpush1.bf16.msra.mxu0 0
        %1500 = vmatprep.subr.bf16.mxu0 0
        %1501 = vmatpush1.bf16.msra.mxu0 0
        %1502 = vmatprep.subr.bf16.mxu0 0
        %1503 = vmatpush1.bf16.msra.mxu0 0
        %1504 = vmatprep.subr.bf16.mxu0 0
        %1505 = vmatpush1.bf16.msra.mxu0 0
        %1506 = vmatprep.mubr.bf16.mxu0 0
        %1507 = vmatmul.mubr.bf16.gmra.mrb[0].mxu0 %v580
        %v1508 = vpop.f32.mrb[0].mxu0
        %v1509 = vadd.f32 %v1364, %v1508
        %v1510 = vpop.f32.mrb[0].mxu0
        %v1511 = vadd.f32 %v1368, %v1510
        %v1512 = vpop.f32.mrb[0].mxu0
        %v1513 = vpop.f32.mrb[0].mxu0
        %1514 = vdwg.mxu0
        %1515 = vmatprep.subr.bf16.mxu0 %v1100
        %1516 = vmatpush1.bf16.msra.mxu0 %v1099
        %1517 = vmatprep.subr.bf16.mxu0 %v1116
        %1518 = vmatpush1.bf16.msra.mxu0 %v1115
        %1519 = vmatprep.subr.bf16.mxu0 %v1132
        %1520 = vmatpush1.bf16.msra.mxu0 %v1131
        %1521 = vmatprep.subr.bf16.mxu0 %v1148
        %1522 = vmatpush1.bf16.msra.mxu0 %v1147
        %1523 = vmatprep.subr.bf16.mxu0 %v1164
        %1524 = vmatpush1.bf16.msra.mxu0 %v1163
        %1525 = vmatprep.subr.bf16.mxu0 %v1180
        %1526 = vmatpush1.bf16.msra.mxu0 %v1179
        %1527 = vmatprep.subr.bf16.mxu0 %v1196
        %1528 = vmatpush1.bf16.msra.mxu0 %v1195
        %1529 = vmatprep.subr.bf16.mxu0 %v1212
        %1530 = vmatpush1.bf16.msra.mxu0 %v1211
        %1531 = vmatprep.subr.bf16.mxu0 0
        %1532 = vmatpush1.bf16.msra.mxu0 0
        %1533 = vmatprep.subr.bf16.mxu0 0
        %1534 = vmatpush1.bf16.msra.mxu0 0
        %1535 = vmatprep.subr.bf16.mxu0 0
        %1536 = vmatpush1.bf16.msra.mxu0 0
        %1537 = vmatprep.subr.bf16.mxu0 0
        %1538 = vmatpush1.bf16.msra.mxu0 0
        %1539 = vmatprep.subr.bf16.mxu0 0
        %1540 = vmatpush1.bf16.msra.mxu0 0
        %1541 = vmatprep.subr.bf16.mxu0 0
        %1542 = vmatpush1.bf16.msra.mxu0 0
        %1543 = vmatprep.subr.bf16.mxu0 0
        %1544 = vmatpush1.bf16.msra.mxu0 0
        %1545 = vmatprep.subr.bf16.mxu0 0
        %1546 = vmatpush1.bf16.msra.mxu0 0
        %1547 = vmatprep.mubr.bf16.mxu0 0
        %1548 = vmatmul.mubr.bf16.gmra.mrb[0].mxu0 %v580
        %v1549 = vpop.f32.mrb[0].mxu0
        %v1550 = vadd.f32 %v1372, %v1549
        %v1551 = vpop.f32.mrb[0].mxu0
        %v1552 = vadd.f32 %v1376, %v1551
        %v1553 = vpop.f32.mrb[0].mxu0
        %v1554 = vpop.f32.mrb[0].mxu0
        %1555 = vdwg.mxu0
        %1556 = vmatprep.subr.bf16.mxu0 %v1102
        %1557 = vmatpush1.bf16.msra.mxu0 %v1101
        %1558 = vmatprep.subr.bf16.mxu0 %v1118
        %1559 = vmatpush1.bf16.msra.mxu0 %v1117
        %1560 = vmatprep.subr.bf16.mxu0 %v1134
        %1561 = vmatpush1.bf16.msra.mxu0 %v1133
        %1562 = vmatprep.subr.bf16.mxu0 %v1150
        %1563 = vmatpush1.bf16.msra.mxu0 %v1149
        %1564 = vmatprep.subr.bf16.mxu0 %v1166
        %1565 = vmatpush1.bf16.msra.mxu0 %v1165
        %1566 = vmatprep.subr.bf16.mxu0 %v1182
        %1567 = vmatpush1.bf16.msra.mxu0 %v1181
        %1568 = vmatprep.subr.bf16.mxu0 %v1198
        %1569 = vmatpush1.bf16.msra.mxu0 %v1197
        %1570 = vmatprep.subr.bf16.mxu0 %v1214
        %1571 = vmatpush1.bf16.msra.mxu0 %v1213
        %1572 = vmatprep.subr.bf16.mxu0 0
        %1573 = vmatpush1.bf16.msra.mxu0 0
        %1574 = vmatprep.subr.bf16.mxu0 0
        %1575 = vmatpush1.bf16.msra.mxu0 0
        %1576 = vmatprep.subr.bf16.mxu0 0
        %1577 = vmatpush1.bf16.msra.mxu0 0
        %1578 = vmatprep.subr.bf16.mxu0 0
        %1579 = vmatpush1.bf16.msra.mxu0 0
        %1580 = vmatprep.subr.bf16.mxu0 0
        %1581 = vmatpush1.bf16.msra.mxu0 0
        %1582 = vmatprep.subr.bf16.mxu0 0
        %1583 = vmatpush1.bf16.msra.mxu0 0
        %1584 = vmatprep.subr.bf16.mxu0 0
        %1585 = vmatpush1.bf16.msra.mxu0 0
        %1586 = vmatprep.subr.bf16.mxu0 0
        %1587 = vmatpush1.bf16.msra.mxu0 0
        %1588 = vmatprep.mubr.bf16.mxu0 0
        %1589 = vmatmul.mubr.bf16.gmra.mrb[0].mxu0 %v580
        %v1590 = vpop.f32.mrb[0].mxu0
        %v1591 = vadd.f32 %v1380, %v1590
        %v1592 = vpop.f32.mrb[0].mxu0
        %v1593 = vadd.f32 %v1384, %v1592
        %v1594 = vpop.f32.mrb[0].mxu0
        %v1595 = vpop.f32.mrb[0].mxu0
        %1596 = vdwg.mxu0
        %1597 = vmatprep.subr.bf16.mxu0 %v1104
        %1598 = vmatpush1.bf16.msra.mxu0 %v1103
        %1599 = vmatprep.subr.bf16.mxu0 %v1120
        %1600 = vmatpush1.bf16.msra.mxu0 %v1119
        %1601 = vmatprep.subr.bf16.mxu0 %v1136
        %1602 = vmatpush1.bf16.msra.mxu0 %v1135
        %1603 = vmatprep.subr.bf16.mxu0 %v1152
        %1604 = vmatpush1.bf16.msra.mxu0 %v1151
        %1605 = vmatprep.subr.bf16.mxu0 %v1168
        %1606 = vmatpush1.bf16.msra.mxu0 %v1167
        %1607 = vmatprep.subr.bf16.mxu0 %v1184
        %1608 = vmatpush1.bf16.msra.mxu0 %v1183
        %1609 = vmatprep.subr.bf16.mxu0 %v1200
        %1610 = vmatpush1.bf16.msra.mxu0 %v1199
        %1611 = vmatprep.subr.bf16.mxu0 %v1216
        %1612 = vmatpush1.bf16.msra.mxu0 %v1215
        %1613 = vmatprep.subr.bf16.mxu0 0
        %1614 = vmatpush1.bf16.msra.mxu0 0
        %1615 = vmatprep.subr.bf16.mxu0 0
        %1616 = vmatpush1.bf16.msra.mxu0 0
        %1617 = vmatprep.subr.bf16.mxu0 0
        %1618 = vmatpush1.bf16.msra.mxu0 0
        %1619 = vmatprep.subr.bf16.mxu0 0
        %1620 = vmatpush1.bf16.msra.mxu0 0
        %1621 = vmatprep.subr.bf16.mxu0 0
        %1622 = vmatpush1.bf16.msra.mxu0 0
        %1623 = vmatprep.subr.bf16.mxu0 0
        %1624 = vmatpush1.bf16.msra.mxu0 0
        %1625 = vmatprep.subr.bf16.mxu0 0
        %1626 = vmatpush1.bf16.msra.mxu0 0
        %1627 = vmatprep.subr.bf16.mxu0 0
        %1628 = vmatpush1.bf16.msra.mxu0 0
        %1629 = vmatprep.mubr.bf16.mxu0 0
        %1630 = vmatmul.mubr.bf16.gmra.mrb[0].mxu0 %v580
        %v1631 = vpop.f32.mrb[0].mxu0
        %v1632 = vadd.f32 %v1388, %v1631
        %v1633 = vpop.f32.mrb[0].mxu0
        %v1634 = vadd.f32 %v1392, %v1633
        %v1635 = vpop.f32.mrb[0].mxu0
        %v1636 = vpop.f32.mrb[0].mxu0
        %1637 = vdwg.mxu0
        %1638 = vmatprep.subr.bf16.mxu0 %v1106
        %1639 = vmatpush1.bf16.msra.mxu0 %v1105
        %1640 = vmatprep.subr.bf16.mxu0 %v1122
        %1641 = vmatpush1.bf16.msra.mxu0 %v1121
        %1642 = vmatprep.subr.bf16.mxu0 %v1138
        %1643 = vmatpush1.bf16.msra.mxu0 %v1137
        %1644 = vmatprep.subr.bf16.mxu0 %v1154
        %1645 = vmatpush1.bf16.msra.mxu0 %v1153
        %1646 = vmatprep.subr.bf16.mxu0 %v1170
        %1647 = vmatpush1.bf16.msra.mxu0 %v1169
        %1648 = vmatprep.subr.bf16.mxu0 %v1186
        %1649 = vmatpush1.bf16.msra.mxu0 %v1185
        %1650 = vmatprep.subr.bf16.mxu0 %v1202
        %1651 = vmatpush1.bf16.msra.mxu0 %v1201
        %1652 = vmatprep.subr.bf16.mxu0 %v1218
        %1653 = vmatpush1.bf16.msra.mxu0 %v1217
        %1654 = vmatprep.subr.bf16.mxu0 0
        %1655 = vmatpush1.bf16.msra.mxu0 0
        %1656 = vmatprep.subr.bf16.mxu0 0
        %1657 = vmatpush1.bf16.msra.mxu0 0
        %1658 = vmatprep.subr.bf16.mxu0 0
        %1659 = vmatpush1.bf16.msra.mxu0 0
        %1660 = vmatprep.subr.bf16.mxu0 0
        %1661 = vmatpush1.bf16.msra.mxu0 0
        %1662 = vmatprep.subr.bf16.mxu0 0
        %1663 = vmatpush1.bf16.msra.mxu0 0
        %1664 = vmatprep.subr.bf16.mxu0 0
        %1665 = vmatpush1.bf16.msra.mxu0 0
        %1666 = vmatprep.subr.bf16.mxu0 0
        %1667 = vmatpush1.bf16.msra.mxu0 0
        %1668 = vmatprep.subr.bf16.mxu0 0
        %1669 = vmatpush1.bf16.msra.mxu0 0
        %1670 = vmatprep.mubr.bf16.mxu0 0
        %1671 = vmatmul.mubr.bf16.gmra.mrb[0].mxu0 %v580
        %v1672 = vpop.f32.mrb[0].mxu0
        %v1673 = vadd.f32 %v1396, %v1672
        %v1674 = vpop.f32.mrb[0].mxu0
        %v1675 = vadd.f32 %v1400, %v1674
        %v1676 = vpop.f32.mrb[0].mxu0
        %v1677 = vpop.f32.mrb[0].mxu0
        %1678 = vdwg.mxu0
        %1679 = vmatprep.subr.bf16.mxu0 %v1108
        %1680 = vmatpush1.bf16.msra.mxu0 %v1107
        %1681 = vmatprep.subr.bf16.mxu0 %v1124
        %1682 = vmatpush1.bf16.msra.mxu0 %v1123
        %1683 = vmatprep.subr.bf16.mxu0 %v1140
        %1684 = vmatpush1.bf16.msra.mxu0 %v1139
        %1685 = vmatprep.subr.bf16.mxu0 %v1156
        %1686 = vmatpush1.bf16.msra.mxu0 %v1155
        %1687 = vmatprep.subr.bf16.mxu0 %v1172
        %1688 = vmatpush1.bf16.msra.mxu0 %v1171
        %1689 = vmatprep.subr.bf16.mxu0 %v1188
        %1690 = vmatpush1.bf16.msra.mxu0 %v1187
        %1691 = vmatprep.subr.bf16.mxu0 %v1204
        %1692 = vmatpush1.bf16.msra.mxu0 %v1203
        %1693 = vmatprep.subr.bf16.mxu0 %v1220
        %1694 = vmatpush1.bf16.msra.mxu0 %v1219
        %1695 = vmatprep.subr.bf16.mxu0 0
        %1696 = vmatpush1.bf16.msra.mxu0 0
        %1697 = vmatprep.subr.bf16.mxu0 0
        %1698 = vmatpush1.bf16.msra.mxu0 0
        %1699 = vmatprep.subr.bf16.mxu0 0
        %1700 = vmatpush1.bf16.msra.mxu0 0
        %1701 = vmatprep.subr.bf16.mxu0 0
        %1702 = vmatpush1.bf16.msra.mxu0 0
        %1703 = vmatprep.subr.bf16.mxu0 0
        %1704 = vmatpush1.bf16.msra.mxu0 0
        %1705 = vmatprep.subr.bf16.mxu0 0
        %1706 = vmatpush1.bf16.msra.mxu0 0
        %1707 = vmatprep.subr.bf16.mxu0 0
        %1708 = vmatpush1.bf16.msra.mxu0 0
        %1709 = vmatprep.subr.bf16.mxu0 0
        %1710 = vmatpush1.bf16.msra.mxu0 0
        %1711 = vmatprep.mubr.bf16.mxu0 0
        %1712 = vmatmul.mubr.bf16.gmra.mrb[0].mxu0 %v580
        %v1713 = vpop.f32.mrb[0].mxu0
        %v1714 = vadd.f32 %v1404, %v1713
        %v1715 = vpop.f32.mrb[0].mxu0
        %v1716 = vadd.f32 %v1408, %v1715
        %v1717 = vpop.f32.mrb[0].mxu0
        %v1718 = vpop.f32.mrb[0].mxu0
        %1719 = vdwg.mxu0
        %1720 = vmatprep.subr.bf16.mxu0 %v1110
        %1721 = vmatpush1.bf16.msra.mxu0 %v1109
        %1722 = vmatprep.subr.bf16.mxu0 %v1126
        %1723 = vmatpush1.bf16.msra.mxu0 %v1125
        %1724 = vmatprep.subr.bf16.mxu0 %v1142
        %1725 = vmatpush1.bf16.msra.mxu0 %v1141
        %1726 = vmatprep.subr.bf16.mxu0 %v1158
        %1727 = vmatpush1.bf16.msra.mxu0 %v1157
        %1728 = vmatprep.subr.bf16.mxu0 %v1174
        %1729 = vmatpush1.bf16.msra.mxu0 %v1173
        %1730 = vmatprep.subr.bf16.mxu0 %v1190
        %1731 = vmatpush1.bf16.msra.mxu0 %v1189
        %1732 = vmatprep.subr.bf16.mxu0 %v1206
        %1733 = vmatpush1.bf16.msra.mxu0 %v1205
        %1734 = vmatprep.subr.bf16.mxu0 %v1222
        %1735 = vmatpush1.bf16.msra.mxu0 %v1221
        %1736 = vmatprep.subr.bf16.mxu0 0
        %1737 = vmatpush1.bf16.msra.mxu0 0
        %1738 = vmatprep.subr.bf16.mxu0 0
        %1739 = vmatpush1.bf16.msra.mxu0 0
        %1740 = vmatprep.subr.bf16.mxu0 0
        %1741 = vmatpush1.bf16.msra.mxu0 0
        %1742 = vmatprep.subr.bf16.mxu0 0
        %1743 = vmatpush1.bf16.msra.mxu0 0
        %1744 = vmatprep.subr.bf16.mxu0 0
        %1745 = vmatpush1.bf16.msra.mxu0 0
        %1746 = vmatprep.subr.bf16.mxu0 0
        %1747 = vmatpush1.bf16.msra.mxu0 0
        %1748 = vmatprep.subr.bf16.mxu0 0
        %1749 = vmatpush1.bf16.msra.mxu0 0
        %1750 = vmatprep.subr.bf16.mxu0 0
        %1751 = vmatpush1.bf16.msra.mxu0 0
        %1752 = vmatprep.mubr.bf16.mxu0 0
        %1753 = vmatmul.mubr.bf16.gmra.mrb[0].mxu0 %v580
        %v1754 = vpop.f32.mrb[0].mxu0
        %v1755 = vadd.f32 %v1412, %v1754
        %v1756 = vpop.f32.mrb[0].mxu0
        %v1757 = vadd.f32 %v1416, %v1756
        %v1758 = vpop.f32.mrb[0].mxu0
        %v1759 = vpop.f32.mrb[0].mxu0
        %1760 = vdwg.mxu0
        %v1761 = vpack.c.bf16 %v1468, %v1468
        %v1762 = vpack.c.bf16 %v1470, %v1470
        %v1763 = vpack.c.bf16 %v1509, %v1509
        %v1764 = vpack.c.bf16 %v1511, %v1511
        %v1765 = vpack.c.bf16 %v1550, %v1550
        %v1766 = vpack.c.bf16 %v1552, %v1552
        %v1767 = vpack.c.bf16 %v1591, %v1591
        %v1768 = vpack.c.bf16 %v1593, %v1593
        %v1769 = vpack.c.bf16 %v1632, %v1632
        %v1770 = vpack.c.bf16 %v1634, %v1634
        %v1771 = vpack.c.bf16 %v1673, %v1673
        %v1772 = vpack.c.bf16 %v1675, %v1675
        %v1773 = vpack.c.bf16 %v1714, %v1714
        %v1774 = vpack.c.bf16 %v1716, %v1716
        %v1775 = vpack.c.bf16 %v1755, %v1755
        %v1776 = vpack.c.bf16 %v1757, %v1757
        %v1777 = vld [vmem:[%s5] sm:$0xff]
        %v1778 = vld [vmem:[%s5 + $0x8] sm:$0xff]
        %v1779 = vld [vmem:[%s5 + $0x10] sm:$0xff]
        %v1780 = vld [vmem:[%s5 + $0x18] sm:$0xff]
        %v1781 = vld [vmem:[%s5 + $0x20] sm:$0xff]
        %v1782 = vld [vmem:[%s5 + $0x28] sm:$0xff]
        %v1783 = vld [vmem:[%s5 + $0x30] sm:$0xff]
        %v1784 = vld [vmem:[%s5 + $0x38] sm:$0xff]
        %v1785 = vld [vmem:[%s5 + $0x40] sm:$0xff]
        %v1786 = vld [vmem:[%s5 + $0x48] sm:$0xff]
        %v1787 = vld [vmem:[%s5 + $0x50] sm:$0xff]
        %v1788 = vld [vmem:[%s5 + $0x58] sm:$0xff]
        %v1789 = vld [vmem:[%s5 + $0x60] sm:$0xff]
        %v1790 = vld [vmem:[%s5 + $0x68] sm:$0xff]
        %v1791 = vld [vmem:[%s5 + $0x70] sm:$0xff]
        %v1792 = vld [vmem:[%s5 + $0x78] sm:$0xff]
        %v1793 = vld [vmem:[%s5 + $0x80] sm:$0xff]
        %v1794 = vld [vmem:[%s5 + $0x88] sm:$0xff]
        %v1795 = vld [vmem:[%s5 + $0x90] sm:$0xff]
        %v1796 = vld [vmem:[%s5 + $0x98] sm:$0xff]
        %v1797 = vld [vmem:[%s5 + $0xa0] sm:$0xff]
        %v1798 = vld [vmem:[%s5 + $0xa8] sm:$0xff]
        %v1799 = vld [vmem:[%s5 + $0xb0] sm:$0xff]
        %v1800 = vld [vmem:[%s5 + $0xb8] sm:$0xff]
        %v1801 = vld [vmem:[%s5 + $0xc0] sm:$0xff]
        %v1802 = vld [vmem:[%s5 + $0xc8] sm:$0xff]
        %v1803 = vld [vmem:[%s5 + $0xd0] sm:$0xff]
        %v1804 = vld [vmem:[%s5 + $0xd8] sm:$0xff]
        %v1805 = vld [vmem:[%s5 + $0xe0] sm:$0xff]
        %v1806 = vld [vmem:[%s5 + $0xe8] sm:$0xff]
        %v1807 = vld [vmem:[%s5 + $0xf0] sm:$0xff]
        %v1808 = vld [vmem:[%s5 + $0xf8] sm:$0xff]
        %v1809 = vld [vmem:[%s5 + $0x100] sm:$0xff]
        %v1810 = vld [vmem:[%s5 + $0x108] sm:$0xff]
        %v1811 = vld [vmem:[%s5 + $0x110] sm:$0xff]
        %v1812 = vld [vmem:[%s5 + $0x118] sm:$0xff]
        %v1813 = vld [vmem:[%s5 + $0x120] sm:$0xff]
        %v1814 = vld [vmem:[%s5 + $0x128] sm:$0xff]
        %v1815 = vld [vmem:[%s5 + $0x130] sm:$0xff]
        %v1816 = vld [vmem:[%s5 + $0x138] sm:$0xff]
        %v1817 = vld [vmem:[%s5 + $0x140] sm:$0xff]
        %v1818 = vld [vmem:[%s5 + $0x148] sm:$0xff]
        %v1819 = vld [vmem:[%s5 + $0x150] sm:$0xff]
        %v1820 = vld [vmem:[%s5 + $0x158] sm:$0xff]
        %v1821 = vld [vmem:[%s5 + $0x160] sm:$0xff]
        %v1822 = vld [vmem:[%s5 + $0x168] sm:$0xff]
        %v1823 = vld [vmem:[%s5 + $0x170] sm:$0xff]
        %v1824 = vld [vmem:[%s5 + $0x178] sm:$0xff]
        %v1825 = vld [vmem:[%s5 + $0x180] sm:$0xff]
        %v1826 = vld [vmem:[%s5 + $0x188] sm:$0xff]
        %v1827 = vld [vmem:[%s5 + $0x190] sm:$0xff]
        %v1828 = vld [vmem:[%s5 + $0x198] sm:$0xff]
        %v1829 = vld [vmem:[%s5 + $0x1a0] sm:$0xff]
        %v1830 = vld [vmem:[%s5 + $0x1a8] sm:$0xff]
        %v1831 = vld [vmem:[%s5 + $0x1b0] sm:$0xff]
        %v1832 = vld [vmem:[%s5 + $0x1b8] sm:$0xff]
        %v1833 = vld [vmem:[%s5 + $0x1c0] sm:$0xff]
        %v1834 = vld [vmem:[%s5 + $0x1c8] sm:$0xff]
        %v1835 = vld [vmem:[%s5 + $0x1d0] sm:$0xff]
        %v1836 = vld [vmem:[%s5 + $0x1d8] sm:$0xff]
        %v1837 = vld [vmem:[%s5 + $0x1e0] sm:$0xff]
        %v1838 = vld [vmem:[%s5 + $0x1e8] sm:$0xff]
        %v1839 = vld [vmem:[%s5 + $0x1f0] sm:$0xff]
        %v1840 = vld [vmem:[%s5 + $0x1f8] sm:$0xff]
        %v1841 = vld [vmem:[%s5 + $0x200] sm:$0xff]
        %v1842 = vld [vmem:[%s5 + $0x208] sm:$0xff]
        %v1843 = vld [vmem:[%s5 + $0x210] sm:$0xff]
        %v1844 = vld [vmem:[%s5 + $0x218] sm:$0xff]
        %v1845 = vld [vmem:[%s5 + $0x220] sm:$0xff]
        %v1846 = vld [vmem:[%s5 + $0x228] sm:$0xff]
        %v1847 = vld [vmem:[%s5 + $0x230] sm:$0xff]
        %v1848 = vld [vmem:[%s5 + $0x238] sm:$0xff]
        %v1849 = vld [vmem:[%s5 + $0x240] sm:$0xff]
        %v1850 = vld [vmem:[%s5 + $0x248] sm:$0xff]
        %v1851 = vld [vmem:[%s5 + $0x250] sm:$0xff]
        %v1852 = vld [vmem:[%s5 + $0x258] sm:$0xff]
        %v1853 = vld [vmem:[%s5 + $0x260] sm:$0xff]
        %v1854 = vld [vmem:[%s5 + $0x268] sm:$0xff]
        %v1855 = vld [vmem:[%s5 + $0x270] sm:$0xff]
        %v1856 = vld [vmem:[%s5 + $0x278] sm:$0xff]
        %v1857 = vld [vmem:[%s5 + $0x280] sm:$0xff]
        %v1858 = vld [vmem:[%s5 + $0x288] sm:$0xff]
        %v1859 = vld [vmem:[%s5 + $0x290] sm:$0xff]
        %v1860 = vld [vmem:[%s5 + $0x298] sm:$0xff]
        %v1861 = vld [vmem:[%s5 + $0x2a0] sm:$0xff]
        %v1862 = vld [vmem:[%s5 + $0x2a8] sm:$0xff]
        %v1863 = vld [vmem:[%s5 + $0x2b0] sm:$0xff]
        %v1864 = vld [vmem:[%s5 + $0x2b8] sm:$0xff]
        %v1865 = vld [vmem:[%s5 + $0x2c0] sm:$0xff]
        %v1866 = vld [vmem:[%s5 + $0x2c8] sm:$0xff]
        %v1867 = vld [vmem:[%s5 + $0x2d0] sm:$0xff]
        %v1868 = vld [vmem:[%s5 + $0x2d8] sm:$0xff]
        %v1869 = vld [vmem:[%s5 + $0x2e0] sm:$0xff]
        %v1870 = vld [vmem:[%s5 + $0x2e8] sm:$0xff]
        %v1871 = vld [vmem:[%s5 + $0x2f0] sm:$0xff]
        %v1872 = vld [vmem:[%s5 + $0x2f8] sm:$0xff]
        %v1873 = vld [vmem:[%s5 + $0x300] sm:$0xff]
        %v1874 = vld [vmem:[%s5 + $0x308] sm:$0xff]
        %v1875 = vld [vmem:[%s5 + $0x310] sm:$0xff]
        %v1876 = vld [vmem:[%s5 + $0x318] sm:$0xff]
        %v1877 = vld [vmem:[%s5 + $0x320] sm:$0xff]
        %v1878 = vld [vmem:[%s5 + $0x328] sm:$0xff]
        %v1879 = vld [vmem:[%s5 + $0x330] sm:$0xff]
        %v1880 = vld [vmem:[%s5 + $0x338] sm:$0xff]
        %v1881 = vld [vmem:[%s5 + $0x340] sm:$0xff]
        %v1882 = vld [vmem:[%s5 + $0x348] sm:$0xff]
        %v1883 = vld [vmem:[%s5 + $0x350] sm:$0xff]
        %v1884 = vld [vmem:[%s5 + $0x358] sm:$0xff]
        %v1885 = vld [vmem:[%s5 + $0x360] sm:$0xff]
        %v1886 = vld [vmem:[%s5 + $0x368] sm:$0xff]
        %v1887 = vld [vmem:[%s5 + $0x370] sm:$0xff]
        %v1888 = vld [vmem:[%s5 + $0x378] sm:$0xff]
        %v1889 = vld [vmem:[%s5 + $0x380] sm:$0xff]
        %v1890 = vld [vmem:[%s5 + $0x388] sm:$0xff]
        %v1891 = vld [vmem:[%s5 + $0x390] sm:$0xff]
        %v1892 = vld [vmem:[%s5 + $0x398] sm:$0xff]
        %v1893 = vld [vmem:[%s5 + $0x3a0] sm:$0xff]
        %v1894 = vld [vmem:[%s5 + $0x3a8] sm:$0xff]
        %v1895 = vld [vmem:[%s5 + $0x3b0] sm:$0xff]
        %v1896 = vld [vmem:[%s5 + $0x3b8] sm:$0xff]
        %v1897 = vld [vmem:[%s5 + $0x3c0] sm:$0xff]
        %v1898 = vld [vmem:[%s5 + $0x3c8] sm:$0xff]
        %v1899 = vld [vmem:[%s5 + $0x3d0] sm:$0xff]
        %v1900 = vld [vmem:[%s5 + $0x3d8] sm:$0xff]
        %v1901 = vld [vmem:[%s5 + $0x3e0] sm:$0xff]
        %v1902 = vld [vmem:[%s5 + $0x3e8] sm:$0xff]
        %v1903 = vld [vmem:[%s5 + $0x3f0] sm:$0xff]
        %v1904 = vld [vmem:[%s5 + $0x3f8] sm:$0xff]
        %v1905 = vld [vmem:[%s5 + $0x400] sm:$0xff]
        %v1906 = vld [vmem:[%s5 + $0x408] sm:$0xff]
        %v1907 = vld [vmem:[%s5 + $0x410] sm:$0xff]
        %v1908 = vld [vmem:[%s5 + $0x418] sm:$0xff]
        %v1909 = vld [vmem:[%s5 + $0x420] sm:$0xff]
        %v1910 = vld [vmem:[%s5 + $0x428] sm:$0xff]
        %v1911 = vld [vmem:[%s5 + $0x430] sm:$0xff]
        %v1912 = vld [vmem:[%s5 + $0x438] sm:$0xff]
        %v1913 = vld [vmem:[%s5 + $0x440] sm:$0xff]
        %v1914 = vld [vmem:[%s5 + $0x448] sm:$0xff]
        %v1915 = vld [vmem:[%s5 + $0x450] sm:$0xff]
        %v1916 = vld [vmem:[%s5 + $0x458] sm:$0xff]
        %v1917 = vld [vmem:[%s5 + $0x460] sm:$0xff]
        %v1918 = vld [vmem:[%s5 + $0x468] sm:$0xff]
        %v1919 = vld [vmem:[%s5 + $0x470] sm:$0xff]
        %v1920 = vld [vmem:[%s5 + $0x478] sm:$0xff]
        %v1921 = vld [vmem:[%s5 + $0x480] sm:$0xff]
        %v1922 = vld [vmem:[%s5 + $0x488] sm:$0xff]
        %v1923 = vld [vmem:[%s5 + $0x490] sm:$0xff]
        %v1924 = vld [vmem:[%s5 + $0x498] sm:$0xff]
        %v1925 = vld [vmem:[%s5 + $0x4a0] sm:$0xff]
        %v1926 = vld [vmem:[%s5 + $0x4a8] sm:$0xff]
        %v1927 = vld [vmem:[%s5 + $0x4b0] sm:$0xff]
        %v1928 = vld [vmem:[%s5 + $0x4b8] sm:$0xff]
        %v1929 = vld [vmem:[%s5 + $0x4c0] sm:$0xff]
        %v1930 = vld [vmem:[%s5 + $0x4c8] sm:$0xff]
        %v1931 = vld [vmem:[%s5 + $0x4d0] sm:$0xff]
        %v1932 = vld [vmem:[%s5 + $0x4d8] sm:$0xff]
        %v1933 = vld [vmem:[%s5 + $0x4e0] sm:$0xff]
        %v1934 = vld [vmem:[%s5 + $0x4e8] sm:$0xff]
        %v1935 = vld [vmem:[%s5 + $0x4f0] sm:$0xff]
        %v1936 = vld [vmem:[%s5 + $0x4f8] sm:$0xff]
        %v1937 = vld [vmem:[%s5 + $0x500] sm:$0xff]
        %v1938 = vld [vmem:[%s5 + $0x508] sm:$0xff]
        %v1939 = vld [vmem:[%s5 + $0x510] sm:$0xff]
        %v1940 = vld [vmem:[%s5 + $0x518] sm:$0xff]
        %v1941 = vld [vmem:[%s5 + $0x520] sm:$0xff]
        %v1942 = vld [vmem:[%s5 + $0x528] sm:$0xff]
        %v1943 = vld [vmem:[%s5 + $0x530] sm:$0xff]
        %v1944 = vld [vmem:[%s5 + $0x538] sm:$0xff]
        %v1945 = vld [vmem:[%s5 + $0x540] sm:$0xff]
        %v1946 = vld [vmem:[%s5 + $0x548] sm:$0xff]
        %v1947 = vld [vmem:[%s5 + $0x550] sm:$0xff]
        %v1948 = vld [vmem:[%s5 + $0x558] sm:$0xff]
        %v1949 = vld [vmem:[%s5 + $0x560] sm:$0xff]
        %v1950 = vld [vmem:[%s5 + $0x568] sm:$0xff]
        %v1951 = vld [vmem:[%s5 + $0x570] sm:$0xff]
        %v1952 = vld [vmem:[%s5 + $0x578] sm:$0xff]
        %v1953 = vld [vmem:[%s5 + $0x580] sm:$0xff]
        %v1954 = vld [vmem:[%s5 + $0x588] sm:$0xff]
        %v1955 = vld [vmem:[%s5 + $0x590] sm:$0xff]
        %v1956 = vld [vmem:[%s5 + $0x598] sm:$0xff]
        %v1957 = vld [vmem:[%s5 + $0x5a0] sm:$0xff]
        %v1958 = vld [vmem:[%s5 + $0x5a8] sm:$0xff]
        %v1959 = vld [vmem:[%s5 + $0x5b0] sm:$0xff]
        %v1960 = vld [vmem:[%s5 + $0x5b8] sm:$0xff]
        %v1961 = vld [vmem:[%s5 + $0x5c0] sm:$0xff]
        %v1962 = vld [vmem:[%s5 + $0x5c8] sm:$0xff]
        %v1963 = vld [vmem:[%s5 + $0x5d0] sm:$0xff]
        %v1964 = vld [vmem:[%s5 + $0x5d8] sm:$0xff]
        %v1965 = vld [vmem:[%s5 + $0x5e0] sm:$0xff]
        %v1966 = vld [vmem:[%s5 + $0x5e8] sm:$0xff]
        %v1967 = vld [vmem:[%s5 + $0x5f0] sm:$0xff]
        %v1968 = vld [vmem:[%s5 + $0x5f8] sm:$0xff]
        %v1969 = vld [vmem:[%s5 + $0x600] sm:$0xff]
        %v1970 = vld [vmem:[%s5 + $0x608] sm:$0xff]
        %v1971 = vld [vmem:[%s5 + $0x610] sm:$0xff]
        %v1972 = vld [vmem:[%s5 + $0x618] sm:$0xff]
        %v1973 = vld [vmem:[%s5 + $0x620] sm:$0xff]
        %v1974 = vld [vmem:[%s5 + $0x628] sm:$0xff]
        %v1975 = vld [vmem:[%s5 + $0x630] sm:$0xff]
        %v1976 = vld [vmem:[%s5 + $0x638] sm:$0xff]
        %v1977 = vld [vmem:[%s5 + $0x640] sm:$0xff]
        %v1978 = vld [vmem:[%s5 + $0x648] sm:$0xff]
        %v1979 = vld [vmem:[%s5 + $0x650] sm:$0xff]
        %v1980 = vld [vmem:[%s5 + $0x658] sm:$0xff]
        %v1981 = vld [vmem:[%s5 + $0x660] sm:$0xff]
        %v1982 = vld [vmem:[%s5 + $0x668] sm:$0xff]
        %v1983 = vld [vmem:[%s5 + $0x670] sm:$0xff]
        %v1984 = vld [vmem:[%s5 + $0x678] sm:$0xff]
        %v1985 = vld [vmem:[%s5 + $0x680] sm:$0xff]
        %v1986 = vld [vmem:[%s5 + $0x688] sm:$0xff]
        %v1987 = vld [vmem:[%s5 + $0x690] sm:$0xff]
        %v1988 = vld [vmem:[%s5 + $0x698] sm:$0xff]
        %v1989 = vld [vmem:[%s5 + $0x6a0] sm:$0xff]
        %v1990 = vld [vmem:[%s5 + $0x6a8] sm:$0xff]
        %v1991 = vld [vmem:[%s5 + $0x6b0] sm:$0xff]
        %v1992 = vld [vmem:[%s5 + $0x6b8] sm:$0xff]
        %v1993 = vld [vmem:[%s5 + $0x6c0] sm:$0xff]
        %v1994 = vld [vmem:[%s5 + $0x6c8] sm:$0xff]
        %v1995 = vld [vmem:[%s5 + $0x6d0] sm:$0xff]
        %v1996 = vld [vmem:[%s5 + $0x6d8] sm:$0xff]
        %v1997 = vld [vmem:[%s5 + $0x6e0] sm:$0xff]
        %v1998 = vld [vmem:[%s5 + $0x6e8] sm:$0xff]
        %v1999 = vld [vmem:[%s5 + $0x6f0] sm:$0xff]
        %v2000 = vld [vmem:[%s5 + $0x6f8] sm:$0xff]
        %v2001 = vld [vmem:[%s5 + $0x700] sm:$0xff]
        %v2002 = vld [vmem:[%s5 + $0x708] sm:$0xff]
        %v2003 = vld [vmem:[%s5 + $0x710] sm:$0xff]
        %v2004 = vld [vmem:[%s5 + $0x718] sm:$0xff]
        %v2005 = vld [vmem:[%s5 + $0x720] sm:$0xff]
        %v2006 = vld [vmem:[%s5 + $0x728] sm:$0xff]
        %v2007 = vld [vmem:[%s5 + $0x730] sm:$0xff]
        %v2008 = vld [vmem:[%s5 + $0x738] sm:$0xff]
        %v2009 = vld [vmem:[%s5 + $0x740] sm:$0xff]
        %v2010 = vld [vmem:[%s5 + $0x748] sm:$0xff]
        %v2011 = vld [vmem:[%s5 + $0x750] sm:$0xff]
        %v2012 = vld [vmem:[%s5 + $0x758] sm:$0xff]
        %v2013 = vld [vmem:[%s5 + $0x760] sm:$0xff]
        %v2014 = vld [vmem:[%s5 + $0x768] sm:$0xff]
        %v2015 = vld [vmem:[%s5 + $0x770] sm:$0xff]
        %v2016 = vld [vmem:[%s5 + $0x778] sm:$0xff]
        %v2017 = vld [vmem:[%s5 + $0x780] sm:$0xff]
        %v2018 = vld [vmem:[%s5 + $0x788] sm:$0xff]
        %v2019 = vld [vmem:[%s5 + $0x790] sm:$0xff]
        %v2020 = vld [vmem:[%s5 + $0x798] sm:$0xff]
        %v2021 = vld [vmem:[%s5 + $0x7a0] sm:$0xff]
        %v2022 = vld [vmem:[%s5 + $0x7a8] sm:$0xff]
        %v2023 = vld [vmem:[%s5 + $0x7b0] sm:$0xff]
        %v2024 = vld [vmem:[%s5 + $0x7b8] sm:$0xff]
        %v2025 = vld [vmem:[%s5 + $0x7c0] sm:$0xff]
        %v2026 = vld [vmem:[%s5 + $0x7c8] sm:$0xff]
        %v2027 = vld [vmem:[%s5 + $0x7d0] sm:$0xff]
        %v2028 = vld [vmem:[%s5 + $0x7d8] sm:$0xff]
        %v2029 = vld [vmem:[%s5 + $0x7e0] sm:$0xff]
        %v2030 = vld [vmem:[%s5 + $0x7e8] sm:$0xff]
        %v2031 = vld [vmem:[%s5 + $0x7f0] sm:$0xff]
        %v2032 = vld [vmem:[%s5 + $0x7f8] sm:$0xff]
        %v2033 = vld [vmem:[%s6] sm:$0x3]
        %v2290 = vunpack.c.l.b16 %v1777
        %v2291 = vunpack.c.h.b16 %v1777
        %v2292 = vunpack.c.l.b16 %v1778
        %v2293 = vunpack.c.h.b16 %v1778
        %v2294 = vunpack.c.l.b16 %v1779
        %v2295 = vunpack.c.h.b16 %v1779
        %v2296 = vunpack.c.l.b16 %v1780
        %v2297 = vunpack.c.h.b16 %v1780
        %v2298 = vunpack.c.l.b16 %v1781
        %v2299 = vunpack.c.h.b16 %v1781
        %v2300 = vunpack.c.l.b16 %v1782
        %v2301 = vunpack.c.h.b16 %v1782
        %v2302 = vunpack.c.l.b16 %v1783
        %v2303 = vunpack.c.h.b16 %v1783
        %v2304 = vunpack.c.l.b16 %v1784
        %v2305 = vunpack.c.h.b16 %v1784
        %v2306 = vunpack.c.l.b16 %v1785
        %v2307 = vunpack.c.h.b16 %v1785
        %v2308 = vunpack.c.l.b16 %v1786
        %v2309 = vunpack.c.h.b16 %v1786
        %v2310 = vunpack.c.l.b16 %v1787
        %v2311 = vunpack.c.h.b16 %v1787
        %v2312 = vunpack.c.l.b16 %v1788
        %v2313 = vunpack.c.h.b16 %v1788
        %v2314 = vunpack.c.l.b16 %v1789
        %v2315 = vunpack.c.h.b16 %v1789
        %v2316 = vunpack.c.l.b16 %v1790
        %v2317 = vunpack.c.h.b16 %v1790
        %v2318 = vunpack.c.l.b16 %v1791
        %v2319 = vunpack.c.h.b16 %v1791
        %v2320 = vunpack.c.l.b16 %v1792
        %v2321 = vunpack.c.h.b16 %v1792
        %v2322 = vunpack.c.l.b16 %v1793
        %v2323 = vunpack.c.h.b16 %v1793
        %v2324 = vunpack.c.l.b16 %v1794
        %v2325 = vunpack.c.h.b16 %v1794
        %v2326 = vunpack.c.l.b16 %v1795
        %v2327 = vunpack.c.h.b16 %v1795
        %v2328 = vunpack.c.l.b16 %v1796
        %v2329 = vunpack.c.h.b16 %v1796
        %v2330 = vunpack.c.l.b16 %v1797
        %v2331 = vunpack.c.h.b16 %v1797
        %v2332 = vunpack.c.l.b16 %v1798
        %v2333 = vunpack.c.h.b16 %v1798
        %v2334 = vunpack.c.l.b16 %v1799
        %v2335 = vunpack.c.h.b16 %v1799
        %v2336 = vunpack.c.l.b16 %v1800
        %v2337 = vunpack.c.h.b16 %v1800
        %v2338 = vunpack.c.l.b16 %v1801
        %v2339 = vunpack.c.h.b16 %v1801
        %v2340 = vunpack.c.l.b16 %v1802
        %v2341 = vunpack.c.h.b16 %v1802
        %v2342 = vunpack.c.l.b16 %v1803
        %v2343 = vunpack.c.h.b16 %v1803
        %v2344 = vunpack.c.l.b16 %v1804
        %v2345 = vunpack.c.h.b16 %v1804
        %v2346 = vunpack.c.l.b16 %v1805
        %v2347 = vunpack.c.h.b16 %v1805
        %v2348 = vunpack.c.l.b16 %v1806
        %v2349 = vunpack.c.h.b16 %v1806
        %v2350 = vunpack.c.l.b16 %v1807
        %v2351 = vunpack.c.h.b16 %v1807
        %v2352 = vunpack.c.l.b16 %v1808
        %v2353 = vunpack.c.h.b16 %v1808
        %v2354 = vunpack.c.l.b16 %v1809
        %v2355 = vunpack.c.h.b16 %v1809
        %v2356 = vunpack.c.l.b16 %v1810
        %v2357 = vunpack.c.h.b16 %v1810
        %v2358 = vunpack.c.l.b16 %v1811
        %v2359 = vunpack.c.h.b16 %v1811
        %v2360 = vunpack.c.l.b16 %v1812
        %v2361 = vunpack.c.h.b16 %v1812
        %v2362 = vunpack.c.l.b16 %v1813
        %v2363 = vunpack.c.h.b16 %v1813
        %v2364 = vunpack.c.l.b16 %v1814
        %v2365 = vunpack.c.h.b16 %v1814
        %v2366 = vunpack.c.l.b16 %v1815
        %v2367 = vunpack.c.h.b16 %v1815
        %v2368 = vunpack.c.l.b16 %v1816
        %v2369 = vunpack.c.h.b16 %v1816
        %v2370 = vunpack.c.l.b16 %v1817
        %v2371 = vunpack.c.h.b16 %v1817
        %v2372 = vunpack.c.l.b16 %v1818
        %v2373 = vunpack.c.h.b16 %v1818
        %v2374 = vunpack.c.l.b16 %v1819
        %v2375 = vunpack.c.h.b16 %v1819
        %v2376 = vunpack.c.l.b16 %v1820
        %v2377 = vunpack.c.h.b16 %v1820
        %v2378 = vunpack.c.l.b16 %v1821
        %v2379 = vunpack.c.h.b16 %v1821
        %v2380 = vunpack.c.l.b16 %v1822
        %v2381 = vunpack.c.h.b16 %v1822
        %v2382 = vunpack.c.l.b16 %v1823
        %v2383 = vunpack.c.h.b16 %v1823
        %v2384 = vunpack.c.l.b16 %v1824
        %v2385 = vunpack.c.h.b16 %v1824
        %v2386 = vunpack.c.l.b16 %v1825
        %v2387 = vunpack.c.h.b16 %v1825
        %v2388 = vunpack.c.l.b16 %v1826
        %v2389 = vunpack.c.h.b16 %v1826
        %v2390 = vunpack.c.l.b16 %v1827
        %v2391 = vunpack.c.h.b16 %v1827
        %v2392 = vunpack.c.l.b16 %v1828
        %v2393 = vunpack.c.h.b16 %v1828
        %v2394 = vunpack.c.l.b16 %v1829
        %v2395 = vunpack.c.h.b16 %v1829
        %v2396 = vunpack.c.l.b16 %v1830
        %v2397 = vunpack.c.h.b16 %v1830
        %v2398 = vunpack.c.l.b16 %v1831
        %v2399 = vunpack.c.h.b16 %v1831
        %v2400 = vunpack.c.l.b16 %v1832
        %v2401 = vunpack.c.h.b16 %v1832
        %v2402 = vunpack.c.l.b16 %v1833
        %v2403 = vunpack.c.h.b16 %v1833
        %v2404 = vunpack.c.l.b16 %v1834
        %v2405 = vunpack.c.h.b16 %v1834
        %v2406 = vunpack.c.l.b16 %v1835
        %v2407 = vunpack.c.h.b16 %v1835
        %v2408 = vunpack.c.l.b16 %v1836
        %v2409 = vunpack.c.h.b16 %v1836
        %v2410 = vunpack.c.l.b16 %v1837
        %v2411 = vunpack.c.h.b16 %v1837
        %v2412 = vunpack.c.l.b16 %v1838
        %v2413 = vunpack.c.h.b16 %v1838
        %v2414 = vunpack.c.l.b16 %v1839
        %v2415 = vunpack.c.h.b16 %v1839
        %v2416 = vunpack.c.l.b16 %v1840
        %v2417 = vunpack.c.h.b16 %v1840
        %v2418 = vunpack.c.l.b16 %v1841
        %v2419 = vunpack.c.h.b16 %v1841
        %v2420 = vunpack.c.l.b16 %v1842
        %v2421 = vunpack.c.h.b16 %v1842
        %v2422 = vunpack.c.l.b16 %v1843
        %v2423 = vunpack.c.h.b16 %v1843
        %v2424 = vunpack.c.l.b16 %v1844
        %v2425 = vunpack.c.h.b16 %v1844
        %v2426 = vunpack.c.l.b16 %v1845
        %v2427 = vunpack.c.h.b16 %v1845
        %v2428 = vunpack.c.l.b16 %v1846
        %v2429 = vunpack.c.h.b16 %v1846
        %v2430 = vunpack.c.l.b16 %v1847
        %v2431 = vunpack.c.h.b16 %v1847
        %v2432 = vunpack.c.l.b16 %v1848
        %v2433 = vunpack.c.h.b16 %v1848
        %v2434 = vunpack.c.l.b16 %v1849
        %v2435 = vunpack.c.h.b16 %v1849
        %v2436 = vunpack.c.l.b16 %v1850
        %v2437 = vunpack.c.h.b16 %v1850
        %v2438 = vunpack.c.l.b16 %v1851
        %v2439 = vunpack.c.h.b16 %v1851
        %v2440 = vunpack.c.l.b16 %v1852
        %v2441 = vunpack.c.h.b16 %v1852
        %v2442 = vunpack.c.l.b16 %v1853
        %v2443 = vunpack.c.h.b16 %v1853
        %v2444 = vunpack.c.l.b16 %v1854
        %v2445 = vunpack.c.h.b16 %v1854
        %v2446 = vunpack.c.l.b16 %v1855
        %v2447 = vunpack.c.h.b16 %v1855
        %v2448 = vunpack.c.l.b16 %v1856
        %v2449 = vunpack.c.h.b16 %v1856
        %v2450 = vunpack.c.l.b16 %v1857
        %v2451 = vunpack.c.h.b16 %v1857
        %v2452 = vunpack.c.l.b16 %v1858
        %v2453 = vunpack.c.h.b16 %v1858
        %v2454 = vunpack.c.l.b16 %v1859
        %v2455 = vunpack.c.h.b16 %v1859
        %v2456 = vunpack.c.l.b16 %v1860
        %v2457 = vunpack.c.h.b16 %v1860
        %v2458 = vunpack.c.l.b16 %v1861
        %v2459 = vunpack.c.h.b16 %v1861
        %v2460 = vunpack.c.l.b16 %v1862
        %v2461 = vunpack.c.h.b16 %v1862
        %v2462 = vunpack.c.l.b16 %v1863
        %v2463 = vunpack.c.h.b16 %v1863
        %v2464 = vunpack.c.l.b16 %v1864
        %v2465 = vunpack.c.h.b16 %v1864
        %v2466 = vunpack.c.l.b16 %v1865
        %v2467 = vunpack.c.h.b16 %v1865
        %v2468 = vunpack.c.l.b16 %v1866
        %v2469 = vunpack.c.h.b16 %v1866
        %v2470 = vunpack.c.l.b16 %v1867
        %v2471 = vunpack.c.h.b16 %v1867
        %v2472 = vunpack.c.l.b16 %v1868
        %v2473 = vunpack.c.h.b16 %v1868
        %v2474 = vunpack.c.l.b16 %v1869
        %v2475 = vunpack.c.h.b16 %v1869
        %v2476 = vunpack.c.l.b16 %v1870
        %v2477 = vunpack.c.h.b16 %v1870
        %v2478 = vunpack.c.l.b16 %v1871
        %v2479 = vunpack.c.h.b16 %v1871
        %v2480 = vunpack.c.l.b16 %v1872
        %v2481 = vunpack.c.h.b16 %v1872
        %v2482 = vunpack.c.l.b16 %v1873
        %v2483 = vunpack.c.h.b16 %v1873
        %v2484 = vunpack.c.l.b16 %v1874
        %v2485 = vunpack.c.h.b16 %v1874
        %v2486 = vunpack.c.l.b16 %v1875
        %v2487 = vunpack.c.h.b16 %v1875
        %v2488 = vunpack.c.l.b16 %v1876
        %v2489 = vunpack.c.h.b16 %v1876
        %v2490 = vunpack.c.l.b16 %v1877
        %v2491 = vunpack.c.h.b16 %v1877
        %v2492 = vunpack.c.l.b16 %v1878
        %v2493 = vunpack.c.h.b16 %v1878
        %v2494 = vunpack.c.l.b16 %v1879
        %v2495 = vunpack.c.h.b16 %v1879
        %v2496 = vunpack.c.l.b16 %v1880
        %v2497 = vunpack.c.h.b16 %v1880
        %v2498 = vunpack.c.l.b16 %v1881
        %v2499 = vunpack.c.h.b16 %v1881
        %v2500 = vunpack.c.l.b16 %v1882
        %v2501 = vunpack.c.h.b16 %v1882
        %v2502 = vunpack.c.l.b16 %v1883
        %v2503 = vunpack.c.h.b16 %v1883
        %v2504 = vunpack.c.l.b16 %v1884
        %v2505 = vunpack.c.h.b16 %v1884
        %v2506 = vunpack.c.l.b16 %v1885
        %v2507 = vunpack.c.h.b16 %v1885
        %v2508 = vunpack.c.l.b16 %v1886
        %v2509 = vunpack.c.h.b16 %v1886
        %v2510 = vunpack.c.l.b16 %v1887
        %v2511 = vunpack.c.h.b16 %v1887
        %v2512 = vunpack.c.l.b16 %v1888
        %v2513 = vunpack.c.h.b16 %v1888
        %v2514 = vunpack.c.l.b16 %v1889
        %v2515 = vunpack.c.h.b16 %v1889
        %v2516 = vunpack.c.l.b16 %v1890
        %v2517 = vunpack.c.h.b16 %v1890
        %v2518 = vunpack.c.l.b16 %v1891
        %v2519 = vunpack.c.h.b16 %v1891
        %v2520 = vunpack.c.l.b16 %v1892
        %v2521 = vunpack.c.h.b16 %v1892
        %v2522 = vunpack.c.l.b16 %v1893
        %v2523 = vunpack.c.h.b16 %v1893
        %v2524 = vunpack.c.l.b16 %v1894
        %v2525 = vunpack.c.h.b16 %v1894
        %v2526 = vunpack.c.l.b16 %v1895
        %v2527 = vunpack.c.h.b16 %v1895
        %v2528 = vunpack.c.l.b16 %v1896
        %v2529 = vunpack.c.h.b16 %v1896
        %v2530 = vunpack.c.l.b16 %v1897
        %v2531 = vunpack.c.h.b16 %v1897
        %v2532 = vunpack.c.l.b16 %v1898
        %v2533 = vunpack.c.h.b16 %v1898
        %v2534 = vunpack.c.l.b16 %v1899
        %v2535 = vunpack.c.h.b16 %v1899
        %v2536 = vunpack.c.l.b16 %v1900
        %v2537 = vunpack.c.h.b16 %v1900
        %v2538 = vunpack.c.l.b16 %v1901
        %v2539 = vunpack.c.h.b16 %v1901
        %v2540 = vunpack.c.l.b16 %v1902
        %v2541 = vunpack.c.h.b16 %v1902
        %v2542 = vunpack.c.l.b16 %v1903
        %v2543 = vunpack.c.h.b16 %v1903
        %v2544 = vunpack.c.l.b16 %v1904
        %v2545 = vunpack.c.h.b16 %v1904
        %v2546 = vunpack.c.l.b16 %v1905
        %v2547 = vunpack.c.h.b16 %v1905
        %v2548 = vunpack.c.l.b16 %v1906
        %v2549 = vunpack.c.h.b16 %v1906
        %v2550 = vunpack.c.l.b16 %v1907
        %v2551 = vunpack.c.h.b16 %v1907
        %v2552 = vunpack.c.l.b16 %v1908
        %v2553 = vunpack.c.h.b16 %v1908
        %v2554 = vunpack.c.l.b16 %v1909
        %v2555 = vunpack.c.h.b16 %v1909
        %v2556 = vunpack.c.l.b16 %v1910
        %v2557 = vunpack.c.h.b16 %v1910
        %v2558 = vunpack.c.l.b16 %v1911
        %v2559 = vunpack.c.h.b16 %v1911
        %v2560 = vunpack.c.l.b16 %v1912
        %v2561 = vunpack.c.h.b16 %v1912
        %v2562 = vunpack.c.l.b16 %v1913
        %v2563 = vunpack.c.h.b16 %v1913
        %v2564 = vunpack.c.l.b16 %v1914
        %v2565 = vunpack.c.h.b16 %v1914
        %v2566 = vunpack.c.l.b16 %v1915
        %v2567 = vunpack.c.h.b16 %v1915
        %v2568 = vunpack.c.l.b16 %v1916
        %v2569 = vunpack.c.h.b16 %v1916
        %v2570 = vunpack.c.l.b16 %v1917
        %v2571 = vunpack.c.h.b16 %v1917
        %v2572 = vunpack.c.l.b16 %v1918
        %v2573 = vunpack.c.h.b16 %v1918
        %v2574 = vunpack.c.l.b16 %v1919
        %v2575 = vunpack.c.h.b16 %v1919
        %v2576 = vunpack.c.l.b16 %v1920
        %v2577 = vunpack.c.h.b16 %v1920
        %v2578 = vunpack.c.l.b16 %v1921
        %v2579 = vunpack.c.h.b16 %v1921
        %v2580 = vunpack.c.l.b16 %v1922
        %v2581 = vunpack.c.h.b16 %v1922
        %v2582 = vunpack.c.l.b16 %v1923
        %v2583 = vunpack.c.h.b16 %v1923
        %v2584 = vunpack.c.l.b16 %v1924
        %v2585 = vunpack.c.h.b16 %v1924
        %v2586 = vunpack.c.l.b16 %v1925
        %v2587 = vunpack.c.h.b16 %v1925
        %v2588 = vunpack.c.l.b16 %v1926
        %v2589 = vunpack.c.h.b16 %v1926
        %v2590 = vunpack.c.l.b16 %v1927
        %v2591 = vunpack.c.h.b16 %v1927
        %v2592 = vunpack.c.l.b16 %v1928
        %v2593 = vunpack.c.h.b16 %v1928
        %v2594 = vunpack.c.l.b16 %v1929
        %v2595 = vunpack.c.h.b16 %v1929
        %v2596 = vunpack.c.l.b16 %v1930
        %v2597 = vunpack.c.h.b16 %v1930
        %v2598 = vunpack.c.l.b16 %v1931
        %v2599 = vunpack.c.h.b16 %v1931
        %v2600 = vunpack.c.l.b16 %v1932
        %v2601 = vunpack.c.h.b16 %v1932
        %v2602 = vunpack.c.l.b16 %v1933
        %v2603 = vunpack.c.h.b16 %v1933
        %v2604 = vunpack.c.l.b16 %v1934
        %v2605 = vunpack.c.h.b16 %v1934
        %v2606 = vunpack.c.l.b16 %v1935
        %v2607 = vunpack.c.h.b16 %v1935
        %v2608 = vunpack.c.l.b16 %v1936
        %v2609 = vunpack.c.h.b16 %v1936
        %v2610 = vunpack.c.l.b16 %v1937
        %v2611 = vunpack.c.h.b16 %v1937
        %v2612 = vunpack.c.l.b16 %v1938
        %v2613 = vunpack.c.h.b16 %v1938
        %v2614 = vunpack.c.l.b16 %v1939
        %v2615 = vunpack.c.h.b16 %v1939
        %v2616 = vunpack.c.l.b16 %v1940
        %v2617 = vunpack.c.h.b16 %v1940
        %v2618 = vunpack.c.l.b16 %v1941
        %v2619 = vunpack.c.h.b16 %v1941
        %v2620 = vunpack.c.l.b16 %v1942
        %v2621 = vunpack.c.h.b16 %v1942
        %v2622 = vunpack.c.l.b16 %v1943
        %v2623 = vunpack.c.h.b16 %v1943
        %v2624 = vunpack.c.l.b16 %v1944
        %v2625 = vunpack.c.h.b16 %v1944
        %v2626 = vunpack.c.l.b16 %v1945
        %v2627 = vunpack.c.h.b16 %v1945
        %v2628 = vunpack.c.l.b16 %v1946
        %v2629 = vunpack.c.h.b16 %v1946
        %v2630 = vunpack.c.l.b16 %v1947
        %v2631 = vunpack.c.h.b16 %v1947
        %v2632 = vunpack.c.l.b16 %v1948
        %v2633 = vunpack.c.h.b16 %v1948
        %v2634 = vunpack.c.l.b16 %v1949
        %v2635 = vunpack.c.h.b16 %v1949
        %v2636 = vunpack.c.l.b16 %v1950
        %v2637 = vunpack.c.h.b16 %v1950
        %v2638 = vunpack.c.l.b16 %v1951
        %v2639 = vunpack.c.h.b16 %v1951
        %v2640 = vunpack.c.l.b16 %v1952
        %v2641 = vunpack.c.h.b16 %v1952
        %v2642 = vunpack.c.l.b16 %v1953
        %v2643 = vunpack.c.h.b16 %v1953
        %v2644 = vunpack.c.l.b16 %v1954
        %v2645 = vunpack.c.h.b16 %v1954
        %v2646 = vunpack.c.l.b16 %v1955
        %v2647 = vunpack.c.h.b16 %v1955
        %v2648 = vunpack.c.l.b16 %v1956
        %v2649 = vunpack.c.h.b16 %v1956
        %v2650 = vunpack.c.l.b16 %v1957
        %v2651 = vunpack.c.h.b16 %v1957
        %v2652 = vunpack.c.l.b16 %v1958
        %v2653 = vunpack.c.h.b16 %v1958
        %v2654 = vunpack.c.l.b16 %v1959
        %v2655 = vunpack.c.h.b16 %v1959
        %v2656 = vunpack.c.l.b16 %v1960
        %v2657 = vunpack.c.h.b16 %v1960
        %v2658 = vunpack.c.l.b16 %v1961
        %v2659 = vunpack.c.h.b16 %v1961
        %v2660 = vunpack.c.l.b16 %v1962
        %v2661 = vunpack.c.h.b16 %v1962
        %v2662 = vunpack.c.l.b16 %v1963
        %v2663 = vunpack.c.h.b16 %v1963
        %v2664 = vunpack.c.l.b16 %v1964
        %v2665 = vunpack.c.h.b16 %v1964
        %v2666 = vunpack.c.l.b16 %v1965
        %v2667 = vunpack.c.h.b16 %v1965
        %v2668 = vunpack.c.l.b16 %v1966
        %v2669 = vunpack.c.h.b16 %v1966
        %v2670 = vunpack.c.l.b16 %v1967
        %v2671 = vunpack.c.h.b16 %v1967
        %v2672 = vunpack.c.l.b16 %v1968
        %v2673 = vunpack.c.h.b16 %v1968
        %v2674 = vunpack.c.l.b16 %v1969
        %v2675 = vunpack.c.h.b16 %v1969
        %v2676 = vunpack.c.l.b16 %v1970
        %v2677 = vunpack.c.h.b16 %v1970
        %v2678 = vunpack.c.l.b16 %v1971
        %v2679 = vunpack.c.h.b16 %v1971
        %v2680 = vunpack.c.l.b16 %v1972
        %v2681 = vunpack.c.h.b16 %v1972
        %v2682 = vunpack.c.l.b16 %v1973
        %v2683 = vunpack.c.h.b16 %v1973
        %v2684 = vunpack.c.l.b16 %v1974
        %v2685 = vunpack.c.h.b16 %v1974
        %v2686 = vunpack.c.l.b16 %v1975
        %v2687 = vunpack.c.h.b16 %v1975
        %v2688 = vunpack.c.l.b16 %v1976
        %v2689 = vunpack.c.h.b16 %v1976
        %v2690 = vunpack.c.l.b16 %v1977
        %v2691 = vunpack.c.h.b16 %v1977
        %v2692 = vunpack.c.l.b16 %v1978
        %v2693 = vunpack.c.h.b16 %v1978
        %v2694 = vunpack.c.l.b16 %v1979
        %v2695 = vunpack.c.h.b16 %v1979
        %v2696 = vunpack.c.l.b16 %v1980
        %v2697 = vunpack.c.h.b16 %v1980
        %v2698 = vunpack.c.l.b16 %v1981
        %v2699 = vunpack.c.h.b16 %v1981
        %v2700 = vunpack.c.l.b16 %v1982
        %v2701 = vunpack.c.h.b16 %v1982
        %v2702 = vunpack.c.l.b16 %v1983
        %v2703 = vunpack.c.h.b16 %v1983
        %v2704 = vunpack.c.l.b16 %v1984
        %v2705 = vunpack.c.h.b16 %v1984
        %v2706 = vunpack.c.l.b16 %v1985
        %v2707 = vunpack.c.h.b16 %v1985
        %v2708 = vunpack.c.l.b16 %v1986
        %v2709 = vunpack.c.h.b16 %v1986
        %v2710 = vunpack.c.l.b16 %v1987
        %v2711 = vunpack.c.h.b16 %v1987
        %v2712 = vunpack.c.l.b16 %v1988
        %v2713 = vunpack.c.h.b16 %v1988
        %v2714 = vunpack.c.l.b16 %v1989
        %v2715 = vunpack.c.h.b16 %v1989
        %v2716 = vunpack.c.l.b16 %v1990
        %v2717 = vunpack.c.h.b16 %v1990
        %v2718 = vunpack.c.l.b16 %v1991
        %v2719 = vunpack.c.h.b16 %v1991
        %v2720 = vunpack.c.l.b16 %v1992
        %v2721 = vunpack.c.h.b16 %v1992
        %v2722 = vunpack.c.l.b16 %v1993
        %v2723 = vunpack.c.h.b16 %v1993
        %v2724 = vunpack.c.l.b16 %v1994
        %v2725 = vunpack.c.h.b16 %v1994
        %v2726 = vunpack.c.l.b16 %v1995
        %v2727 = vunpack.c.h.b16 %v1995
        %v2728 = vunpack.c.l.b16 %v1996
        %v2729 = vunpack.c.h.b16 %v1996
        %v2730 = vunpack.c.l.b16 %v1997
        %v2731 = vunpack.c.h.b16 %v1997
        %v2732 = vunpack.c.l.b16 %v1998
        %v2733 = vunpack.c.h.b16 %v1998
        %v2734 = vunpack.c.l.b16 %v1999
        %v2735 = vunpack.c.h.b16 %v1999
        %v2736 = vunpack.c.l.b16 %v2000
        %v2737 = vunpack.c.h.b16 %v2000
        %v2738 = vunpack.c.l.b16 %v2001
        %v2739 = vunpack.c.h.b16 %v2001
        %v2740 = vunpack.c.l.b16 %v2002
        %v2741 = vunpack.c.h.b16 %v2002
        %v2742 = vunpack.c.l.b16 %v2003
        %v2743 = vunpack.c.h.b16 %v2003
        %v2744 = vunpack.c.l.b16 %v2004
        %v2745 = vunpack.c.h.b16 %v2004
        %v2746 = vunpack.c.l.b16 %v2005
        %v2747 = vunpack.c.h.b16 %v2005
        %v2748 = vunpack.c.l.b16 %v2006
        %v2749 = vunpack.c.h.b16 %v2006
        %v2750 = vunpack.c.l.b16 %v2007
        %v2751 = vunpack.c.h.b16 %v2007
        %v2752 = vunpack.c.l.b16 %v2008
        %v2753 = vunpack.c.h.b16 %v2008
        %v2754 = vunpack.c.l.b16 %v2009
        %v2755 = vunpack.c.h.b16 %v2009
        %v2756 = vunpack.c.l.b16 %v2010
        %v2757 = vunpack.c.h.b16 %v2010
        %v2758 = vunpack.c.l.b16 %v2011
        %v2759 = vunpack.c.h.b16 %v2011
        %v2760 = vunpack.c.l.b16 %v2012
        %v2761 = vunpack.c.h.b16 %v2012
        %v2762 = vunpack.c.l.b16 %v2013
        %v2763 = vunpack.c.h.b16 %v2013
        %v2764 = vunpack.c.l.b16 %v2014
        %v2765 = vunpack.c.h.b16 %v2014
        %v2766 = vunpack.c.l.b16 %v2015
        %v2767 = vunpack.c.h.b16 %v2015
        %v2768 = vunpack.c.l.b16 %v2016
        %v2769 = vunpack.c.h.b16 %v2016
        %v2770 = vunpack.c.l.b16 %v2017
        %v2771 = vunpack.c.h.b16 %v2017
        %v2772 = vunpack.c.l.b16 %v2018
        %v2773 = vunpack.c.h.b16 %v2018
        %v2774 = vunpack.c.l.b16 %v2019
        %v2775 = vunpack.c.h.b16 %v2019
        %v2776 = vunpack.c.l.b16 %v2020
        %v2777 = vunpack.c.h.b16 %v2020
        %v2778 = vunpack.c.l.b16 %v2021
        %v2779 = vunpack.c.h.b16 %v2021
        %v2780 = vunpack.c.l.b16 %v2022
        %v2781 = vunpack.c.h.b16 %v2022
        %v2782 = vunpack.c.l.b16 %v2023
        %v2783 = vunpack.c.h.b16 %v2023
        %v2784 = vunpack.c.l.b16 %v2024
        %v2785 = vunpack.c.h.b16 %v2024
        %v2786 = vunpack.c.l.b16 %v2025
        %v2787 = vunpack.c.h.b16 %v2025
        %v2788 = vunpack.c.l.b16 %v2026
        %v2789 = vunpack.c.h.b16 %v2026
        %v2790 = vunpack.c.l.b16 %v2027
        %v2791 = vunpack.c.h.b16 %v2027
        %v2792 = vunpack.c.l.b16 %v2028
        %v2793 = vunpack.c.h.b16 %v2028
        %v2794 = vunpack.c.l.b16 %v2029
        %v2795 = vunpack.c.h.b16 %v2029
        %v2796 = vunpack.c.l.b16 %v2030
        %v2797 = vunpack.c.h.b16 %v2030
        %v2798 = vunpack.c.l.b16 %v2031
        %v2799 = vunpack.c.h.b16 %v2031
        %v2800 = vunpack.c.l.b16 %v2032
        %v2801 = vunpack.c.h.b16 %v2032
        %v2802 = vpack.c.b16 %v2292, %v2290
        %v2803 = vpack.c.b16 %v2293, %v2291
        %v2804 = vpack.c.b16 %v2296, %v2294
        %v2805 = vpack.c.b16 %v2297, %v2295
        %v2806 = vpack.c.b16 %v2300, %v2298
        %v2807 = vpack.c.b16 %v2301, %v2299
        %v2808 = vpack.c.b16 %v2304, %v2302
        %v2809 = vpack.c.b16 %v2305, %v2303
        %v2810 = vpack.c.b16 %v2308, %v2306
        %v2811 = vpack.c.b16 %v2309, %v2307
        %v2812 = vpack.c.b16 %v2312, %v2310
        %v2813 = vpack.c.b16 %v2313, %v2311
        %v2814 = vpack.c.b16 %v2316, %v2314
        %v2815 = vpack.c.b16 %v2317, %v2315
        %v2816 = vpack.c.b16 %v2320, %v2318
        %v2817 = vpack.c.b16 %v2321, %v2319
        %v2818 = vpack.c.b16 %v2324, %v2322
        %v2819 = vpack.c.b16 %v2325, %v2323
        %v2820 = vpack.c.b16 %v2328, %v2326
        %v2821 = vpack.c.b16 %v2329, %v2327
        %v2822 = vpack.c.b16 %v2332, %v2330
        %v2823 = vpack.c.b16 %v2333, %v2331
        %v2824 = vpack.c.b16 %v2336, %v2334
        %v2825 = vpack.c.b16 %v2337, %v2335
        %v2826 = vpack.c.b16 %v2340, %v2338
        %v2827 = vpack.c.b16 %v2341, %v2339
        %v2828 = vpack.c.b16 %v2344, %v2342
        %v2829 = vpack.c.b16 %v2345, %v2343
        %v2830 = vpack.c.b16 %v2348, %v2346
        %v2831 = vpack.c.b16 %v2349, %v2347
        %v2832 = vpack.c.b16 %v2352, %v2350
        %v2833 = vpack.c.b16 %v2353, %v2351
        %v2834 = vpack.c.b16 %v2356, %v2354
        %v2835 = vpack.c.b16 %v2357, %v2355
        %v2836 = vpack.c.b16 %v2360, %v2358
        %v2837 = vpack.c.b16 %v2361, %v2359
        %v2838 = vpack.c.b16 %v2364, %v2362
        %v2839 = vpack.c.b16 %v2365, %v2363
        %v2840 = vpack.c.b16 %v2368, %v2366
        %v2841 = vpack.c.b16 %v2369, %v2367
        %v2842 = vpack.c.b16 %v2372, %v2370
        %v2843 = vpack.c.b16 %v2373, %v2371
        %v2844 = vpack.c.b16 %v2376, %v2374
        %v2845 = vpack.c.b16 %v2377, %v2375
        %v2846 = vpack.c.b16 %v2380, %v2378
        %v2847 = vpack.c.b16 %v2381, %v2379
        %v2848 = vpack.c.b16 %v2384, %v2382
        %v2849 = vpack.c.b16 %v2385, %v2383
        %v2850 = vpack.c.b16 %v2388, %v2386
        %v2851 = vpack.c.b16 %v2389, %v2387
        %v2852 = vpack.c.b16 %v2392, %v2390
        %v2853 = vpack.c.b16 %v2393, %v2391
        %v2854 = vpack.c.b16 %v2396, %v2394
        %v2855 = vpack.c.b16 %v2397, %v2395
        %v2856 = vpack.c.b16 %v2400, %v2398
        %v2857 = vpack.c.b16 %v2401, %v2399
        %v2858 = vpack.c.b16 %v2404, %v2402
        %v2859 = vpack.c.b16 %v2405, %v2403
        %v2860 = vpack.c.b16 %v2408, %v2406
        %v2861 = vpack.c.b16 %v2409, %v2407
        %v2862 = vpack.c.b16 %v2412, %v2410
        %v2863 = vpack.c.b16 %v2413, %v2411
        %v2864 = vpack.c.b16 %v2416, %v2414
        %v2865 = vpack.c.b16 %v2417, %v2415
        %v2866 = vpack.c.b16 %v2420, %v2418
        %v2867 = vpack.c.b16 %v2421, %v2419
        %v2868 = vpack.c.b16 %v2424, %v2422
        %v2869 = vpack.c.b16 %v2425, %v2423
        %v2870 = vpack.c.b16 %v2428, %v2426
        %v2871 = vpack.c.b16 %v2429, %v2427
        %v2872 = vpack.c.b16 %v2432, %v2430
        %v2873 = vpack.c.b16 %v2433, %v2431
        %v2874 = vpack.c.b16 %v2436, %v2434
        %v2875 = vpack.c.b16 %v2437, %v2435
        %v2876 = vpack.c.b16 %v2440, %v2438
        %v2877 = vpack.c.b16 %v2441, %v2439
        %v2878 = vpack.c.b16 %v2444, %v2442
        %v2879 = vpack.c.b16 %v2445, %v2443
        %v2880 = vpack.c.b16 %v2448, %v2446
        %v2881 = vpack.c.b16 %v2449, %v2447
        %v2882 = vpack.c.b16 %v2452, %v2450
        %v2883 = vpack.c.b16 %v2453, %v2451
        %v2884 = vpack.c.b16 %v2456, %v2454
        %v2885 = vpack.c.b16 %v2457, %v2455
        %v2886 = vpack.c.b16 %v2460, %v2458
        %v2887 = vpack.c.b16 %v2461, %v2459
        %v2888 = vpack.c.b16 %v2464, %v2462
        %v2889 = vpack.c.b16 %v2465, %v2463
        %v2890 = vpack.c.b16 %v2468, %v2466
        %v2891 = vpack.c.b16 %v2469, %v2467
        %v2892 = vpack.c.b16 %v2472, %v2470
        %v2893 = vpack.c.b16 %v2473, %v2471
        %v2894 = vpack.c.b16 %v2476, %v2474
        %v2895 = vpack.c.b16 %v2477, %v2475
        %v2896 = vpack.c.b16 %v2480, %v2478
        %v2897 = vpack.c.b16 %v2481, %v2479
        %v2898 = vpack.c.b16 %v2484, %v2482
        %v2899 = vpack.c.b16 %v2485, %v2483
        %v2900 = vpack.c.b16 %v2488, %v2486
        %v2901 = vpack.c.b16 %v2489, %v2487
        %v2902 = vpack.c.b16 %v2492, %v2490
        %v2903 = vpack.c.b16 %v2493, %v2491
        %v2904 = vpack.c.b16 %v2496, %v2494
        %v2905 = vpack.c.b16 %v2497, %v2495
        %v2906 = vpack.c.b16 %v2500, %v2498
        %v2907 = vpack.c.b16 %v2501, %v2499
        %v2908 = vpack.c.b16 %v2504, %v2502
        %v2909 = vpack.c.b16 %v2505, %v2503
        %v2910 = vpack.c.b16 %v2508, %v2506
        %v2911 = vpack.c.b16 %v2509, %v2507
        %v2912 = vpack.c.b16 %v2512, %v2510
        %v2913 = vpack.c.b16 %v2513, %v2511
        %v2914 = vpack.c.b16 %v2516, %v2514
        %v2915 = vpack.c.b16 %v2517, %v2515
        %v2916 = vpack.c.b16 %v2520, %v2518
        %v2917 = vpack.c.b16 %v2521, %v2519
        %v2918 = vpack.c.b16 %v2524, %v2522
        %v2919 = vpack.c.b16 %v2525, %v2523
        %v2920 = vpack.c.b16 %v2528, %v2526
        %v2921 = vpack.c.b16 %v2529, %v2527
        %v2922 = vpack.c.b16 %v2532, %v2530
        %v2923 = vpack.c.b16 %v2533, %v2531
        %v2924 = vpack.c.b16 %v2536, %v2534
        %v2925 = vpack.c.b16 %v2537, %v2535
        %v2926 = vpack.c.b16 %v2540, %v2538
        %v2927 = vpack.c.b16 %v2541, %v2539
        %v2928 = vpack.c.b16 %v2544, %v2542
        %v2929 = vpack.c.b16 %v2545, %v2543
        %v2930 = vpack.c.b16 %v2548, %v2546
        %v2931 = vpack.c.b16 %v2549, %v2547
        %v2932 = vpack.c.b16 %v2552, %v2550
        %v2933 = vpack.c.b16 %v2553, %v2551
        %v2934 = vpack.c.b16 %v2556, %v2554
        %v2935 = vpack.c.b16 %v2557, %v2555
        %v2936 = vpack.c.b16 %v2560, %v2558
        %v2937 = vpack.c.b16 %v2561, %v2559
        %v2938 = vpack.c.b16 %v2564, %v2562
        %v2939 = vpack.c.b16 %v2565, %v2563
        %v2940 = vpack.c.b16 %v2568, %v2566
        %v2941 = vpack.c.b16 %v2569, %v2567
        %v2942 = vpack.c.b16 %v2572, %v2570
        %v2943 = vpack.c.b16 %v2573, %v2571
        %v2944 = vpack.c.b16 %v2576, %v2574
        %v2945 = vpack.c.b16 %v2577, %v2575
        %v2946 = vpack.c.b16 %v2580, %v2578
        %v2947 = vpack.c.b16 %v2581, %v2579
        %v2948 = vpack.c.b16 %v2584, %v2582
        %v2949 = vpack.c.b16 %v2585, %v2583
        %v2950 = vpack.c.b16 %v2588, %v2586
        %v2951 = vpack.c.b16 %v2589, %v2587
        %v2952 = vpack.c.b16 %v2592, %v2590
        %v2953 = vpack.c.b16 %v2593, %v2591
        %v2954 = vpack.c.b16 %v2596, %v2594
        %v2955 = vpack.c.b16 %v2597, %v2595
        %v2956 = vpack.c.b16 %v2600, %v2598
        %v2957 = vpack.c.b16 %v2601, %v2599
        %v2958 = vpack.c.b16 %v2604, %v2602
        %v2959 = vpack.c.b16 %v2605, %v2603
        %v2960 = vpack.c.b16 %v2608, %v2606
        %v2961 = vpack.c.b16 %v2609, %v2607
        %v2962 = vpack.c.b16 %v2612, %v2610
        %v2963 = vpack.c.b16 %v2613, %v2611
        %v2964 = vpack.c.b16 %v2616, %v2614
        %v2965 = vpack.c.b16 %v2617, %v2615
        %v2966 = vpack.c.b16 %v2620, %v2618
        %v2967 = vpack.c.b16 %v2621, %v2619
        %v2968 = vpack.c.b16 %v2624, %v2622
        %v2969 = vpack.c.b16 %v2625, %v2623
        %v2970 = vpack.c.b16 %v2628, %v2626
        %v2971 = vpack.c.b16 %v2629, %v2627
        %v2972 = vpack.c.b16 %v2632, %v2630
        %v2973 = vpack.c.b16 %v2633, %v2631
        %v2974 = vpack.c.b16 %v2636, %v2634
        %v2975 = vpack.c.b16 %v2637, %v2635
        %v2976 = vpack.c.b16 %v2640, %v2638
        %v2977 = vpack.c.b16 %v2641, %v2639
        %v2978 = vpack.c.b16 %v2644, %v2642
        %v2979 = vpack.c.b16 %v2645, %v2643
        %v2980 = vpack.c.b16 %v2648, %v2646
        %v2981 = vpack.c.b16 %v2649, %v2647
        %v2982 = vpack.c.b16 %v2652, %v2650
        %v2983 = vpack.c.b16 %v2653, %v2651
        %v2984 = vpack.c.b16 %v2656, %v2654
        %v2985 = vpack.c.b16 %v2657, %v2655
        %v2986 = vpack.c.b16 %v2660, %v2658
        %v2987 = vpack.c.b16 %v2661, %v2659
        %v2988 = vpack.c.b16 %v2664, %v2662
        %v2989 = vpack.c.b16 %v2665, %v2663
        %v2990 = vpack.c.b16 %v2668, %v2666
        %v2991 = vpack.c.b16 %v2669, %v2667
        %v2992 = vpack.c.b16 %v2672, %v2670
        %v2993 = vpack.c.b16 %v2673, %v2671
        %v2994 = vpack.c.b16 %v2676, %v2674
        %v2995 = vpack.c.b16 %v2677, %v2675
        %v2996 = vpack.c.b16 %v2680, %v2678
        %v2997 = vpack.c.b16 %v2681, %v2679
        %v2998 = vpack.c.b16 %v2684, %v2682
        %v2999 = vpack.c.b16 %v2685, %v2683
        %v3000 = vpack.c.b16 %v2688, %v2686
        %v3001 = vpack.c.b16 %v2689, %v2687
        %v3002 = vpack.c.b16 %v2692, %v2690
        %v3003 = vpack.c.b16 %v2693, %v2691
        %v3004 = vpack.c.b16 %v2696, %v2694
        %v3005 = vpack.c.b16 %v2697, %v2695
        %v3006 = vpack.c.b16 %v2700, %v2698
        %v3007 = vpack.c.b16 %v2701, %v2699
        %v3008 = vpack.c.b16 %v2704, %v2702
        %v3009 = vpack.c.b16 %v2705, %v2703
        %v3010 = vpack.c.b16 %v2708, %v2706
        %v3011 = vpack.c.b16 %v2709, %v2707
        %v3012 = vpack.c.b16 %v2712, %v2710
        %v3013 = vpack.c.b16 %v2713, %v2711
        %v3014 = vpack.c.b16 %v2716, %v2714
        %v3015 = vpack.c.b16 %v2717, %v2715
        %v3016 = vpack.c.b16 %v2720, %v2718
        %v3017 = vpack.c.b16 %v2721, %v2719
        %v3018 = vpack.c.b16 %v2724, %v2722
        %v3019 = vpack.c.b16 %v2725, %v2723
        %v3020 = vpack.c.b16 %v2728, %v2726
        %v3021 = vpack.c.b16 %v2729, %v2727
        %v3022 = vpack.c.b16 %v2732, %v2730
        %v3023 = vpack.c.b16 %v2733, %v2731
        %v3024 = vpack.c.b16 %v2736, %v2734
        %v3025 = vpack.c.b16 %v2737, %v2735
        %v3026 = vpack.c.b16 %v2740, %v2738
        %v3027 = vpack.c.b16 %v2741, %v2739
        %v3028 = vpack.c.b16 %v2744, %v2742
        %v3029 = vpack.c.b16 %v2745, %v2743
        %v3030 = vpack.c.b16 %v2748, %v2746
        %v3031 = vpack.c.b16 %v2749, %v2747
        %v3032 = vpack.c.b16 %v2752, %v2750
        %v3033 = vpack.c.b16 %v2753, %v2751
        %v3034 = vpack.c.b16 %v2756, %v2754
        %v3035 = vpack.c.b16 %v2757, %v2755
        %v3036 = vpack.c.b16 %v2760, %v2758
        %v3037 = vpack.c.b16 %v2761, %v2759
        %v3038 = vpack.c.b16 %v2764, %v2762
        %v3039 = vpack.c.b16 %v2765, %v2763
        %v3040 = vpack.c.b16 %v2768, %v2766
        %v3041 = vpack.c.b16 %v2769, %v2767
        %v3042 = vpack.c.b16 %v2772, %v2770
        %v3043 = vpack.c.b16 %v2773, %v2771
        %v3044 = vpack.c.b16 %v2776, %v2774
        %v3045 = vpack.c.b16 %v2777, %v2775
        %v3046 = vpack.c.b16 %v2780, %v2778
        %v3047 = vpack.c.b16 %v2781, %v2779
        %v3048 = vpack.c.b16 %v2784, %v2782
        %v3049 = vpack.c.b16 %v2785, %v2783
        %v3050 = vpack.c.b16 %v2788, %v2786
        %v3051 = vpack.c.b16 %v2789, %v2787
        %v3052 = vpack.c.b16 %v2792, %v2790
        %v3053 = vpack.c.b16 %v2793, %v2791
        %v3054 = vpack.c.b16 %v2796, %v2794
        %v3055 = vpack.c.b16 %v2797, %v2795
        %v3056 = vpack.c.b16 %v2800, %v2798
        %v3057 = vpack.c.b16 %v2801, %v2799
        %v3315 = vlaneseq
        %v3316 = vshrl.u32 %v3315, 7
        %v3317 = vsub.s32 0, %v3316
        %v3318 = vrot.slane %v2033, %v3317
        %v3319 = vlaneseq
        %v3320 = vshrl.u32 %v3319, 7
        %v3321 = vsub.s32 1, %v3320
        %v3322 = vrot.slane %v2033, %v3321
        %3325 = vmatprep.subr.bf16.mxu0 %v2803
        %3326 = vmatpush1.bf16.msra.mxu0 %v2802
        %3327 = vmatprep.subr.bf16.mxu0 %v2805
        %3328 = vmatpush1.bf16.msra.mxu0 %v2804
        %3329 = vmatprep.subr.bf16.mxu0 %v2807
        %3330 = vmatpush1.bf16.msra.mxu0 %v2806
        %3331 = vmatprep.subr.bf16.mxu0 %v2809
        %3332 = vmatpush1.bf16.msra.mxu0 %v2808
        %3333 = vmatprep.subr.bf16.mxu0 %v2811
        %3334 = vmatpush1.bf16.msra.mxu0 %v2810
        %3335 = vmatprep.subr.bf16.mxu0 %v2813
        %3336 = vmatpush1.bf16.msra.mxu0 %v2812
        %3337 = vmatprep.subr.bf16.mxu0 %v2815
        %3338 = vmatpush1.bf16.msra.mxu0 %v2814
        %3339 = vmatprep.subr.bf16.mxu0 %v2817
        %3340 = vmatpush1.bf16.msra.mxu0 %v2816
        %3341 = vmatprep.subr.bf16.mxu0 %v2819
        %3342 = vmatpush1.bf16.msra.mxu0 %v2818
        %3343 = vmatprep.subr.bf16.mxu0 %v2821
        %3344 = vmatpush1.bf16.msra.mxu0 %v2820
        %3345 = vmatprep.subr.bf16.mxu0 %v2823
        %3346 = vmatpush1.bf16.msra.mxu0 %v2822
        %3347 = vmatprep.subr.bf16.mxu0 %v2825
        %3348 = vmatpush1.bf16.msra.mxu0 %v2824
        %3349 = vmatprep.subr.bf16.mxu0 %v2827
        %3350 = vmatpush1.bf16.msra.mxu0 %v2826
        %3351 = vmatprep.subr.bf16.mxu0 %v2829
        %3352 = vmatpush1.bf16.msra.mxu0 %v2828
        %3353 = vmatprep.subr.bf16.mxu0 %v2831
        %3354 = vmatpush1.bf16.msra.mxu0 %v2830
        %3355 = vmatprep.subr.bf16.mxu0 %v2833
        %3356 = vmatpush1.bf16.msra.mxu0 %v2832
        %3357 = vmatprep.mubr.bf16.mxu0 %v1762
        %3358 = vmatmul.mubr.bf16.gmra.mrb[0].mxu0 %v1761
        %v3359 = vpop.f32.mrb[0].mxu0
        %v3360 = vadd.f32 %v3318, %v3359
        %v3361 = vpop.f32.mrb[0].mxu0
        %v3362 = vadd.f32 %v3322, %v3361
        %v3363 = vpop.f32.mrb[0].mxu0
        %v3364 = vpop.f32.mrb[0].mxu0
        %3365 = vdwg.mxu0
        %3366 = vmatprep.subr.bf16.mxu0 %v2835
        %3367 = vmatpush1.bf16.msra.mxu0 %v2834
        %3368 = vmatprep.subr.bf16.mxu0 %v2837
        %3369 = vmatpush1.bf16.msra.mxu0 %v2836
        %3370 = vmatprep.subr.bf16.mxu0 %v2839
        %3371 = vmatpush1.bf16.msra.mxu0 %v2838
        %3372 = vmatprep.subr.bf16.mxu0 %v2841
        %3373 = vmatpush1.bf16.msra.mxu0 %v2840
        %3374 = vmatprep.subr.bf16.mxu0 %v2843
        %3375 = vmatpush1.bf16.msra.mxu0 %v2842
        %3376 = vmatprep.subr.bf16.mxu0 %v2845
        %3377 = vmatpush1.bf16.msra.mxu0 %v2844
        %3378 = vmatprep.subr.bf16.mxu0 %v2847
        %3379 = vmatpush1.bf16.msra.mxu0 %v2846
        %3380 = vmatprep.subr.bf16.mxu0 %v2849
        %3381 = vmatpush1.bf16.msra.mxu0 %v2848
        %3382 = vmatprep.subr.bf16.mxu0 %v2851
        %3383 = vmatpush1.bf16.msra.mxu0 %v2850
        %3384 = vmatprep.subr.bf16.mxu0 %v2853
        %3385 = vmatpush1.bf16.msra.mxu0 %v2852
        %3386 = vmatprep.subr.bf16.mxu0 %v2855
        %3387 = vmatpush1.bf16.msra.mxu0 %v2854
        %3388 = vmatprep.subr.bf16.mxu0 %v2857
        %3389 = vmatpush1.bf16.msra.mxu0 %v2856
        %3390 = vmatprep.subr.bf16.mxu0 %v2859
        %3391 = vmatpush1.bf16.msra.mxu0 %v2858
        %3392 = vmatprep.subr.bf16.mxu0 %v2861
        %3393 = vmatpush1.bf16.msra.mxu0 %v2860
        %3394 = vmatprep.subr.bf16.mxu0 %v2863
        %3395 = vmatpush1.bf16.msra.mxu0 %v2862
        %3396 = vmatprep.subr.bf16.mxu0 %v2865
        %3397 = vmatpush1.bf16.msra.mxu0 %v2864
        %3398 = vmatprep.mubr.bf16.mxu0 %v1764
        %3399 = vmatmul.mubr.bf16.gmra.mrb[0].mxu0 %v1763
        %v3400 = vpop.f32.mrb[0].mxu0
        %v3401 = vadd.f32 %v3360, %v3400
        %v3402 = vpop.f32.mrb[0].mxu0
        %v3403 = vadd.f32 %v3362, %v3402
        %v3404 = vpop.f32.mrb[0].mxu0
        %v3405 = vpop.f32.mrb[0].mxu0
        %3406 = vdwg.mxu0
        %3407 = vmatprep.subr.bf16.mxu0 %v2867
        %3408 = vmatpush1.bf16.msra.mxu0 %v2866
        %3409 = vmatprep.subr.bf16.mxu0 %v2869
        %3410 = vmatpush1.bf16.msra.mxu0 %v2868
        %3411 = vmatprep.subr.bf16.mxu0 %v2871
        %3412 = vmatpush1.bf16.msra.mxu0 %v2870
        %3413 = vmatprep.subr.bf16.mxu0 %v2873
        %3414 = vmatpush1.bf16.msra.mxu0 %v2872
        %3415 = vmatprep.subr.bf16.mxu0 %v2875
        %3416 = vmatpush1.bf16.msra.mxu0 %v2874
        %3417 = vmatprep.subr.bf16.mxu0 %v2877
        %3418 = vmatpush1.bf16.msra.mxu0 %v2876
        %3419 = vmatprep.subr.bf16.mxu0 %v2879
        %3420 = vmatpush1.bf16.msra.mxu0 %v2878
        %3421 = vmatprep.subr.bf16.mxu0 %v2881
        %3422 = vmatpush1.bf16.msra.mxu0 %v2880
        %3423 = vmatprep.subr.bf16.mxu0 %v2883
        %3424 = vmatpush1.bf16.msra.mxu0 %v2882
        %3425 = vmatprep.subr.bf16.mxu0 %v2885
        %3426 = vmatpush1.bf16.msra.mxu0 %v2884
        %3427 = vmatprep.subr.bf16.mxu0 %v2887
        %3428 = vmatpush1.bf16.msra.mxu0 %v2886
        %3429 = vmatprep.subr.bf16.mxu0 %v2889
        %3430 = vmatpush1.bf16.msra.mxu0 %v2888
        %3431 = vmatprep.subr.bf16.mxu0 %v2891
        %3432 = vmatpush1.bf16.msra.mxu0 %v2890
        %3433 = vmatprep.subr.bf16.mxu0 %v2893
        %3434 = vmatpush1.bf16.msra.mxu0 %v2892
        %3435 = vmatprep.subr.bf16.mxu0 %v2895
        %3436 = vmatpush1.bf16.msra.mxu0 %v2894
        %3437 = vmatprep.subr.bf16.mxu0 %v2897
        %3438 = vmatpush1.bf16.msra.mxu0 %v2896
        %3439 = vmatprep.mubr.bf16.mxu0 %v1766
        %3440 = vmatmul.mubr.bf16.gmra.mrb[0].mxu0 %v1765
        %v3441 = vpop.f32.mrb[0].mxu0
        %v3442 = vadd.f32 %v3401, %v3441
        %v3443 = vpop.f32.mrb[0].mxu0
        %v3444 = vadd.f32 %v3403, %v3443
        %v3445 = vpop.f32.mrb[0].mxu0
        %v3446 = vpop.f32.mrb[0].mxu0
        %3447 = vdwg.mxu0
        %3448 = vmatprep.subr.bf16.mxu0 %v2899
        %3449 = vmatpush1.bf16.msra.mxu0 %v2898
        %3450 = vmatprep.subr.bf16.mxu0 %v2901
        %3451 = vmatpush1.bf16.msra.mxu0 %v2900
        %3452 = vmatprep.subr.bf16.mxu0 %v2903
        %3453 = vmatpush1.bf16.msra.mxu0 %v2902
        %3454 = vmatprep.subr.bf16.mxu0 %v2905
        %3455 = vmatpush1.bf16.msra.mxu0 %v2904
        %3456 = vmatprep.subr.bf16.mxu0 %v2907
        %3457 = vmatpush1.bf16.msra.mxu0 %v2906
        %3458 = vmatprep.subr.bf16.mxu0 %v2909
        %3459 = vmatpush1.bf16.msra.mxu0 %v2908
        %3460 = vmatprep.subr.bf16.mxu0 %v2911
        %3461 = vmatpush1.bf16.msra.mxu0 %v2910
        %3462 = vmatprep.subr.bf16.mxu0 %v2913
        %3463 = vmatpush1.bf16.msra.mxu0 %v2912
        %3464 = vmatprep.subr.bf16.mxu0 %v2915
        %3465 = vmatpush1.bf16.msra.mxu0 %v2914
        %3466 = vmatprep.subr.bf16.mxu0 %v2917
        %3467 = vmatpush1.bf16.msra.mxu0 %v2916
        %3468 = vmatprep.subr.bf16.mxu0 %v2919
        %3469 = vmatpush1.bf16.msra.mxu0 %v2918
        %3470 = vmatprep.subr.bf16.mxu0 %v2921
        %3471 = vmatpush1.bf16.msra.mxu0 %v2920
        %3472 = vmatprep.subr.bf16.mxu0 %v2923
        %3473 = vmatpush1.bf16.msra.mxu0 %v2922
        %3474 = vmatprep.subr.bf16.mxu0 %v2925
        %3475 = vmatpush1.bf16.msra.mxu0 %v2924
        %3476 = vmatprep.subr.bf16.mxu0 %v2927
        %3477 = vmatpush1.bf16.msra.mxu0 %v2926
        %3478 = vmatprep.subr.bf16.mxu0 %v2929
        %3479 = vmatpush1.bf16.msra.mxu0 %v2928
        %3480 = vmatprep.mubr.bf16.mxu0 %v1768
        %3481 = vmatmul.mubr.bf16.gmra.mrb[0].mxu0 %v1767
        %v3482 = vpop.f32.mrb[0].mxu0
        %v3483 = vadd.f32 %v3442, %v3482
        %v3484 = vpop.f32.mrb[0].mxu0
        %v3485 = vadd.f32 %v3444, %v3484
        %v3486 = vpop.f32.mrb[0].mxu0
        %v3487 = vpop.f32.mrb[0].mxu0
        %3488 = vdwg.mxu0
        %3489 = vmatprep.subr.bf16.mxu0 %v2931
        %3490 = vmatpush1.bf16.msra.mxu0 %v2930
        %3491 = vmatprep.subr.bf16.mxu0 %v2933
        %3492 = vmatpush1.bf16.msra.mxu0 %v2932
        %3493 = vmatprep.subr.bf16.mxu0 %v2935
        %3494 = vmatpush1.bf16.msra.mxu0 %v2934
        %3495 = vmatprep.subr.bf16.mxu0 %v2937
        %3496 = vmatpush1.bf16.msra.mxu0 %v2936
        %3497 = vmatprep.subr.bf16.mxu0 %v2939
        %3498 = vmatpush1.bf16.msra.mxu0 %v2938
        %3499 = vmatprep.subr.bf16.mxu0 %v2941
        %3500 = vmatpush1.bf16.msra.mxu0 %v2940
        %3501 = vmatprep.subr.bf16.mxu0 %v2943
        %3502 = vmatpush1.bf16.msra.mxu0 %v2942
        %3503 = vmatprep.subr.bf16.mxu0 %v2945
        %3504 = vmatpush1.bf16.msra.mxu0 %v2944
        %3505 = vmatprep.subr.bf16.mxu0 %v2947
        %3506 = vmatpush1.bf16.msra.mxu0 %v2946
        %3507 = vmatprep.subr.bf16.mxu0 %v2949
        %3508 = vmatpush1.bf16.msra.mxu0 %v2948
        %3509 = vmatprep.subr.bf16.mxu0 %v2951
        %3510 = vmatpush1.bf16.msra.mxu0 %v2950
        %3511 = vmatprep.subr.bf16.mxu0 %v2953
        %3512 = vmatpush1.bf16.msra.mxu0 %v2952
        %3513 = vmatprep.subr.bf16.mxu0 %v2955
        %3514 = vmatpush1.bf16.msra.mxu0 %v2954
        %3515 = vmatprep.subr.bf16.mxu0 %v2957
        %3516 = vmatpush1.bf16.msra.mxu0 %v2956
        %3517 = vmatprep.subr.bf16.mxu0 %v2959
        %3518 = vmatpush1.bf16.msra.mxu0 %v2958
        %3519 = vmatprep.subr.bf16.mxu0 %v2961
        %3520 = vmatpush1.bf16.msra.mxu0 %v2960
        %3521 = vmatprep.mubr.bf16.mxu0 %v1770
        %3522 = vmatmul.mubr.bf16.gmra.mrb[0].mxu0 %v1769
        %v3523 = vpop.f32.mrb[0].mxu0
        %v3524 = vadd.f32 %v3483, %v3523
        %v3525 = vpop.f32.mrb[0].mxu0
        %v3526 = vadd.f32 %v3485, %v3525
        %v3527 = vpop.f32.mrb[0].mxu0
        %v3528 = vpop.f32.mrb[0].mxu0
        %3529 = vdwg.mxu0
        %3530 = vmatprep.subr.bf16.mxu0 %v2963
        %3531 = vmatpush1.bf16.msra.mxu0 %v2962
        %3532 = vmatprep.subr.bf16.mxu0 %v2965
        %3533 = vmatpush1.bf16.msra.mxu0 %v2964
        %3534 = vmatprep.subr.bf16.mxu0 %v2967
        %3535 = vmatpush1.bf16.msra.mxu0 %v2966
        %3536 = vmatprep.subr.bf16.mxu0 %v2969
        %3537 = vmatpush1.bf16.msra.mxu0 %v2968
        %3538 = vmatprep.subr.bf16.mxu0 %v2971
        %3539 = vmatpush1.bf16.msra.mxu0 %v2970
        %3540 = vmatprep.subr.bf16.mxu0 %v2973
        %3541 = vmatpush1.bf16.msra.mxu0 %v2972
        %3542 = vmatprep.subr.bf16.mxu0 %v2975
        %3543 = vmatpush1.bf16.msra.mxu0 %v2974
        %3544 = vmatprep.subr.bf16.mxu0 %v2977
        %3545 = vmatpush1.bf16.msra.mxu0 %v2976
        %3546 = vmatprep.subr.bf16.mxu0 %v2979
        %3547 = vmatpush1.bf16.msra.mxu0 %v2978
        %3548 = vmatprep.subr.bf16.mxu0 %v2981
        %3549 = vmatpush1.bf16.msra.mxu0 %v2980
        %3550 = vmatprep.subr.bf16.mxu0 %v2983
        %3551 = vmatpush1.bf16.msra.mxu0 %v2982
        %3552 = vmatprep.subr.bf16.mxu0 %v2985
        %3553 = vmatpush1.bf16.msra.mxu0 %v2984
        %3554 = vmatprep.subr.bf16.mxu0 %v2987
        %3555 = vmatpush1.bf16.msra.mxu0 %v2986
        %3556 = vmatprep.subr.bf16.mxu0 %v2989
        %3557 = vmatpush1.bf16.msra.mxu0 %v2988
        %3558 = vmatprep.subr.bf16.mxu0 %v2991
        %3559 = vmatpush1.bf16.msra.mxu0 %v2990
        %3560 = vmatprep.subr.bf16.mxu0 %v2993
        %3561 = vmatpush1.bf16.msra.mxu0 %v2992
        %3562 = vmatprep.mubr.bf16.mxu0 %v1772
        %3563 = vmatmul.mubr.bf16.gmra.mrb[0].mxu0 %v1771
        %v3564 = vpop.f32.mrb[0].mxu0
        %v3565 = vadd.f32 %v3524, %v3564
        %v3566 = vpop.f32.mrb[0].mxu0
        %v3567 = vadd.f32 %v3526, %v3566
        %v3568 = vpop.f32.mrb[0].mxu0
        %v3569 = vpop.f32.mrb[0].mxu0
        %3570 = vdwg.mxu0
        %3571 = vmatprep.subr.bf16.mxu0 %v2995
        %3572 = vmatpush1.bf16.msra.mxu0 %v2994
        %3573 = vmatprep.subr.bf16.mxu0 %v2997
        %3574 = vmatpush1.bf16.msra.mxu0 %v2996
        %3575 = vmatprep.subr.bf16.mxu0 %v2999
        %3576 = vmatpush1.bf16.msra.mxu0 %v2998
        %3577 = vmatprep.subr.bf16.mxu0 %v3001
        %3578 = vmatpush1.bf16.msra.mxu0 %v3000
        %3579 = vmatprep.subr.bf16.mxu0 %v3003
        %3580 = vmatpush1.bf16.msra.mxu0 %v3002
        %3581 = vmatprep.subr.bf16.mxu0 %v3005
        %3582 = vmatpush1.bf16.msra.mxu0 %v3004
        %3583 = vmatprep.subr.bf16.mxu0 %v3007
        %3584 = vmatpush1.bf16.msra.mxu0 %v3006
        %3585 = vmatprep.subr.bf16.mxu0 %v3009
        %3586 = vmatpush1.bf16.msra.mxu0 %v3008
        %3587 = vmatprep.subr.bf16.mxu0 %v3011
        %3588 = vmatpush1.bf16.msra.mxu0 %v3010
        %3589 = vmatprep.subr.bf16.mxu0 %v3013
        %3590 = vmatpush1.bf16.msra.mxu0 %v3012
        %3591 = vmatprep.subr.bf16.mxu0 %v3015
        %3592 = vmatpush1.bf16.msra.mxu0 %v3014
        %3593 = vmatprep.subr.bf16.mxu0 %v3017
        %3594 = vmatpush1.bf16.msra.mxu0 %v3016
        %3595 = vmatprep.subr.bf16.mxu0 %v3019
        %3596 = vmatpush1.bf16.msra.mxu0 %v3018
        %3597 = vmatprep.subr.bf16.mxu0 %v3021
        %3598 = vmatpush1.bf16.msra.mxu0 %v3020
        %3599 = vmatprep.subr.bf16.mxu0 %v3023
        %3600 = vmatpush1.bf16.msra.mxu0 %v3022
        %3601 = vmatprep.subr.bf16.mxu0 %v3025
        %3602 = vmatpush1.bf16.msra.mxu0 %v3024
        %3603 = vmatprep.mubr.bf16.mxu0 %v1774
        %3604 = vmatmul.mubr.bf16.gmra.mrb[0].mxu0 %v1773
        %v3605 = vpop.f32.mrb[0].mxu0
        %v3606 = vadd.f32 %v3565, %v3605
        %v3607 = vpop.f32.mrb[0].mxu0
        %v3608 = vadd.f32 %v3567, %v3607
        %v3609 = vpop.f32.mrb[0].mxu0
        %v3610 = vpop.f32.mrb[0].mxu0
        %3611 = vdwg.mxu0
        %3612 = vmatprep.subr.bf16.mxu0 %v3027
        %3613 = vmatpush1.bf16.msra.mxu0 %v3026
        %3614 = vmatprep.subr.bf16.mxu0 %v3029
        %3615 = vmatpush1.bf16.msra.mxu0 %v3028
        %3616 = vmatprep.subr.bf16.mxu0 %v3031
        %3617 = vmatpush1.bf16.msra.mxu0 %v3030
        %3618 = vmatprep.subr.bf16.mxu0 %v3033
        %3619 = vmatpush1.bf16.msra.mxu0 %v3032
        %3620 = vmatprep.subr.bf16.mxu0 %v3035
        %3621 = vmatpush1.bf16.msra.mxu0 %v3034
        %3622 = vmatprep.subr.bf16.mxu0 %v3037
        %3623 = vmatpush1.bf16.msra.mxu0 %v3036
        %3624 = vmatprep.subr.bf16.mxu0 %v3039
        %3625 = vmatpush1.bf16.msra.mxu0 %v3038
        %3626 = vmatprep.subr.bf16.mxu0 %v3041
        %3627 = vmatpush1.bf16.msra.mxu0 %v3040
        %3628 = vmatprep.subr.bf16.mxu0 %v3043
        %3629 = vmatpush1.bf16.msra.mxu0 %v3042
        %3630 = vmatprep.subr.bf16.mxu0 %v3045
        %3631 = vmatpush1.bf16.msra.mxu0 %v3044
        %3632 = vmatprep.subr.bf16.mxu0 %v3047
        %3633 = vmatpush1.bf16.msra.mxu0 %v3046
        %3634 = vmatprep.subr.bf16.mxu0 %v3049
        %3635 = vmatpush1.bf16.msra.mxu0 %v3048
        %3636 = vmatprep.subr.bf16.mxu0 %v3051
        %3637 = vmatpush1.bf16.msra.mxu0 %v3050
        %3638 = vmatprep.subr.bf16.mxu0 %v3053
        %3639 = vmatpush1.bf16.msra.mxu0 %v3052
        %3640 = vmatprep.subr.bf16.mxu0 %v3055
        %3641 = vmatpush1.bf16.msra.mxu0 %v3054
        %3642 = vmatprep.subr.bf16.mxu0 %v3057
        %3643 = vmatpush1.bf16.msra.mxu0 %v3056
        %3644 = vmatprep.mubr.bf16.mxu0 %v1776
        %3645 = vmatmul.mubr.bf16.gmra.mrb[0].mxu0 %v1775
        %v3646 = vpop.f32.mrb[0].mxu0
        %v3647 = vadd.f32 %v3606, %v3646
        %v3648 = vpop.f32.mrb[0].mxu0
        %v3649 = vadd.f32 %v3608, %v3648
        %v3650 = vpop.f32.mrb[0].mxu0
        %v3651 = vpop.f32.mrb[0].mxu0
        %3652 = vdwg.mxu0
        %v3653 = vand.u32 2147483647, %v3647
        %v3654 = vand.u32 2147483647, %v3649
        %v3655 = vsub.f32 0.0, %v3653
        %v3656 = vsub.f32 0.0, %v3654
        %v3657 = vmul.f32 %v3655, 1.442695
        %v3658 = vpow.pop %v3657
        %v3659 = vmul.f32 %v3656, 1.442695
        %v3660 = vpow.pop %v3659
        %vm3661 = vcmp.ge.f32.partialorder %v3647, 0.0
        %vm3662 = vcmp.ge.f32.partialorder %v3649, 0.0
        %v3663 = vsel %vm3661, 1.0, %v3658
        %v3664 = vsel %vm3662, 1.0, %v3660
        %v3665 = vadd.f32 %v3658, 1.0
        %v3666 = vadd.f32 %v3660, 1.0
        %v3667 = vrcp.pop %v3665
        %v3668 = vrcp.pop %v3666
        %v3669 = vmul.f32 %v3663, %v3667
        %v3670 = vmul.f32 %v3664, %v3668
        %v3671 = vmul.f32 %v3647, %v3669
        %v3672 = vmul.f32 %v3649, %v3670
        %v3675 = vcombine.low %v3671, %v3672
        %v3677 = vunpack.c.l.s4 1966171168
        %v3678 = vunpack.c.0.s8 %v3677
        %v3679 = vlaneseq
        %v3680 = vshrl.u32 %v3679, 7
        %v3681 = vsub.s32 %v3678, %v3680
        %v3682 = vrot.slane %v3675, %v3681
        %v3684 = vunpack.c.l.s4 1966171168
        %v3685 = vunpack.c.0.s8 %v3684
        %v3686 = vlaneseq
        %v3687 = vshrl.u32 %v3686, 7
        %v3688 = vsub.s32 %v3685, %v3687
        %v3689 = vrot.slane %v3682, %v3688
        %v3691 = vlaneseq
        %vm3692 = vcmp.ge.s32.totalorder %v3691, 0
        %vm3693 = vcmp.lt.s32.totalorder %v3691, 256
        %vm3694 = vmand %vm3692, %vm3693
        %3695 = vst.msk [vmem:[%s304] sm:$0x3] %vm3694, %v3689
      $region56: #{efficientnet_wrapper_forward.1} parent=47 // pred_fallthru
        _
      %p3696 = scmp.lt.s32.totalorder %s22, 1
      %s3697 = scalar_select %p3696, %s22, 1
      %s3698 = smul.addr %s3697, 2
      %s3699 = scalar_lea.vmem %s7, %s3698
      // Predicated region
      $region57: #{efficientnet_wrapper_forward.1} parent=47 // pred_check
        %p3700 = pneg %p202
      $region58: #{efficientnet_wrapper_forward.1} parent=47 // pred_check_branch
        %3702 = sbr.rel (%p3700) target = $region60
      $region59: #{efficientnet_wrapper_forward.1} parent=47 // pred_region
        _
      $region60: #{efficientnet_wrapper_forward.1} parent=47 // pred_fallthru
        _
    $region48: #{efficientnet_wrapper_forward.1} parent=5 // pred_fallthru
      _
    %p3703 = scmp.le.s32.totalorder 2, %s13
    // Predicated region
    $region61: #{efficientnet_wrapper_forward.1} parent=5 // pred_check
      %p3704 = pneg %p3703
    $region62: #{efficientnet_wrapper_forward.1} parent=5 // pred_check_branch
      %3706 = sbr.rel (%p3704) target = $region64
    $region63: #{efficientnet_wrapper_forward.1} parent=5 // pred_region
      %s3707 = ssub.s32 %s13, 2
      // Predicated region
      $region65: #{efficientnet_wrapper_forward.1} parent=63 // pred_check
        %p3708 = pneg %p208
      $region66: #{efficientnet_wrapper_forward.1} parent=63 // pred_check_branch
        %3710 = sbr.rel (%p3708) target = $region68
      $region67: #{efficientnet_wrapper_forward.1} parent=63 // pred_region
        %p3711 = scmp.lt.s32.totalorder %s24, 1
        %s3712 = scalar_select %p3711, %s24, 1
        %s3713 = smul.addr %s3712, 2
        %s3714 = scalar_lea.vmem %s7, %s3713
      $region68: #{efficientnet_wrapper_forward.1} parent=63 // pred_fallthru
        _
    $region64: #{efficientnet_wrapper_forward.1} parent=5 // pred_fallthru
      _
  $region6: #{efficientnet_wrapper_forward.1} parent=0 // loop_footer
    %s17 = sadd.s32 1, %s13
  $region7: #{efficientnet_wrapper_forward.1} parent=0 // loop_footer_branch
    %12 = sbr.rel target = $region3
  $region8: #{efficientnet_wrapper_forward.1} parent=0 // loop_exit
    _

</llo_original>
